<compile_context>
chip_gen: v6e
topology: v6e:2x2x1
jax: 0.10.0
libtpu: 0.0.40
codegen_flags: <defaults>
</compile_context>

<pallas_src>
import functools

import jax
import jax.numpy as jnp
from jax import lax
from jax.experimental import pallas as pl
from jax.experimental.pallas import tpu as pltpu


def _round_up(x: int, m: int) -> int:
    return (x + m - 1) // m * m


def _choose_tile(P: int, max_tile_p: int = 512):
    """Pick (tile_p, P_pad, num_tiles).

    * one grid step for small P (per-step overhead ~0.35us dominates on v5e/v6e),
    * otherwise 128-multiple tiles (lane-dense output blocks + clean MXU granules,
      M = 2*tp >= 256) with an EVEN tile count so dimension_semantics=("parallel",)
      shards the grid evenly over v7x's 2 TensorCores.
    """
    p8 = _round_up(max(P, 8), 8)
    if p8 < 256:
        return p8, p8, 1
    tp = min(_round_up(pl.cdiv(P, 2), 128), _round_up(max_tile_p, 128))
    num_tiles = pl.cdiv(P, tp)
    if num_tiles > 1 and num_tiles % 2 == 1:
        num_tiles += 1                      # even split across v7x TensorCores
    return tp, num_tiles * tp, num_tiles


def _task2cl_kernel(idx_ref, z_ref, wp_ref, bp_ref, wm_ref, bm_ref, o_ref):
    # idx_ref : (2*TP, 1) int32 -- rows [0:TP] = ind1 tile, rows [TP:2TP] = ind2 tile
    # z_ref   : (N, D)    bf16  -- full embedding table, VMEM-resident across the grid
    # wp_ref  : (D, D)    bf16  -- projection weight, already (in, out) = torch_W.T
    # bp_ref  : (1, D)    f32   -- projection bias (resident)
    # wm_ref  : (1, D)    f32   -- linear_mapper weight row (resident)
    # bm_ref  : (1, 1)    f32   -- linear_mapper bias, in SMEM
    # o_ref   : (1, TP)   f32   -- lane-dense sigmoid output tile
    tp = o_ref.shape[1]
    n = z_ref.shape[0]

    # In-kernel row gather, fully vectorized: one-hot (2*TP, N) built from the
    # pair indices, pushed through the (otherwise idle) MXU.  Exact: each output
    # row has a single 1.0 term, so f32 accumulation reproduces the bf16 rows.
    src = lax.broadcasted_iota(jnp.int32, (2 * tp, n), 1)             # lane id = Z row
    onehot = (src == idx_ref[...]).astype(z_ref.dtype)                # (2*TP, N) bf16
    zs = jnp.dot(onehot, z_ref[...],
                 preferred_element_type=jnp.float32).astype(wp_ref.dtype)  # (2*TP, D)

    # One stacked projection matmul for both gathered tiles (single wp push),
    # f32 accumulation; bias + relu fused in one f32 pass (v5e VPU has no bf16).
    y = jnp.dot(zs, wp_ref[...], preferred_element_type=jnp.float32)  # (2*TP, D) f32
    y = jnp.maximum(y + bp_ref[...], 0.0)

    # x1 * x2 and the 1-wide linear_mapper as a VPU multiply + XLU lane reduce
    # (a (D, 1) MXU matmul would use <1% of the MXU).
    h = y[:tp, :] * y[tp:, :]                                         # (TP, D) f32
    logit_col = jnp.sum(h * wm_ref[...], axis=-1, keepdims=True)      # (TP, 1) f32

    # Lane-dense epilogue: transpose the per-pair column into a (1, TP) row via a
    # one-hot mask + sublane keepdims reduction (plain 2-D ops only), then bias +
    # sigmoid and a single unmasked full-width store.
    eye = (lax.broadcasted_iota(jnp.int32, (tp, tp), 0) ==
           lax.broadcasted_iota(jnp.int32, (tp, tp), 1)).astype(jnp.float32)
    logit_row = jnp.sum(eye * logit_col, axis=0, keepdims=True)       # (1, TP) f32
    o_ref[...] = jax.nn.sigmoid(logit_row + bm_ref[0, 0])


def init_params(key, in_dim):
    """torch.nn.Linear-style params (weight is (out, in)), uniform +-1/sqrt(fan_in)."""
    k1, k2, k3, k4 = jax.random.split(key, 4)
    bound = 1.0 / jnp.sqrt(in_dim)
    return {
        "wp": jax.random.uniform(k1, (in_dim, in_dim), jnp.float32, -bound, bound),
        "bp": jax.random.uniform(k2, (in_dim,), jnp.float32, -bound, bound),
        "wm": jax.random.uniform(k3, (1, in_dim), jnp.float32, -bound, bound),
        "bm": jax.random.uniform(k4, (1,), jnp.float32, -bound, bound),
    }


def prepare_params(params, compute_dtype=jnp.bfloat16):
    """One-time weight prep: transpose + cast here, NOT per forward call."""
    in_dim = params["wp"].shape[1]
    return {
        "wp_t": jnp.asarray(params["wp"].T, compute_dtype),                   # (in, out)
        "bp": jnp.asarray(params["bp"], jnp.float32).reshape(1, in_dim),      # (1, D)
        "wm_row": jnp.asarray(params["wm"], jnp.float32).reshape(1, in_dim),  # (1, D)
        "bm": jnp.asarray(params["bm"], jnp.float32).reshape(1, 1),           # (1, 1)
    }


def task2cl_forward(Z, ind1, ind2, prepared, *, max_tile_p=512):
    """Pallas implementation of Task2CLClassifier.forward."""
    wp_t, bp, wm_row, bm = (prepared["wp_t"], prepared["bp"],
                            prepared["wm_row"], prepared["bm"])
    compute_dtype = wp_t.dtype
    D = int(wp_t.shape[0])
    N = int(Z.shape[0])
    P = int(ind1.shape[0])
    bpe = jnp.dtype(compute_dtype).itemsize

    if Z.dtype != compute_dtype:
        # Fallback only: callers should pre-cast Z once per step (see __main__).
        Z = Z.astype(compute_dtype)

    # The kernel keeps the whole Z table (and wp) VMEM-resident; guard the size.
    if 2 * N * D * bpe + 2 * D * D * bpe > 32 * 1024 * 1024:
        # TODO(synk): large-Z path = scalar-prefetch + per-row double-buffered DMA
        # gather from Z in pl.ANY, plus K-tiled wp (see header TODOs).
        raise NotImplementedError("Z/wp too large to keep VMEM-resident")

    tp, P_pad, num_tiles = _choose_tile(P, max_tile_p)

    # Glue: pad indices and interleave (ind1-tile, ind2-tile) at tile granularity
    # so each grid block of pair_idx is exactly the kernel's (2*tp, 1) index tile.
    ind1p = jnp.pad(ind1.astype(jnp.int32), (0, P_pad - P))
    ind2p = jnp.pad(ind2.astype(jnp.int32), (0, P_pad - P))
    pair_idx = jnp.stack(
        [ind1p.reshape(num_tiles, tp), ind2p.reshape(num_tiles, tp)], axis=1
    ).reshape(2 * P_pad, 1)                                            # (2*P_pad, 1)

    # Right-sized scoped-VMEM limit: resident operands (double-buffered by the
    # pipeline) + per-tile temporaries, with 2x slack.
    est_vmem = (2 * N * D * bpe + 2 * D * D * bpe          # resident Z, wp
                + 2 * 2 * tp * 4 + 4 * D * 4               # idx blocks, bp + wm
                + 2 * tp * N * bpe                         # one-hot temp
                + 2 * tp * D * (bpe + 8)                   # zs + y (f32) + slack
                + tp * tp * 4 + 4 * tp * 4)                # transpose mask, out
    vmem_limit = int(min(100 * 2**20, max(16 * 2**20, 2 * est_vmem)))

    cost = pl.CostEstimate(
        flops=int(2 * (2 * P_pad) * N * D          # in-kernel one-hot gather matmul
                  + 2 * (2 * P_pad) * D * D        # projection matmul
                  + 8 * P_pad * D),                # bias/relu/product/reduce
        transcendentals=int(P_pad),
        bytes_accessed=int(N * D * bpe + D * D * bpe + 2 * P_pad * 4
                           + 2 * D * 4 + 4 + P_pad * 4),
    )

    out = pl.pallas_call(
        _task2cl_kernel,
        out_shape=jax.ShapeDtypeStruct((1, P_pad), jnp.float32),
        grid=(num_tiles,),
        in_specs=[
            pl.BlockSpec((2 * tp, 1), lambda i: (i, 0)),        # pair indices tile
            pl.BlockSpec((N, D), lambda i: (0, 0)),             # Z (VMEM-resident)
            pl.BlockSpec((D, D), lambda i: (0, 0)),             # wp (resident)
            pl.BlockSpec((1, D), lambda i: (0, 0)),             # bp (resident)
            pl.BlockSpec((1, D), lambda i: (0, 0)),             # wm row (resident)
            pl.BlockSpec(memory_space=pltpu.MemorySpace.SMEM),  # bm scalar
        ],
        out_specs=pl.BlockSpec((1, tp), lambda i: (0, i)),      # lane-dense output
        compiler_params=pltpu.CompilerParams(
            dimension_semantics=("parallel",),
            vmem_limit_bytes=vmem_limit,
        ),
        cost_estimate=cost,
    )(pair_idx, Z, wp_t, bp, wm_row, bm)

    return out[0, :P]                                            # squeeze(-1), drop padding


def reference_forward(Z, ind1, ind2, params, compute_dtype=jnp.float32):
    """Pure-JAX reference of the PyTorch forward (optionally matched-precision)."""
    wp, bp, wm, bm = params["wp"], params["bp"], params["wm"], params["bm"]
    z1 = Z[ind1].astype(compute_dtype)
    z2 = Z[ind2].astype(compute_dtype)
    wp_c = wp.astype(compute_dtype)
    x1 = jax.nn.relu(jnp.dot(z1, wp_c.T, preferred_element_type=jnp.float32) + bp)
    x2 = jax.nn.relu(jnp.dot(z2, wp_c.T, preferred_element_type=jnp.float32) + bp)
    return jax.nn.sigmoid((x1 * x2) @ wm.T + bm)[..., 0]


if __name__ == "__main__":
    key = jax.random.PRNGKey(0)
    k_z, k_p, k_i1, k_i2 = jax.random.split(key, 4)

    in_dim = 256     # hidden dim, lane/MXU friendly (multiple of 128)
    N = 512          # number of embeddings in Z
    P = 300          # number of (ind1, ind2) pairs (not a tile multiple on purpose)

    Z_f32 = jax.random.normal(k_z, (N, in_dim), jnp.float32)
    ind1 = jax.random.randint(k_i1, (P,), 0, N, dtype=jnp.int32)
    ind2 = jax.random.randint(k_i2, (P,), 0, N, dtype=jnp.int32)

    params = init_params(k_p, in_dim)
    prepared = prepare_params(params, compute_dtype=jnp.bfloat16)
    Z = Z_f32.astype(jnp.bfloat16)       # pre-cast Z ONCE, not per forward call

    fwd = jax.jit(functools.partial(task2cl_forward, max_tile_p=512))
    out = fwd(Z, ind1, ind2, prepared)
    out = jax.block_until_ready(out)
    assert out.shape == (P,)

    # Tight check vs a matched-precision (bf16 matmul operands, f32 accum) reference.
    ref_matched = reference_forward(Z_f32, ind1, ind2, params, compute_dtype=jnp.bfloat16)
    assert jnp.allclose(out, ref_matched, atol=1e-4, rtol=1e-3), \
        "mismatch vs matched-precision reference"

    # Loose sanity check vs the full-f32 PyTorch-equivalent reference.
    ref_f32 = reference_forward(Z_f32, ind1, ind2, params, compute_dtype=jnp.float32)
    assert jnp.allclose(out, ref_f32, atol=2e-2), "mismatch vs f32 reference"

    print("KERNEL_OK")
</pallas_src>

<mosaic_0001>
module attributes {stable_mosaic.version = 11 : i64} {
  func.func @_task2cl_kernel(%arg0: i32, %arg1: memref<512x1xi32, #tpu.memory_space<vmem>>, %arg2: memref<512x256xbf16, #tpu.memory_space<vmem>>, %arg3: memref<256x256xbf16, #tpu.memory_space<vmem>>, %arg4: memref<1x256xf32, #tpu.memory_space<vmem>>, %arg5: memref<1x256xf32, #tpu.memory_space<vmem>>, %arg6: memref<1x1xf32, #tpu.memory_space<smem>>, %arg7: memref<1x256xf32, #tpu.memory_space<vmem>>) attributes {dimension_semantics = [#tpu.dimension_semantics<parallel>], iteration_bounds = array<i64: 2>, scalar_prefetch = 0 : i64, scratch_operands = 0 : i64, tpu.core_type = #tpu.core_type<tc>, window_params = [{transform_indices = @transform_0, window_bounds = array<i64: 512, 1>}, {pipeline_mode = #tpu.pipeline_mode<synchronous>, transform_indices = @transform_1, window_bounds = array<i64: 512, 256>}, {pipeline_mode = #tpu.pipeline_mode<synchronous>, transform_indices = @transform_2, window_bounds = array<i64: 256, 256>}, {pipeline_mode = #tpu.pipeline_mode<synchronous>, transform_indices = @transform_3, window_bounds = array<i64: 1, 256>}, {pipeline_mode = #tpu.pipeline_mode<synchronous>, transform_indices = @transform_4, window_bounds = array<i64: 1, 256>}, {transform_indices = @transform_5, window_bounds = array<i64: 1, 1>}, {transform_indices = @transform_6, window_bounds = array<i64: 1, 256>}]} {
    %0 = tpu.iota {dimensions = array<i32: 1>} : vector<512x512xi32>
    %c0 = arith.constant 0 : index
    %c0_0 = arith.constant 0 : index
    %1 = vector.load %arg1[%c0, %c0_0] : memref<512x1xi32, #tpu.memory_space<vmem>>, vector<512x1xi32>
    %2 = vector.broadcast %1 : vector<512x1xi32> to vector<512x512xi32>
    %3 = arith.cmpi eq, %0, %2 : vector<512x512xi32>
    %4 = arith.extui %3 : vector<512x512xi1> to vector<512x512xi32>
    %5 = arith.sitofp %4 : vector<512x512xi32> to vector<512x512xf32>
    %6 = arith.truncf %5 : vector<512x512xf32> to vector<512x512xbf16>
    %c0_1 = arith.constant 0 : index
    %c0_2 = arith.constant 0 : index
    %7 = vector.load %arg2[%c0_1, %c0_2] : memref<512x256xbf16, #tpu.memory_space<vmem>>, vector<512x256xbf16>
    %cst = arith.constant dense<0.000000e+00> : vector<512x256xf32>
    %8 = tpu.matmul %6, %7, %cst {dimension_numbers = #tpu.dot_dimension_numbers<[1], [0], [0], [1], [0, 0, 1, 1], [], []>} : vector<512x512xbf16>, vector<512x256xbf16>, vector<512x256xf32> -> vector<512x256xf32>
    %9 = arith.truncf %8 : vector<512x256xf32> to vector<512x256xbf16>
    %c0_3 = arith.constant 0 : index
    %c0_4 = arith.constant 0 : index
    %10 = vector.load %arg3[%c0_3, %c0_4] : memref<256x256xbf16, #tpu.memory_space<vmem>>, vector<256x256xbf16>
    %cst_5 = arith.constant dense<0.000000e+00> : vector<512x256xf32>
    %11 = tpu.matmul %9, %10, %cst_5 {dimension_numbers = #tpu.dot_dimension_numbers<[1], [0], [0], [1], [0, 0, 1, 1], [], []>} : vector<512x256xbf16>, vector<256x256xbf16>, vector<512x256xf32> -> vector<512x256xf32>
    %c0_6 = arith.constant 0 : index
    %c0_7 = arith.constant 0 : index
    %12 = vector.load %arg4[%c0_6, %c0_7] : memref<1x256xf32, #tpu.memory_space<vmem>>, vector<1x256xf32>
    %13 = vector.broadcast %12 : vector<1x256xf32> to vector<512x256xf32>
    %14 = arith.addf %11, %13 : vector<512x256xf32>
    %cst_8 = arith.constant 0.000000e+00 : f32
    %15 = vector.broadcast %cst_8 : f32 to vector<512x256xf32>
    %16 = arith.maximumf %14, %15 : vector<512x256xf32>
    %17 = vector.extract_strided_slice %16 {offsets = [0, 0], sizes = [256, 256], strides = [1, 1]} : vector<512x256xf32> to vector<256x256xf32>
    %18 = vector.extract_strided_slice %16 {offsets = [256, 0], sizes = [256, 256], strides = [1, 1]} : vector<512x256xf32> to vector<256x256xf32>
    %19 = arith.mulf %17, %18 : vector<256x256xf32>
    %c0_9 = arith.constant 0 : index
    %c0_10 = arith.constant 0 : index
    %20 = vector.load %arg5[%c0_9, %c0_10] : memref<1x256xf32, #tpu.memory_space<vmem>>, vector<1x256xf32>
    %21 = vector.broadcast %20 : vector<1x256xf32> to vector<256x256xf32>
    %22 = arith.mulf %19, %21 : vector<256x256xf32>
    %cst_11 = arith.constant dense<0.000000e+00> : vector<256xf32>
    %23 = vector.multi_reduction <add>, %22, %cst_11 [1] : vector<256x256xf32> to vector<256xf32>
    %24 = vector.shape_cast %23 : vector<256xf32> to vector<256x1xf32>
    %25 = tpu.iota {dimensions = array<i32: 0>} : vector<256x256xi32>
    %26 = tpu.iota {dimensions = array<i32: 1>} : vector<256x256xi32>
    %27 = arith.cmpi eq, %25, %26 : vector<256x256xi32>
    %28 = arith.extui %27 : vector<256x256xi1> to vector<256x256xi32>
    %29 = arith.sitofp %28 : vector<256x256xi32> to vector<256x256xf32>
    %30 = vector.broadcast %24 : vector<256x1xf32> to vector<256x256xf32>
    %31 = arith.mulf %29, %30 : vector<256x256xf32>
    %cst_12 = arith.constant dense<0.000000e+00> : vector<256xf32>
    %32 = vector.multi_reduction <add>, %31, %cst_12 [0] : vector<256x256xf32> to vector<256xf32>
    %33 = vector.shape_cast %32 : vector<256xf32> to vector<1x256xf32>
    %c0_13 = arith.constant 0 : index
    %c0_14 = arith.constant 0 : index
    %34 = memref.load %arg6[%c0_13, %c0_14] : memref<1x1xf32, #tpu.memory_space<smem>>
    %35 = vector.broadcast %34 : f32 to vector<1x256xf32>
    %36 = arith.addf %33, %35 : vector<1x256xf32>
    %37 = arith.negf %36 : vector<1x256xf32>
    %38 = math.exp %37 : vector<1x256xf32>
    %cst_15 = arith.constant 1.000000e+00 : f32
    %39 = vector.broadcast %cst_15 : f32 to vector<1x256xf32>
    %40 = arith.addf %39, %38 : vector<1x256xf32>
    %41 = arith.divf %39, %40 : vector<1x256xf32>
    %c0_16 = arith.constant 0 : index
    %c0_17 = arith.constant 0 : index
    %42 = vector.load %arg7[%c0_16, %c0_17] : memref<1x256xf32, #tpu.memory_space<vmem>>, vector<1x256xf32>
    tpu.vector_store %arg7[%c0_16, %c0_17], %41 {strides = array<i32>} : memref<1x256xf32, #tpu.memory_space<vmem>>, vector<1x256xf32>,
    return
  }
  func.func @transform_0(%arg0: i32) -> (i32, i32) {
    %c0_i32 = arith.constant 0 : i32
    %c0_i32_0 = arith.constant 0 : i32
    return %arg0, %c0_i32 : i32, i32
  }
  func.func @transform_1(%arg0: i32) -> (i32, i32) {
    %c0_i32 = arith.constant 0 : i32
    %c0_i32_0 = arith.constant 0 : i32
    %c0_i32_1 = arith.constant 0 : i32
    return %c0_i32, %c0_i32_0 : i32, i32
  }
  func.func @transform_2(%arg0: i32) -> (i32, i32) {
    %c0_i32 = arith.constant 0 : i32
    %c0_i32_0 = arith.constant 0 : i32
    %c0_i32_1 = arith.constant 0 : i32
    return %c0_i32, %c0_i32_0 : i32, i32
  }
  func.func @transform_3(%arg0: i32) -> (i32, i32) {
    %c0_i32 = arith.constant 0 : i32
    %c0_i32_0 = arith.constant 0 : i32
    %c0_i32_1 = arith.constant 0 : i32
    return %c0_i32, %c0_i32_0 : i32, i32
  }
  func.func @transform_4(%arg0: i32) -> (i32, i32) {
    %c0_i32 = arith.constant 0 : i32
    %c0_i32_0 = arith.constant 0 : i32
    %c0_i32_1 = arith.constant 0 : i32
    return %c0_i32, %c0_i32_0 : i32, i32
  }
  func.func @transform_5(%arg0: i32) -> (i32, i32) {
    %c0_i32 = arith.constant 0 : i32
    %c0_i32_0 = arith.constant 0 : i32
    %c0_i32_1 = arith.constant 0 : i32
    return %c0_i32, %c0_i32_0 : i32, i32
  }
  func.func @transform_6(%arg0: i32) -> (i32, i32) {
    %c0_i32 = arith.constant 0 : i32
    %c0_i32_0 = arith.constant 0 : i32
    return %c0_i32, %arg0 : i32, i32
  }
}

</mosaic_0001>

<llo_original>
// kernel: task2cl_forward.1
$region0: #{task2cl_forward.1}
  #allocation0 [shape = 'u32[]', space=smem, size = 0x4, offset = 0x4, fixed_abs, tag = 'smem constant byte address 0x4 - core index']
  #allocation1 [shape = 'u32[144,128]{1,0:T(1,128)}', space=vmem, size = 0x12000, scoped, tag = 'internal scratch']
  #allocation2 [shape = 'f32[1,1]{1,0:T(1,128)S(6)}', space=smem, size = 0x200, scoped, tag = 'scoped memory for task2cl_forward.1']
  %s0 = inlined_call_operand.vmem [shape: s32[1024,1], index: 0, kind: input, shape index: {}]
  %s1 = inlined_call_operand.vmem [shape: bf16[512,256], index: 1, kind: input, shape index: {}]
  %s2 = inlined_call_operand.vmem [shape: bf16[256,256], index: 2, kind: input, shape index: {}]
  %s3 = inlined_call_operand.vmem [shape: f32[1,256], index: 3, kind: input, shape index: {}]
  %s4 = inlined_call_operand.vmem [shape: f32[1,256], index: 4, kind: input, shape index: {}]
  %s5 = inlined_call_operand.<no memory space> [shape: f32[1,1], index: 5, kind: input, shape index: {}]
  %s6 = inlined_call_operand.vmem [shape: f32[1,512], index: 6, kind: output, shape index: {}]
  %s7 = sld [smem:[#allocation0]]
  $region57: #{task2cl_forward.1} parent=0
    _
  %s9 = ssub.s32 1, %s7
  %s10 = scalar_select 0, %s9, %s7
  %11 = sst [smem:[#allocation2]] %s5
  loop: start=0, step=1, limit=4
  $region2: #{task2cl_forward.1} parent=0 // loop_pre_header
    _
  $region3: #{task2cl_forward.1} parent=0 // loop_header
    %s13 = sphi 0, %s17
    %p14 = scmp.ge.s32.totalorder %s13, 4
    %s23 = sphi 0, %s25
    %s26 = sphi 0, %s23
    %s27 = sphi 0, %s26
    %s43 = sphi 0, %s27
    %s47 = sphi 0, %s47
    %s49 = sphi 0, %s47
    %s50 = sphi 0, %s49
    %s64 = sphi 0, %s50
    %s68 = sphi 0, %s68
    %s70 = sphi 0, %s68
    %s71 = sphi 0, %s70
    %s85 = sphi 0, %s71
    %s89 = sphi 0, %s89
    %s91 = sphi 0, %s89
    %s92 = sphi 0, %s91
    %s106 = sphi 0, %s92
    %s110 = sphi 0, %s110
    %s112 = sphi 0, %s110
    %s113 = sphi 0, %s112
    %s127 = sphi 0, %s113
    %s131 = sphi 0, %s131
    %s133 = sphi 0, %s131
    %s134 = sphi 0, %s133
    %s148 = sphi 0, %s134
    %s154 = sphi 0, %s156
    %s157 = sphi 0, %s154
    %s158 = sphi 0, %s157
    %s174 = sphi 0, %s158
  $region4: #{task2cl_forward.1} parent=0 // loop_header_branch
    %16 = sbr.rel (%p14) target = $region8
  $region5: #{task2cl_forward.1} parent=0 // loop_body
    %s18 = ssub.s32 %s13, 1
    %s19 = ssub.s32 %s13, 2
    %s20 = sadd.s32 %s13, 1
    %s21 = ssub.s32 %s13, %s20
    %p22 = scmp.eq.s32.totalorder %s21, 0
    %s24 = sadd.s32 %s23, 1
    %s25 = scalar_select %p22, %s23, %s24
    %p28 = pneg %p22
    %p29 = scmp.eq.s32.totalorder %s13, 1
    %p30 = por %p28, %p29
    %p31 = scmp.ne.s32.totalorder %s23, %s26
    %p32 = scmp.eq.s32.totalorder %s13, 0
    %p33 = por %p31, %p32
    %p34 = scmp.ne.s32.totalorder %s23, %s26
    %p35 = scmp.eq.s32.totalorder %s18, 1
    %p36 = por %p34, %p35
    %p37 = scmp.ne.s32.totalorder %s26, %s27
    %p38 = scmp.eq.s32.totalorder %s18, 0
    %p39 = por %p37, %p38
    %p40 = scmp.ne.s32.totalorder %s26, %s27
    %p41 = scmp.eq.s32.totalorder %s19, 1
    %p42 = por %p40, %p41
    %p44 = scmp.ne.s32.totalorder %s27, %s43
    %p45 = scmp.eq.s32.totalorder %s19, 0
    %p46 = por %p44, %p45
    %s48 = sadd.s32 %s47, 1
    %p51 = scmp.eq.s32.totalorder %s13, 1
    %p52 = scmp.ne.s32.totalorder %s47, %s49
    %p53 = scmp.eq.s32.totalorder %s13, 0
    %p54 = por %p52, %p53
    %p55 = scmp.ne.s32.totalorder %s47, %s49
    %p56 = scmp.eq.s32.totalorder %s18, 1
    %p57 = por %p55, %p56
    %p58 = scmp.ne.s32.totalorder %s49, %s50
    %p59 = scmp.eq.s32.totalorder %s18, 0
    %p60 = por %p58, %p59
    %p61 = scmp.ne.s32.totalorder %s49, %s50
    %p62 = scmp.eq.s32.totalorder %s19, 1
    %p63 = por %p61, %p62
    %p65 = scmp.ne.s32.totalorder %s50, %s64
    %p66 = scmp.eq.s32.totalorder %s19, 0
    %p67 = por %p65, %p66
    %s69 = sadd.s32 %s68, 1
    %p72 = scmp.eq.s32.totalorder %s13, 1
    %p73 = scmp.ne.s32.totalorder %s68, %s70
    %p74 = scmp.eq.s32.totalorder %s13, 0
    %p75 = por %p73, %p74
    %p76 = scmp.ne.s32.totalorder %s68, %s70
    %p77 = scmp.eq.s32.totalorder %s18, 1
    %p78 = por %p76, %p77
    %p79 = scmp.ne.s32.totalorder %s70, %s71
    %p80 = scmp.eq.s32.totalorder %s18, 0
    %p81 = por %p79, %p80
    %p82 = scmp.ne.s32.totalorder %s70, %s71
    %p83 = scmp.eq.s32.totalorder %s19, 1
    %p84 = por %p82, %p83
    %p86 = scmp.ne.s32.totalorder %s71, %s85
    %p87 = scmp.eq.s32.totalorder %s19, 0
    %p88 = por %p86, %p87
    %s90 = sadd.s32 %s89, 1
    %p93 = scmp.eq.s32.totalorder %s13, 1
    %p94 = scmp.ne.s32.totalorder %s89, %s91
    %p95 = scmp.eq.s32.totalorder %s13, 0
    %p96 = por %p94, %p95
    %p97 = scmp.ne.s32.totalorder %s89, %s91
    %p98 = scmp.eq.s32.totalorder %s18, 1
    %p99 = por %p97, %p98
    %p100 = scmp.ne.s32.totalorder %s91, %s92
    %p101 = scmp.eq.s32.totalorder %s18, 0
    %p102 = por %p100, %p101
    %p103 = scmp.ne.s32.totalorder %s91, %s92
    %p104 = scmp.eq.s32.totalorder %s19, 1
    %p105 = por %p103, %p104
    %p107 = scmp.ne.s32.totalorder %s92, %s106
    %p108 = scmp.eq.s32.totalorder %s19, 0
    %p109 = por %p107, %p108
    %s111 = sadd.s32 %s110, 1
    %p114 = scmp.eq.s32.totalorder %s13, 1
    %p115 = scmp.ne.s32.totalorder %s110, %s112
    %p116 = scmp.eq.s32.totalorder %s13, 0
    %p117 = por %p115, %p116
    %p118 = scmp.ne.s32.totalorder %s110, %s112
    %p119 = scmp.eq.s32.totalorder %s18, 1
    %p120 = por %p118, %p119
    %p121 = scmp.ne.s32.totalorder %s112, %s113
    %p122 = scmp.eq.s32.totalorder %s18, 0
    %p123 = por %p121, %p122
    %p124 = scmp.ne.s32.totalorder %s112, %s113
    %p125 = scmp.eq.s32.totalorder %s19, 1
    %p126 = por %p124, %p125
    %p128 = scmp.ne.s32.totalorder %s113, %s127
    %p129 = scmp.eq.s32.totalorder %s19, 0
    %p130 = por %p128, %p129
    %s132 = sadd.s32 %s131, 1
    %p135 = scmp.eq.s32.totalorder %s13, 1
    %p136 = scmp.ne.s32.totalorder %s131, %s133
    %p137 = scmp.eq.s32.totalorder %s13, 0
    %p138 = por %p136, %p137
    %p139 = scmp.ne.s32.totalorder %s131, %s133
    %p140 = scmp.eq.s32.totalorder %s18, 1
    %p141 = por %p139, %p140
    %p142 = scmp.ne.s32.totalorder %s133, %s134
    %p143 = scmp.eq.s32.totalorder %s18, 0
    %p144 = por %p142, %p143
    %p145 = scmp.ne.s32.totalorder %s133, %s134
    %p146 = scmp.eq.s32.totalorder %s19, 1
    %p147 = por %p145, %p146
    %p149 = scmp.ne.s32.totalorder %s134, %s148
    %p150 = scmp.eq.s32.totalorder %s19, 0
    %p151 = por %p149, %p150
    %s152 = ssub.s32 %s13, %s20
    %p153 = scmp.eq.s32.totalorder %s152, 0
    %s155 = sadd.s32 %s154, 1
    %s156 = scalar_select %p153, %s154, %s155
    %p159 = pneg %p153
    %p160 = scmp.eq.s32.totalorder %s13, 1
    %p161 = por %p159, %p160
    %p162 = scmp.ne.s32.totalorder %s154, %s157
    %p163 = scmp.eq.s32.totalorder %s13, 0
    %p164 = por %p162, %p163
    %p165 = scmp.ne.s32.totalorder %s154, %s157
    %p166 = scmp.eq.s32.totalorder %s18, 1
    %p167 = por %p165, %p166
    %p168 = scmp.ne.s32.totalorder %s157, %s158
    %p169 = scmp.eq.s32.totalorder %s18, 0
    %p170 = por %p168, %p169
    %p171 = scmp.ne.s32.totalorder %s157, %s158
    %p172 = scmp.eq.s32.totalorder %s19, 1
    %p173 = por %p171, %p172
    %p175 = scmp.ne.s32.totalorder %s158, %s174
    %p176 = scmp.eq.s32.totalorder %s19, 0
    %p177 = por %p175, %p176
    %p178 = scmp.le.s32.totalorder 1, %s13
    %p179 = scmp.lt.s32.totalorder %s13, 3
    %p180 = pnand %p178, %p179
    %p181 = pneg %p180
    // Predicated region
    $region9: #{task2cl_forward.1} parent=5 // pred_check
      _
    $region10: #{task2cl_forward.1} parent=5 // pred_check_branch
      %183 = sbr.rel (%p180) target = $region12
    $region11: #{task2cl_forward.1} parent=5 // pred_region
      %s184 = ssub.s32 %s13, 1
      // Predicated region
      $region13: #{task2cl_forward.1} parent=11 // pred_check
        %p185 = pneg %p60
      $region14: #{task2cl_forward.1} parent=11 // pred_check_branch
        %187 = sbr.rel (%p185) target = $region16
      $region15: #{task2cl_forward.1} parent=11 // pred_region
        _
      $region16: #{task2cl_forward.1} parent=11 // pred_fallthru
        _
      // Predicated region
      $region17: #{task2cl_forward.1} parent=11 // pred_check
        %p188 = pneg %p81
      $region18: #{task2cl_forward.1} parent=11 // pred_check_branch
        %190 = sbr.rel (%p188) target = $region20
      $region19: #{task2cl_forward.1} parent=11 // pred_region
        _
      $region20: #{task2cl_forward.1} parent=11 // pred_fallthru
        _
      // Predicated region
      $region21: #{task2cl_forward.1} parent=11 // pred_check
        %p191 = pneg %p102
      $region22: #{task2cl_forward.1} parent=11 // pred_check_branch
        %193 = sbr.rel (%p191) target = $region24
      $region23: #{task2cl_forward.1} parent=11 // pred_region
        _
      $region24: #{task2cl_forward.1} parent=11 // pred_fallthru
        _
      // Predicated region
      $region25: #{task2cl_forward.1} parent=11 // pred_check
        %p194 = pneg %p123
      $region26: #{task2cl_forward.1} parent=11 // pred_check_branch
        %196 = sbr.rel (%p194) target = $region28
      $region27: #{task2cl_forward.1} parent=11 // pred_region
        _
      $region28: #{task2cl_forward.1} parent=11 // pred_fallthru
        _
      // Predicated region
      $region29: #{task2cl_forward.1} parent=11 // pred_check
        %p197 = pneg %p144
      $region30: #{task2cl_forward.1} parent=11 // pred_check_branch
        %199 = sbr.rel (%p197) target = $region32
      $region31: #{task2cl_forward.1} parent=11 // pred_region
        _
      $region32: #{task2cl_forward.1} parent=11 // pred_fallthru
        _
    $region12: #{task2cl_forward.1} parent=5 // pred_fallthru
      _
    %p200 = scmp.lt.s32.totalorder %s13, 2
    // Predicated region
    $region33: #{task2cl_forward.1} parent=5 // pred_check
      %p201 = pneg %p200
    $region34: #{task2cl_forward.1} parent=5 // pred_check_branch
      %203 = sbr.rel (%p201) target = $region36
    $region35: #{task2cl_forward.1} parent=5 // pred_region
      // Predicated region
      $region37: #{task2cl_forward.1} parent=35 // pred_check
        %p204 = pneg %p33
      $region38: #{task2cl_forward.1} parent=35 // pred_check_branch
        %206 = sbr.rel (%p204) target = $region40
      $region39: #{task2cl_forward.1} parent=35 // pred_region
        %s207 = smul.u32 64, %s13
        %p208 = scmp.lt.s32.totalorder %s207, 127
        %s209 = scalar_select %p208, %s207, 127
        %s210 = smul.addr %s209, 8
        %s211 = scalar_lea.vmem %s0, %s210
        %s212 = smul.u32 64, %s13
      $region40: #{task2cl_forward.1} parent=35 // pred_fallthru
        _
    $region36: #{task2cl_forward.1} parent=5 // pred_fallthru
      _
    %p213 = scmp.le.s32.totalorder 1, %s13
    %p214 = scmp.lt.s32.totalorder %s13, 3
    %p215 = pnand %p213, %p214
    %p216 = pneg %p215
    // Predicated region
    $region41: #{task2cl_forward.1} parent=5 // pred_check
      _
    $region42: #{task2cl_forward.1} parent=5 // pred_check_branch
      %218 = sbr.rel (%p215) target = $region44
    $region43: #{task2cl_forward.1} parent=5 // pred_region
      %s219 = ssub.s32 %s13, 1
      %s220 = smul.u32 64, %s18
      %p221 = scmp.lt.s32.totalorder %s220, 127
      %s222 = scalar_select %p221, %s220, 127
      %s223 = smul.addr %s222, 8
      %s224 = scalar_lea.vmem %s0, %s223
      %p225 = pneg %p39
      %p226 = pneg %p36
      %p227 = pneg %p60
      %p228 = pneg %p57
      %p229 = pneg %p81
      %p230 = pneg %p78
      %p231 = pneg %p102
      %p232 = pneg %p99
      %p233 = pneg %p123
      %p234 = pneg %p120
      %p235 = pneg %p144
      %p236 = pneg %p141
      %p237 = pneg %p170
      %p238 = pneg %p167
      %s239 = smul.u32 2, %s18
      %p240 = scmp.lt.s32.totalorder %s239, 3
      %s241 = scalar_select %p240, %s239, 3
      %s242 = scalar_lea.vmem %s6, %s241
      %s243 = smul.u32 64, %s18
      %p244 = scmp.lt.s32.totalorder %s243, 127
      %s245 = scalar_select %p244, %s243, 127
      %s246 = smul.addr %s245, 8
      %s247 = scalar_lea.vmem %s0, %s246
      %s248 = smul.u32 64, %s18
      %s249 = smul.u32 2, %s18
      %p250 = scmp.lt.s32.totalorder %s249, 3
      %s251 = scalar_select %p250, %s249, 3
      %s252 = scalar_lea.vmem %s6, %s251
      %s253 = smul.u32 2, %s18
      %v254 = vlaneseq
      %v255 = vand.u32 %v254, 127
      %v256 = vadd.s32 %v255, 128
      %v257 = vadd.s32 %v255, 256
      %v258 = vadd.s32 %v255, 384
      %v259 = vld [vmem:[%s247] sm:$0xff]
      %v260 = vld [vmem:[%s247 + $0x8] sm:$0xff]
      %v261 = vld [vmem:[%s247 + $0x10] sm:$0xff]
      %v262 = vld [vmem:[%s247 + $0x18] sm:$0xff]
      %v263 = vld [vmem:[%s247 + $0x20] sm:$0xff]
      %v264 = vld [vmem:[%s247 + $0x28] sm:$0xff]
      %v265 = vld [vmem:[%s247 + $0x30] sm:$0xff]
      %v266 = vld [vmem:[%s247 + $0x38] sm:$0xff]
      %v267 = vld [vmem:[%s247 + $0x40] sm:$0xff]
      %v268 = vld [vmem:[%s247 + $0x48] sm:$0xff]
      %v269 = vld [vmem:[%s247 + $0x50] sm:$0xff]
      %v270 = vld [vmem:[%s247 + $0x58] sm:$0xff]
      %v271 = vld [vmem:[%s247 + $0x60] sm:$0xff]
      %v272 = vld [vmem:[%s247 + $0x68] sm:$0xff]
      %v273 = vld [vmem:[%s247 + $0x70] sm:$0xff]
      %v274 = vld [vmem:[%s247 + $0x78] sm:$0xff]
      %v275 = vld [vmem:[%s247 + $0x80] sm:$0xff]
      %v276 = vld [vmem:[%s247 + $0x88] sm:$0xff]
      %v277 = vld [vmem:[%s247 + $0x90] sm:$0xff]
      %v278 = vld [vmem:[%s247 + $0x98] sm:$0xff]
      %v279 = vld [vmem:[%s247 + $0xa0] sm:$0xff]
      %v280 = vld [vmem:[%s247 + $0xa8] sm:$0xff]
      %v281 = vld [vmem:[%s247 + $0xb0] sm:$0xff]
      %v282 = vld [vmem:[%s247 + $0xb8] sm:$0xff]
      %v283 = vld [vmem:[%s247 + $0xc0] sm:$0xff]
      %v284 = vld [vmem:[%s247 + $0xc8] sm:$0xff]
      %v285 = vld [vmem:[%s247 + $0xd0] sm:$0xff]
      %v286 = vld [vmem:[%s247 + $0xd8] sm:$0xff]
      %v287 = vld [vmem:[%s247 + $0xe0] sm:$0xff]
      %v288 = vld [vmem:[%s247 + $0xe8] sm:$0xff]
      %v289 = vld [vmem:[%s247 + $0xf0] sm:$0xff]
      %v290 = vld [vmem:[%s247 + $0xf8] sm:$0xff]
      %v291 = vld [vmem:[%s247 + $0x100] sm:$0xff]
      %v292 = vld [vmem:[%s247 + $0x108] sm:$0xff]
      %v293 = vld [vmem:[%s247 + $0x110] sm:$0xff]
      %v294 = vld [vmem:[%s247 + $0x118] sm:$0xff]
      %v295 = vld [vmem:[%s247 + $0x120] sm:$0xff]
      %v296 = vld [vmem:[%s247 + $0x128] sm:$0xff]
      %v297 = vld [vmem:[%s247 + $0x130] sm:$0xff]
      %v298 = vld [vmem:[%s247 + $0x138] sm:$0xff]
      %v299 = vld [vmem:[%s247 + $0x140] sm:$0xff]
      %v300 = vld [vmem:[%s247 + $0x148] sm:$0xff]
      %v301 = vld [vmem:[%s247 + $0x150] sm:$0xff]
      %v302 = vld [vmem:[%s247 + $0x158] sm:$0xff]
      %v303 = vld [vmem:[%s247 + $0x160] sm:$0xff]
      %v304 = vld [vmem:[%s247 + $0x168] sm:$0xff]
      %v305 = vld [vmem:[%s247 + $0x170] sm:$0xff]
      %v306 = vld [vmem:[%s247 + $0x178] sm:$0xff]
      %v307 = vld [vmem:[%s247 + $0x180] sm:$0xff]
      %v308 = vld [vmem:[%s247 + $0x188] sm:$0xff]
      %v309 = vld [vmem:[%s247 + $0x190] sm:$0xff]
      %v310 = vld [vmem:[%s247 + $0x198] sm:$0xff]
      %v311 = vld [vmem:[%s247 + $0x1a0] sm:$0xff]
      %v312 = vld [vmem:[%s247 + $0x1a8] sm:$0xff]
      %v313 = vld [vmem:[%s247 + $0x1b0] sm:$0xff]
      %v314 = vld [vmem:[%s247 + $0x1b8] sm:$0xff]
      %v315 = vld [vmem:[%s247 + $0x1c0] sm:$0xff]
      %v316 = vld [vmem:[%s247 + $0x1c8] sm:$0xff]
      %v317 = vld [vmem:[%s247 + $0x1d0] sm:$0xff]
      %v318 = vld [vmem:[%s247 + $0x1d8] sm:$0xff]
      %v319 = vld [vmem:[%s247 + $0x1e0] sm:$0xff]
      %v320 = vld [vmem:[%s247 + $0x1e8] sm:$0xff]
      %v321 = vld [vmem:[%s247 + $0x1f0] sm:$0xff]
      %v322 = vld [vmem:[%s247 + $0x1f8] sm:$0xff]
      %323 = vset.pattern.permute.xlu0 0
      %324 = vperm.xlu0 %323, %v259
      %v325 = vpop.permute.xlu0 %324
      %326 = vset.pattern.permute.xlu0 0
      %327 = vperm.xlu0 %326, %v260
      %v328 = vpop.permute.xlu0 %327
      %329 = vset.pattern.permute.xlu0 0
      %330 = vperm.xlu0 %329, %v261
      %v331 = vpop.permute.xlu0 %330
      %332 = vset.pattern.permute.xlu0 0
      %333 = vperm.xlu0 %332, %v262
      %v334 = vpop.permute.xlu0 %333
      %335 = vset.pattern.permute.xlu0 0
      %336 = vperm.xlu0 %335, %v263
      %v337 = vpop.permute.xlu0 %336
      %338 = vset.pattern.permute.xlu0 0
      %339 = vperm.xlu0 %338, %v264
      %v340 = vpop.permute.xlu0 %339
      %341 = vset.pattern.permute.xlu0 0
      %342 = vperm.xlu0 %341, %v265
      %v343 = vpop.permute.xlu0 %342
      %344 = vset.pattern.permute.xlu0 0
      %345 = vperm.xlu0 %344, %v266
      %v346 = vpop.permute.xlu0 %345
      %347 = vset.pattern.permute.xlu0 0
      %348 = vperm.xlu0 %347, %v267
      %v349 = vpop.permute.xlu0 %348
      %350 = vset.pattern.permute.xlu0 0
      %351 = vperm.xlu0 %350, %v268
      %v352 = vpop.permute.xlu0 %351
      %353 = vset.pattern.permute.xlu0 0
      %354 = vperm.xlu0 %353, %v269
      %v355 = vpop.permute.xlu0 %354
      %356 = vset.pattern.permute.xlu0 0
      %357 = vperm.xlu0 %356, %v270
      %v358 = vpop.permute.xlu0 %357
      %359 = vset.pattern.permute.xlu0 0
      %360 = vperm.xlu0 %359, %v271
      %v361 = vpop.permute.xlu0 %360
      %362 = vset.pattern.permute.xlu0 0
      %363 = vperm.xlu0 %362, %v272
      %v364 = vpop.permute.xlu0 %363
      %365 = vset.pattern.permute.xlu0 0
      %366 = vperm.xlu0 %365, %v273
      %v367 = vpop.permute.xlu0 %366
      %368 = vset.pattern.permute.xlu0 0
      %369 = vperm.xlu0 %368, %v274
      %v370 = vpop.permute.xlu0 %369
      %371 = vset.pattern.permute.xlu0 0
      %372 = vperm.xlu0 %371, %v275
      %v373 = vpop.permute.xlu0 %372
      %374 = vset.pattern.permute.xlu0 0
      %375 = vperm.xlu0 %374, %v276
      %v376 = vpop.permute.xlu0 %375
      %377 = vset.pattern.permute.xlu0 0
      %378 = vperm.xlu0 %377, %v277
      %v379 = vpop.permute.xlu0 %378
      %380 = vset.pattern.permute.xlu0 0
      %381 = vperm.xlu0 %380, %v278
      %v382 = vpop.permute.xlu0 %381
      %383 = vset.pattern.permute.xlu0 0
      %384 = vperm.xlu0 %383, %v279
      %v385 = vpop.permute.xlu0 %384
      %386 = vset.pattern.permute.xlu0 0
      %387 = vperm.xlu0 %386, %v280
      %v388 = vpop.permute.xlu0 %387
      %389 = vset.pattern.permute.xlu0 0
      %390 = vperm.xlu0 %389, %v281
      %v391 = vpop.permute.xlu0 %390
      %392 = vset.pattern.permute.xlu0 0
      %393 = vperm.xlu0 %392, %v282
      %v394 = vpop.permute.xlu0 %393
      %395 = vset.pattern.permute.xlu0 0
      %396 = vperm.xlu0 %395, %v283
      %v397 = vpop.permute.xlu0 %396
      %398 = vset.pattern.permute.xlu0 0
      %399 = vperm.xlu0 %398, %v284
      %v400 = vpop.permute.xlu0 %399
      %401 = vset.pattern.permute.xlu0 0
      %402 = vperm.xlu0 %401, %v285
      %v403 = vpop.permute.xlu0 %402
      %404 = vset.pattern.permute.xlu0 0
      %405 = vperm.xlu0 %404, %v286
      %v406 = vpop.permute.xlu0 %405
      %407 = vset.pattern.permute.xlu0 0
      %408 = vperm.xlu0 %407, %v287
      %v409 = vpop.permute.xlu0 %408
      %410 = vset.pattern.permute.xlu0 0
      %411 = vperm.xlu0 %410, %v288
      %v412 = vpop.permute.xlu0 %411
      %413 = vset.pattern.permute.xlu0 0
      %414 = vperm.xlu0 %413, %v289
      %v415 = vpop.permute.xlu0 %414
      %416 = vset.pattern.permute.xlu0 0
      %417 = vperm.xlu0 %416, %v290
      %v418 = vpop.permute.xlu0 %417
      %419 = vset.pattern.permute.xlu0 0
      %420 = vperm.xlu0 %419, %v291
      %v421 = vpop.permute.xlu0 %420
      %422 = vset.pattern.permute.xlu0 0
      %423 = vperm.xlu0 %422, %v292
      %v424 = vpop.permute.xlu0 %423
      %425 = vset.pattern.permute.xlu0 0
      %426 = vperm.xlu0 %425, %v293
      %v427 = vpop.permute.xlu0 %426
      %428 = vset.pattern.permute.xlu0 0
      %429 = vperm.xlu0 %428, %v294
      %v430 = vpop.permute.xlu0 %429
      %431 = vset.pattern.permute.xlu0 0
      %432 = vperm.xlu0 %431, %v295
      %v433 = vpop.permute.xlu0 %432
      %434 = vset.pattern.permute.xlu0 0
      %435 = vperm.xlu0 %434, %v296
      %v436 = vpop.permute.xlu0 %435
      %437 = vset.pattern.permute.xlu0 0
      %438 = vperm.xlu0 %437, %v297
      %v439 = vpop.permute.xlu0 %438
      %440 = vset.pattern.permute.xlu0 0
      %441 = vperm.xlu0 %440, %v298
      %v442 = vpop.permute.xlu0 %441
      %443 = vset.pattern.permute.xlu0 0
      %444 = vperm.xlu0 %443, %v299
      %v445 = vpop.permute.xlu0 %444
      %446 = vset.pattern.permute.xlu0 0
      %447 = vperm.xlu0 %446, %v300
      %v448 = vpop.permute.xlu0 %447
      %449 = vset.pattern.permute.xlu0 0
      %450 = vperm.xlu0 %449, %v301
      %v451 = vpop.permute.xlu0 %450
      %452 = vset.pattern.permute.xlu0 0
      %453 = vperm.xlu0 %452, %v302
      %v454 = vpop.permute.xlu0 %453
      %455 = vset.pattern.permute.xlu0 0
      %456 = vperm.xlu0 %455, %v303
      %v457 = vpop.permute.xlu0 %456
      %458 = vset.pattern.permute.xlu0 0
      %459 = vperm.xlu0 %458, %v304
      %v460 = vpop.permute.xlu0 %459
      %461 = vset.pattern.permute.xlu0 0
      %462 = vperm.xlu0 %461, %v305
      %v463 = vpop.permute.xlu0 %462
      %464 = vset.pattern.permute.xlu0 0
      %465 = vperm.xlu0 %464, %v306
      %v466 = vpop.permute.xlu0 %465
      %467 = vset.pattern.permute.xlu0 0
      %468 = vperm.xlu0 %467, %v307
      %v469 = vpop.permute.xlu0 %468
      %470 = vset.pattern.permute.xlu0 0
      %471 = vperm.xlu0 %470, %v308
      %v472 = vpop.permute.xlu0 %471
      %473 = vset.pattern.permute.xlu0 0
      %474 = vperm.xlu0 %473, %v309
      %v475 = vpop.permute.xlu0 %474
      %476 = vset.pattern.permute.xlu0 0
      %477 = vperm.xlu0 %476, %v310
      %v478 = vpop.permute.xlu0 %477
      %479 = vset.pattern.permute.xlu0 0
      %480 = vperm.xlu0 %479, %v311
      %v481 = vpop.permute.xlu0 %480
      %482 = vset.pattern.permute.xlu0 0
      %483 = vperm.xlu0 %482, %v312
      %v484 = vpop.permute.xlu0 %483
      %485 = vset.pattern.permute.xlu0 0
      %486 = vperm.xlu0 %485, %v313
      %v487 = vpop.permute.xlu0 %486
      %488 = vset.pattern.permute.xlu0 0
      %489 = vperm.xlu0 %488, %v314
      %v490 = vpop.permute.xlu0 %489
      %491 = vset.pattern.permute.xlu0 0
      %492 = vperm.xlu0 %491, %v315
      %v493 = vpop.permute.xlu0 %492
      %494 = vset.pattern.permute.xlu0 0
      %495 = vperm.xlu0 %494, %v316
      %v496 = vpop.permute.xlu0 %495
      %497 = vset.pattern.permute.xlu0 0
      %498 = vperm.xlu0 %497, %v317
      %v499 = vpop.permute.xlu0 %498
      %500 = vset.pattern.permute.xlu0 0
      %501 = vperm.xlu0 %500, %v318
      %v502 = vpop.permute.xlu0 %501
      %503 = vset.pattern.permute.xlu0 0
      %504 = vperm.xlu0 %503, %v319
      %v505 = vpop.permute.xlu0 %504
      %506 = vset.pattern.permute.xlu0 0
      %507 = vperm.xlu0 %506, %v320
      %v508 = vpop.permute.xlu0 %507
      %509 = vset.pattern.permute.xlu0 0
      %510 = vperm.xlu0 %509, %v321
      %v511 = vpop.permute.xlu0 %510
      %512 = vset.pattern.permute.xlu0 0
      %513 = vperm.xlu0 %512, %v322
      %v514 = vpop.permute.xlu0 %513
      %vm515 = vcmp.eq.s32.totalorder %v255, %v325
      %vm516 = vcmp.eq.s32.totalorder %v256, %v325
      %vm517 = vcmp.eq.s32.totalorder %v257, %v325
      %vm518 = vcmp.eq.s32.totalorder %v258, %v325
      %vm519 = vcmp.eq.s32.totalorder %v255, %v328
      %vm520 = vcmp.eq.s32.totalorder %v256, %v328
      %vm521 = vcmp.eq.s32.totalorder %v257, %v328
      %vm522 = vcmp.eq.s32.totalorder %v258, %v328
      %vm523 = vcmp.eq.s32.totalorder %v255, %v331
      %vm524 = vcmp.eq.s32.totalorder %v256, %v331
      %vm525 = vcmp.eq.s32.totalorder %v257, %v331
      %vm526 = vcmp.eq.s32.totalorder %v258, %v331
      %vm527 = vcmp.eq.s32.totalorder %v255, %v334
      %vm528 = vcmp.eq.s32.totalorder %v256, %v334
      %vm529 = vcmp.eq.s32.totalorder %v257, %v334
      %vm530 = vcmp.eq.s32.totalorder %v258, %v334
      %vm531 = vcmp.eq.s32.totalorder %v255, %v337
      %vm532 = vcmp.eq.s32.totalorder %v256, %v337
      %vm533 = vcmp.eq.s32.totalorder %v257, %v337
      %vm534 = vcmp.eq.s32.totalorder %v258, %v337
      %vm535 = vcmp.eq.s32.totalorder %v255, %v340
      %vm536 = vcmp.eq.s32.totalorder %v256, %v340
      %vm537 = vcmp.eq.s32.totalorder %v257, %v340
      %vm538 = vcmp.eq.s32.totalorder %v258, %v340
      %vm539 = vcmp.eq.s32.totalorder %v255, %v343
      %vm540 = vcmp.eq.s32.totalorder %v256, %v343
      %vm541 = vcmp.eq.s32.totalorder %v257, %v343
      %vm542 = vcmp.eq.s32.totalorder %v258, %v343
      %vm543 = vcmp.eq.s32.totalorder %v255, %v346
      %vm544 = vcmp.eq.s32.totalorder %v256, %v346
      %vm545 = vcmp.eq.s32.totalorder %v257, %v346
      %vm546 = vcmp.eq.s32.totalorder %v258, %v346
      %vm547 = vcmp.eq.s32.totalorder %v255, %v349
      %vm548 = vcmp.eq.s32.totalorder %v256, %v349
      %vm549 = vcmp.eq.s32.totalorder %v257, %v349
      %vm550 = vcmp.eq.s32.totalorder %v258, %v349
      %vm551 = vcmp.eq.s32.totalorder %v255, %v352
      %vm552 = vcmp.eq.s32.totalorder %v256, %v352
      %vm553 = vcmp.eq.s32.totalorder %v257, %v352
      %vm554 = vcmp.eq.s32.totalorder %v258, %v352
      %vm555 = vcmp.eq.s32.totalorder %v255, %v355
      %vm556 = vcmp.eq.s32.totalorder %v256, %v355
      %vm557 = vcmp.eq.s32.totalorder %v257, %v355
      %vm558 = vcmp.eq.s32.totalorder %v258, %v355
      %vm559 = vcmp.eq.s32.totalorder %v255, %v358
      %vm560 = vcmp.eq.s32.totalorder %v256, %v358
      %vm561 = vcmp.eq.s32.totalorder %v257, %v358
      %vm562 = vcmp.eq.s32.totalorder %v258, %v358
      %vm563 = vcmp.eq.s32.totalorder %v255, %v361
      %vm564 = vcmp.eq.s32.totalorder %v256, %v361
      %vm565 = vcmp.eq.s32.totalorder %v257, %v361
      %vm566 = vcmp.eq.s32.totalorder %v258, %v361
      %vm567 = vcmp.eq.s32.totalorder %v255, %v364
      %vm568 = vcmp.eq.s32.totalorder %v256, %v364
      %vm569 = vcmp.eq.s32.totalorder %v257, %v364
      %vm570 = vcmp.eq.s32.totalorder %v258, %v364
      %vm571 = vcmp.eq.s32.totalorder %v255, %v367
      %vm572 = vcmp.eq.s32.totalorder %v256, %v367
      %vm573 = vcmp.eq.s32.totalorder %v257, %v367
      %vm574 = vcmp.eq.s32.totalorder %v258, %v367
      %vm575 = vcmp.eq.s32.totalorder %v255, %v370
      %vm576 = vcmp.eq.s32.totalorder %v256, %v370
      %vm577 = vcmp.eq.s32.totalorder %v257, %v370
      %vm578 = vcmp.eq.s32.totalorder %v258, %v370
      %vm579 = vcmp.eq.s32.totalorder %v255, %v373
      %vm580 = vcmp.eq.s32.totalorder %v256, %v373
      %vm581 = vcmp.eq.s32.totalorder %v257, %v373
      %vm582 = vcmp.eq.s32.totalorder %v258, %v373
      %vm583 = vcmp.eq.s32.totalorder %v255, %v376
      %vm584 = vcmp.eq.s32.totalorder %v256, %v376
      %vm585 = vcmp.eq.s32.totalorder %v257, %v376
      %vm586 = vcmp.eq.s32.totalorder %v258, %v376
      %vm587 = vcmp.eq.s32.totalorder %v255, %v379
      %vm588 = vcmp.eq.s32.totalorder %v256, %v379
      %vm589 = vcmp.eq.s32.totalorder %v257, %v379
      %vm590 = vcmp.eq.s32.totalorder %v258, %v379
      %vm591 = vcmp.eq.s32.totalorder %v255, %v382
      %vm592 = vcmp.eq.s32.totalorder %v256, %v382
      %vm593 = vcmp.eq.s32.totalorder %v257, %v382
      %vm594 = vcmp.eq.s32.totalorder %v258, %v382
      %vm595 = vcmp.eq.s32.totalorder %v255, %v385
      %vm596 = vcmp.eq.s32.totalorder %v256, %v385
      %vm597 = vcmp.eq.s32.totalorder %v257, %v385
      %vm598 = vcmp.eq.s32.totalorder %v258, %v385
      %vm599 = vcmp.eq.s32.totalorder %v255, %v388
      %vm600 = vcmp.eq.s32.totalorder %v256, %v388
      %vm601 = vcmp.eq.s32.totalorder %v257, %v388
      %vm602 = vcmp.eq.s32.totalorder %v258, %v388
      %vm603 = vcmp.eq.s32.totalorder %v255, %v391
      %vm604 = vcmp.eq.s32.totalorder %v256, %v391
      %vm605 = vcmp.eq.s32.totalorder %v257, %v391
      %vm606 = vcmp.eq.s32.totalorder %v258, %v391
      %vm607 = vcmp.eq.s32.totalorder %v255, %v394
      %vm608 = vcmp.eq.s32.totalorder %v256, %v394
      %vm609 = vcmp.eq.s32.totalorder %v257, %v394
      %vm610 = vcmp.eq.s32.totalorder %v258, %v394
      %vm611 = vcmp.eq.s32.totalorder %v255, %v397
      %vm612 = vcmp.eq.s32.totalorder %v256, %v397
      %vm613 = vcmp.eq.s32.totalorder %v257, %v397
      %vm614 = vcmp.eq.s32.totalorder %v258, %v397
      %vm615 = vcmp.eq.s32.totalorder %v255, %v400
      %vm616 = vcmp.eq.s32.totalorder %v256, %v400
      %vm617 = vcmp.eq.s32.totalorder %v257, %v400
      %vm618 = vcmp.eq.s32.totalorder %v258, %v400
      %vm619 = vcmp.eq.s32.totalorder %v255, %v403
      %vm620 = vcmp.eq.s32.totalorder %v256, %v403
      %vm621 = vcmp.eq.s32.totalorder %v257, %v403
      %vm622 = vcmp.eq.s32.totalorder %v258, %v403
      %vm623 = vcmp.eq.s32.totalorder %v255, %v406
      %vm624 = vcmp.eq.s32.totalorder %v256, %v406
      %vm625 = vcmp.eq.s32.totalorder %v257, %v406
      %vm626 = vcmp.eq.s32.totalorder %v258, %v406
      %vm627 = vcmp.eq.s32.totalorder %v255, %v409
      %vm628 = vcmp.eq.s32.totalorder %v256, %v409
      %vm629 = vcmp.eq.s32.totalorder %v257, %v409
      %vm630 = vcmp.eq.s32.totalorder %v258, %v409
      %vm631 = vcmp.eq.s32.totalorder %v255, %v412
      %vm632 = vcmp.eq.s32.totalorder %v256, %v412
      %vm633 = vcmp.eq.s32.totalorder %v257, %v412
      %vm634 = vcmp.eq.s32.totalorder %v258, %v412
      %vm635 = vcmp.eq.s32.totalorder %v255, %v415
      %vm636 = vcmp.eq.s32.totalorder %v256, %v415
      %vm637 = vcmp.eq.s32.totalorder %v257, %v415
      %vm638 = vcmp.eq.s32.totalorder %v258, %v415
      %vm639 = vcmp.eq.s32.totalorder %v255, %v418
      %vm640 = vcmp.eq.s32.totalorder %v256, %v418
      %vm641 = vcmp.eq.s32.totalorder %v257, %v418
      %vm642 = vcmp.eq.s32.totalorder %v258, %v418
      %vm643 = vcmp.eq.s32.totalorder %v255, %v421
      %vm644 = vcmp.eq.s32.totalorder %v256, %v421
      %vm645 = vcmp.eq.s32.totalorder %v257, %v421
      %vm646 = vcmp.eq.s32.totalorder %v258, %v421
      %vm647 = vcmp.eq.s32.totalorder %v255, %v424
      %vm648 = vcmp.eq.s32.totalorder %v256, %v424
      %vm649 = vcmp.eq.s32.totalorder %v257, %v424
      %vm650 = vcmp.eq.s32.totalorder %v258, %v424
      %vm651 = vcmp.eq.s32.totalorder %v255, %v427
      %vm652 = vcmp.eq.s32.totalorder %v256, %v427
      %vm653 = vcmp.eq.s32.totalorder %v257, %v427
      %vm654 = vcmp.eq.s32.totalorder %v258, %v427
      %vm655 = vcmp.eq.s32.totalorder %v255, %v430
      %vm656 = vcmp.eq.s32.totalorder %v256, %v430
      %vm657 = vcmp.eq.s32.totalorder %v257, %v430
      %vm658 = vcmp.eq.s32.totalorder %v258, %v430
      %vm659 = vcmp.eq.s32.totalorder %v255, %v433
      %vm660 = vcmp.eq.s32.totalorder %v256, %v433
      %vm661 = vcmp.eq.s32.totalorder %v257, %v433
      %vm662 = vcmp.eq.s32.totalorder %v258, %v433
      %vm663 = vcmp.eq.s32.totalorder %v255, %v436
      %vm664 = vcmp.eq.s32.totalorder %v256, %v436
      %vm665 = vcmp.eq.s32.totalorder %v257, %v436
      %vm666 = vcmp.eq.s32.totalorder %v258, %v436
      %vm667 = vcmp.eq.s32.totalorder %v255, %v439
      %vm668 = vcmp.eq.s32.totalorder %v256, %v439
      %vm669 = vcmp.eq.s32.totalorder %v257, %v439
      %vm670 = vcmp.eq.s32.totalorder %v258, %v439
      %vm671 = vcmp.eq.s32.totalorder %v255, %v442
      %vm672 = vcmp.eq.s32.totalorder %v256, %v442
      %vm673 = vcmp.eq.s32.totalorder %v257, %v442
      %vm674 = vcmp.eq.s32.totalorder %v258, %v442
      %vm675 = vcmp.eq.s32.totalorder %v255, %v445
      %vm676 = vcmp.eq.s32.totalorder %v256, %v445
      %vm677 = vcmp.eq.s32.totalorder %v257, %v445
      %vm678 = vcmp.eq.s32.totalorder %v258, %v445
      %vm679 = vcmp.eq.s32.totalorder %v255, %v448
      %vm680 = vcmp.eq.s32.totalorder %v256, %v448
      %vm681 = vcmp.eq.s32.totalorder %v257, %v448
      %vm682 = vcmp.eq.s32.totalorder %v258, %v448
      %vm683 = vcmp.eq.s32.totalorder %v255, %v451
      %vm684 = vcmp.eq.s32.totalorder %v256, %v451
      %vm685 = vcmp.eq.s32.totalorder %v257, %v451
      %vm686 = vcmp.eq.s32.totalorder %v258, %v451
      %vm687 = vcmp.eq.s32.totalorder %v255, %v454
      %vm688 = vcmp.eq.s32.totalorder %v256, %v454
      %vm689 = vcmp.eq.s32.totalorder %v257, %v454
      %vm690 = vcmp.eq.s32.totalorder %v258, %v454
      %vm691 = vcmp.eq.s32.totalorder %v255, %v457
      %vm692 = vcmp.eq.s32.totalorder %v256, %v457
      %vm693 = vcmp.eq.s32.totalorder %v257, %v457
      %vm694 = vcmp.eq.s32.totalorder %v258, %v457
      %vm695 = vcmp.eq.s32.totalorder %v255, %v460
      %vm696 = vcmp.eq.s32.totalorder %v256, %v460
      %vm697 = vcmp.eq.s32.totalorder %v257, %v460
      %vm698 = vcmp.eq.s32.totalorder %v258, %v460
      %vm699 = vcmp.eq.s32.totalorder %v255, %v463
      %vm700 = vcmp.eq.s32.totalorder %v256, %v463
      %vm701 = vcmp.eq.s32.totalorder %v257, %v463
      %vm702 = vcmp.eq.s32.totalorder %v258, %v463
      %vm703 = vcmp.eq.s32.totalorder %v255, %v466
      %vm704 = vcmp.eq.s32.totalorder %v256, %v466
      %vm705 = vcmp.eq.s32.totalorder %v257, %v466
      %vm706 = vcmp.eq.s32.totalorder %v258, %v466
      %vm707 = vcmp.eq.s32.totalorder %v255, %v469
      %vm708 = vcmp.eq.s32.totalorder %v256, %v469
      %vm709 = vcmp.eq.s32.totalorder %v257, %v469
      %vm710 = vcmp.eq.s32.totalorder %v258, %v469
      %vm711 = vcmp.eq.s32.totalorder %v255, %v472
      %vm712 = vcmp.eq.s32.totalorder %v256, %v472
      %vm713 = vcmp.eq.s32.totalorder %v257, %v472
      %vm714 = vcmp.eq.s32.totalorder %v258, %v472
      %vm715 = vcmp.eq.s32.totalorder %v255, %v475
      %vm716 = vcmp.eq.s32.totalorder %v256, %v475
      %vm717 = vcmp.eq.s32.totalorder %v257, %v475
      %vm718 = vcmp.eq.s32.totalorder %v258, %v475
      %vm719 = vcmp.eq.s32.totalorder %v255, %v478
      %vm720 = vcmp.eq.s32.totalorder %v256, %v478
      %vm721 = vcmp.eq.s32.totalorder %v257, %v478
      %vm722 = vcmp.eq.s32.totalorder %v258, %v478
      %vm723 = vcmp.eq.s32.totalorder %v255, %v481
      %vm724 = vcmp.eq.s32.totalorder %v256, %v481
      %vm725 = vcmp.eq.s32.totalorder %v257, %v481
      %vm726 = vcmp.eq.s32.totalorder %v258, %v481
      %vm727 = vcmp.eq.s32.totalorder %v255, %v484
      %vm728 = vcmp.eq.s32.totalorder %v256, %v484
      %vm729 = vcmp.eq.s32.totalorder %v257, %v484
      %vm730 = vcmp.eq.s32.totalorder %v258, %v484
      %vm731 = vcmp.eq.s32.totalorder %v255, %v487
      %vm732 = vcmp.eq.s32.totalorder %v256, %v487
      %vm733 = vcmp.eq.s32.totalorder %v257, %v487
      %vm734 = vcmp.eq.s32.totalorder %v258, %v487
      %vm735 = vcmp.eq.s32.totalorder %v255, %v490
      %vm736 = vcmp.eq.s32.totalorder %v256, %v490
      %vm737 = vcmp.eq.s32.totalorder %v257, %v490
      %vm738 = vcmp.eq.s32.totalorder %v258, %v490
      %vm739 = vcmp.eq.s32.totalorder %v255, %v493
      %vm740 = vcmp.eq.s32.totalorder %v256, %v493
      %vm741 = vcmp.eq.s32.totalorder %v257, %v493
      %vm742 = vcmp.eq.s32.totalorder %v258, %v493
      %vm743 = vcmp.eq.s32.totalorder %v255, %v496
      %vm744 = vcmp.eq.s32.totalorder %v256, %v496
      %vm745 = vcmp.eq.s32.totalorder %v257, %v496
      %vm746 = vcmp.eq.s32.totalorder %v258, %v496
      %vm747 = vcmp.eq.s32.totalorder %v255, %v499
      %vm748 = vcmp.eq.s32.totalorder %v256, %v499
      %vm749 = vcmp.eq.s32.totalorder %v257, %v499
      %vm750 = vcmp.eq.s32.totalorder %v258, %v499
      %vm751 = vcmp.eq.s32.totalorder %v255, %v502
      %vm752 = vcmp.eq.s32.totalorder %v256, %v502
      %vm753 = vcmp.eq.s32.totalorder %v257, %v502
      %vm754 = vcmp.eq.s32.totalorder %v258, %v502
      %vm755 = vcmp.eq.s32.totalorder %v255, %v505
      %vm756 = vcmp.eq.s32.totalorder %v256, %v505
      %vm757 = vcmp.eq.s32.totalorder %v257, %v505
      %vm758 = vcmp.eq.s32.totalorder %v258, %v505
      %vm759 = vcmp.eq.s32.totalorder %v255, %v508
      %vm760 = vcmp.eq.s32.totalorder %v256, %v508
      %vm761 = vcmp.eq.s32.totalorder %v257, %v508
      %vm762 = vcmp.eq.s32.totalorder %v258, %v508
      %vm763 = vcmp.eq.s32.totalorder %v255, %v511
      %vm764 = vcmp.eq.s32.totalorder %v256, %v511
      %vm765 = vcmp.eq.s32.totalorder %v257, %v511
      %vm766 = vcmp.eq.s32.totalorder %v258, %v511
      %vm767 = vcmp.eq.s32.totalorder %v255, %v514
      %vm768 = vcmp.eq.s32.totalorder %v256, %v514
      %vm769 = vcmp.eq.s32.totalorder %v257, %v514
      %vm770 = vcmp.eq.s32.totalorder %v258, %v514
      %v771 = vsel %vm515, 1, 0
      %v772 = vsel %vm516, 1, 0
      %v773 = vsel %vm517, 1, 0
      %v774 = vsel %vm518, 1, 0
      %v775 = vsel %vm519, 1, 0
      %v776 = vsel %vm520, 1, 0
      %v777 = vsel %vm521, 1, 0
      %v778 = vsel %vm522, 1, 0
      %v779 = vsel %vm523, 1, 0
      %v780 = vsel %vm524, 1, 0
      %v781 = vsel %vm525, 1, 0
      %v782 = vsel %vm526, 1, 0
      %v783 = vsel %vm527, 1, 0
      %v784 = vsel %vm528, 1, 0
      %v785 = vsel %vm529, 1, 0
      %v786 = vsel %vm530, 1, 0
      %v787 = vsel %vm531, 1, 0
      %v788 = vsel %vm532, 1, 0
      %v789 = vsel %vm533, 1, 0
      %v790 = vsel %vm534, 1, 0
      %v791 = vsel %vm535, 1, 0
      %v792 = vsel %vm536, 1, 0
      %v793 = vsel %vm537, 1, 0
      %v794 = vsel %vm538, 1, 0
      %v795 = vsel %vm539, 1, 0
      %v796 = vsel %vm540, 1, 0
      %v797 = vsel %vm541, 1, 0
      %v798 = vsel %vm542, 1, 0
      %v799 = vsel %vm543, 1, 0
      %v800 = vsel %vm544, 1, 0
      %v801 = vsel %vm545, 1, 0
      %v802 = vsel %vm546, 1, 0
      %v803 = vsel %vm547, 1, 0
      %v804 = vsel %vm548, 1, 0
      %v805 = vsel %vm549, 1, 0
      %v806 = vsel %vm550, 1, 0
      %v807 = vsel %vm551, 1, 0
      %v808 = vsel %vm552, 1, 0
      %v809 = vsel %vm553, 1, 0
      %v810 = vsel %vm554, 1, 0
      %v811 = vsel %vm555, 1, 0
      %v812 = vsel %vm556, 1, 0
      %v813 = vsel %vm557, 1, 0
      %v814 = vsel %vm558, 1, 0
      %v815 = vsel %vm559, 1, 0
      %v816 = vsel %vm560, 1, 0
      %v817 = vsel %vm561, 1, 0
      %v818 = vsel %vm562, 1, 0
      %v819 = vsel %vm563, 1, 0
      %v820 = vsel %vm564, 1, 0
      %v821 = vsel %vm565, 1, 0
      %v822 = vsel %vm566, 1, 0
      %v823 = vsel %vm567, 1, 0
      %v824 = vsel %vm568, 1, 0
      %v825 = vsel %vm569, 1, 0
      %v826 = vsel %vm570, 1, 0
      %v827 = vsel %vm571, 1, 0
      %v828 = vsel %vm572, 1, 0
      %v829 = vsel %vm573, 1, 0
      %v830 = vsel %vm574, 1, 0
      %v831 = vsel %vm575, 1, 0
      %v832 = vsel %vm576, 1, 0
      %v833 = vsel %vm577, 1, 0
      %v834 = vsel %vm578, 1, 0
      %v835 = vsel %vm579, 1, 0
      %v836 = vsel %vm580, 1, 0
      %v837 = vsel %vm581, 1, 0
      %v838 = vsel %vm582, 1, 0
      %v839 = vsel %vm583, 1, 0
      %v840 = vsel %vm584, 1, 0
      %v841 = vsel %vm585, 1, 0
      %v842 = vsel %vm586, 1, 0
      %v843 = vsel %vm587, 1, 0
      %v844 = vsel %vm588, 1, 0
      %v845 = vsel %vm589, 1, 0
      %v846 = vsel %vm590, 1, 0
      %v847 = vsel %vm591, 1, 0
      %v848 = vsel %vm592, 1, 0
      %v849 = vsel %vm593, 1, 0
      %v850 = vsel %vm594, 1, 0
      %v851 = vsel %vm595, 1, 0
      %v852 = vsel %vm596, 1, 0
      %v853 = vsel %vm597, 1, 0
      %v854 = vsel %vm598, 1, 0
      %v855 = vsel %vm599, 1, 0
      %v856 = vsel %vm600, 1, 0
      %v857 = vsel %vm601, 1, 0
      %v858 = vsel %vm602, 1, 0
      %v859 = vsel %vm603, 1, 0
      %v860 = vsel %vm604, 1, 0
      %v861 = vsel %vm605, 1, 0
      %v862 = vsel %vm606, 1, 0
      %v863 = vsel %vm607, 1, 0
      %v864 = vsel %vm608, 1, 0
      %v865 = vsel %vm609, 1, 0
      %v866 = vsel %vm610, 1, 0
      %v867 = vsel %vm611, 1, 0
      %v868 = vsel %vm612, 1, 0
      %v869 = vsel %vm613, 1, 0
      %v870 = vsel %vm614, 1, 0
      %v871 = vsel %vm615, 1, 0
      %v872 = vsel %vm616, 1, 0
      %v873 = vsel %vm617, 1, 0
      %v874 = vsel %vm618, 1, 0
      %v875 = vsel %vm619, 1, 0
      %v876 = vsel %vm620, 1, 0
      %v877 = vsel %vm621, 1, 0
      %v878 = vsel %vm622, 1, 0
      %v879 = vsel %vm623, 1, 0
      %v880 = vsel %vm624, 1, 0
      %v881 = vsel %vm625, 1, 0
      %v882 = vsel %vm626, 1, 0
      %v883 = vsel %vm627, 1, 0
      %v884 = vsel %vm628, 1, 0
      %v885 = vsel %vm629, 1, 0
      %v886 = vsel %vm630, 1, 0
      %v887 = vsel %vm631, 1, 0
      %v888 = vsel %vm632, 1, 0
      %v889 = vsel %vm633, 1, 0
      %v890 = vsel %vm634, 1, 0
      %v891 = vsel %vm635, 1, 0
      %v892 = vsel %vm636, 1, 0
      %v893 = vsel %vm637, 1, 0
      %v894 = vsel %vm638, 1, 0
      %v895 = vsel %vm639, 1, 0
      %v896 = vsel %vm640, 1, 0
      %v897 = vsel %vm641, 1, 0
      %v898 = vsel %vm642, 1, 0
      %v899 = vsel %vm643, 1, 0
      %v900 = vsel %vm644, 1, 0
      %v901 = vsel %vm645, 1, 0
      %v902 = vsel %vm646, 1, 0
      %v903 = vsel %vm647, 1, 0
      %v904 = vsel %vm648, 1, 0
      %v905 = vsel %vm649, 1, 0
      %v906 = vsel %vm650, 1, 0
      %v907 = vsel %vm651, 1, 0
      %v908 = vsel %vm652, 1, 0
      %v909 = vsel %vm653, 1, 0
      %v910 = vsel %vm654, 1, 0
      %v911 = vsel %vm655, 1, 0
      %v912 = vsel %vm656, 1, 0
      %v913 = vsel %vm657, 1, 0
      %v914 = vsel %vm658, 1, 0
      %v915 = vsel %vm659, 1, 0
      %v916 = vsel %vm660, 1, 0
      %v917 = vsel %vm661, 1, 0
      %v918 = vsel %vm662, 1, 0
      %v919 = vsel %vm663, 1, 0
      %v920 = vsel %vm664, 1, 0
      %v921 = vsel %vm665, 1, 0
      %v922 = vsel %vm666, 1, 0
      %v923 = vsel %vm667, 1, 0
      %v924 = vsel %vm668, 1, 0
      %v925 = vsel %vm669, 1, 0
      %v926 = vsel %vm670, 1, 0
      %v927 = vsel %vm671, 1, 0
      %v928 = vsel %vm672, 1, 0
      %v929 = vsel %vm673, 1, 0
      %v930 = vsel %vm674, 1, 0
      %v931 = vsel %vm675, 1, 0
      %v932 = vsel %vm676, 1, 0
      %v933 = vsel %vm677, 1, 0
      %v934 = vsel %vm678, 1, 0
      %v935 = vsel %vm679, 1, 0
      %v936 = vsel %vm680, 1, 0
      %v937 = vsel %vm681, 1, 0
      %v938 = vsel %vm682, 1, 0
      %v939 = vsel %vm683, 1, 0
      %v940 = vsel %vm684, 1, 0
      %v941 = vsel %vm685, 1, 0
      %v942 = vsel %vm686, 1, 0
      %v943 = vsel %vm687, 1, 0
      %v944 = vsel %vm688, 1, 0
      %v945 = vsel %vm689, 1, 0
      %v946 = vsel %vm690, 1, 0
      %v947 = vsel %vm691, 1, 0
      %v948 = vsel %vm692, 1, 0
      %v949 = vsel %vm693, 1, 0
      %v950 = vsel %vm694, 1, 0
      %v951 = vsel %vm695, 1, 0
      %v952 = vsel %vm696, 1, 0
      %v953 = vsel %vm697, 1, 0
      %v954 = vsel %vm698, 1, 0
      %v955 = vsel %vm699, 1, 0
      %v956 = vsel %vm700, 1, 0
      %v957 = vsel %vm701, 1, 0
      %v958 = vsel %vm702, 1, 0
      %v959 = vsel %vm703, 1, 0
      %v960 = vsel %vm704, 1, 0
      %v961 = vsel %vm705, 1, 0
      %v962 = vsel %vm706, 1, 0
      %v963 = vsel %vm707, 1, 0
      %v964 = vsel %vm708, 1, 0
      %v965 = vsel %vm709, 1, 0
      %v966 = vsel %vm710, 1, 0
      %v967 = vsel %vm711, 1, 0
      %v968 = vsel %vm712, 1, 0
      %v969 = vsel %vm713, 1, 0
      %v970 = vsel %vm714, 1, 0
      %v971 = vsel %vm715, 1, 0
      %v972 = vsel %vm716, 1, 0
      %v973 = vsel %vm717, 1, 0
      %v974 = vsel %vm718, 1, 0
      %v975 = vsel %vm719, 1, 0
      %v976 = vsel %vm720, 1, 0
      %v977 = vsel %vm721, 1, 0
      %v978 = vsel %vm722, 1, 0
      %v979 = vsel %vm723, 1, 0
      %v980 = vsel %vm724, 1, 0
      %v981 = vsel %vm725, 1, 0
      %v982 = vsel %vm726, 1, 0
      %v983 = vsel %vm727, 1, 0
      %v984 = vsel %vm728, 1, 0
      %v985 = vsel %vm729, 1, 0
      %v986 = vsel %vm730, 1, 0
      %v987 = vsel %vm731, 1, 0
      %v988 = vsel %vm732, 1, 0
      %v989 = vsel %vm733, 1, 0
      %v990 = vsel %vm734, 1, 0
      %v991 = vsel %vm735, 1, 0
      %v992 = vsel %vm736, 1, 0
      %v993 = vsel %vm737, 1, 0
      %v994 = vsel %vm738, 1, 0
      %v995 = vsel %vm739, 1, 0
      %v996 = vsel %vm740, 1, 0
      %v997 = vsel %vm741, 1, 0
      %v998 = vsel %vm742, 1, 0
      %v999 = vsel %vm743, 1, 0
      %v1000 = vsel %vm744, 1, 0
      %v1001 = vsel %vm745, 1, 0
      %v1002 = vsel %vm746, 1, 0
      %v1003 = vsel %vm747, 1, 0
      %v1004 = vsel %vm748, 1, 0
      %v1005 = vsel %vm749, 1, 0
      %v1006 = vsel %vm750, 1, 0
      %v1007 = vsel %vm751, 1, 0
      %v1008 = vsel %vm752, 1, 0
      %v1009 = vsel %vm753, 1, 0
      %v1010 = vsel %vm754, 1, 0
      %v1011 = vsel %vm755, 1, 0
      %v1012 = vsel %vm756, 1, 0
      %v1013 = vsel %vm757, 1, 0
      %v1014 = vsel %vm758, 1, 0
      %v1015 = vsel %vm759, 1, 0
      %v1016 = vsel %vm760, 1, 0
      %v1017 = vsel %vm761, 1, 0
      %v1018 = vsel %vm762, 1, 0
      %v1019 = vsel %vm763, 1, 0
      %v1020 = vsel %vm764, 1, 0
      %v1021 = vsel %vm765, 1, 0
      %v1022 = vsel %vm766, 1, 0
      %v1023 = vsel %vm767, 1, 0
      %v1024 = vsel %vm768, 1, 0
      %v1025 = vsel %vm769, 1, 0
      %v1026 = vsel %vm770, 1, 0
      %v1027 = vcvt.s32.f32 %v771
      %v1028 = vcvt.s32.f32 %v772
      %v1029 = vcvt.s32.f32 %v773
      %v1030 = vcvt.s32.f32 %v774
      %v1031 = vcvt.s32.f32 %v775
      %v1032 = vcvt.s32.f32 %v776
      %v1033 = vcvt.s32.f32 %v777
      %v1034 = vcvt.s32.f32 %v778
      %v1035 = vcvt.s32.f32 %v779
      %v1036 = vcvt.s32.f32 %v780
      %v1037 = vcvt.s32.f32 %v781
      %v1038 = vcvt.s32.f32 %v782
      %v1039 = vcvt.s32.f32 %v783
      %v1040 = vcvt.s32.f32 %v784
      %v1041 = vcvt.s32.f32 %v785
      %v1042 = vcvt.s32.f32 %v786
      %v1043 = vcvt.s32.f32 %v787
      %v1044 = vcvt.s32.f32 %v788
      %v1045 = vcvt.s32.f32 %v789
      %v1046 = vcvt.s32.f32 %v790
      %v1047 = vcvt.s32.f32 %v791
      %v1048 = vcvt.s32.f32 %v792
      %v1049 = vcvt.s32.f32 %v793
      %v1050 = vcvt.s32.f32 %v794
      %v1051 = vcvt.s32.f32 %v795
      %v1052 = vcvt.s32.f32 %v796
      %v1053 = vcvt.s32.f32 %v797
      %v1054 = vcvt.s32.f32 %v798
      %v1055 = vcvt.s32.f32 %v799
      %v1056 = vcvt.s32.f32 %v800
      %v1057 = vcvt.s32.f32 %v801
      %v1058 = vcvt.s32.f32 %v802
      %v1059 = vcvt.s32.f32 %v803
      %v1060 = vcvt.s32.f32 %v804
      %v1061 = vcvt.s32.f32 %v805
      %v1062 = vcvt.s32.f32 %v806
      %v1063 = vcvt.s32.f32 %v807
      %v1064 = vcvt.s32.f32 %v808
      %v1065 = vcvt.s32.f32 %v809
      %v1066 = vcvt.s32.f32 %v810
      %v1067 = vcvt.s32.f32 %v811
      %v1068 = vcvt.s32.f32 %v812
      %v1069 = vcvt.s32.f32 %v813
      %v1070 = vcvt.s32.f32 %v814
      %v1071 = vcvt.s32.f32 %v815
      %v1072 = vcvt.s32.f32 %v816
      %v1073 = vcvt.s32.f32 %v817
      %v1074 = vcvt.s32.f32 %v818
      %v1075 = vcvt.s32.f32 %v819
      %v1076 = vcvt.s32.f32 %v820
      %v1077 = vcvt.s32.f32 %v821
      %v1078 = vcvt.s32.f32 %v822
      %v1079 = vcvt.s32.f32 %v823
      %v1080 = vcvt.s32.f32 %v824
      %v1081 = vcvt.s32.f32 %v825
      %v1082 = vcvt.s32.f32 %v826
      %v1083 = vcvt.s32.f32 %v827
      %v1084 = vcvt.s32.f32 %v828
      %v1085 = vcvt.s32.f32 %v829
      %v1086 = vcvt.s32.f32 %v830
      %v1087 = vcvt.s32.f32 %v831
      %v1088 = vcvt.s32.f32 %v832
      %v1089 = vcvt.s32.f32 %v833
      %v1090 = vcvt.s32.f32 %v834
      %v1091 = vcvt.s32.f32 %v835
      %v1092 = vcvt.s32.f32 %v836
      %v1093 = vcvt.s32.f32 %v837
      %v1094 = vcvt.s32.f32 %v838
      %v1095 = vcvt.s32.f32 %v839
      %v1096 = vcvt.s32.f32 %v840
      %v1097 = vcvt.s32.f32 %v841
      %v1098 = vcvt.s32.f32 %v842
      %v1099 = vcvt.s32.f32 %v843
      %v1100 = vcvt.s32.f32 %v844
      %v1101 = vcvt.s32.f32 %v845
      %v1102 = vcvt.s32.f32 %v846
      %v1103 = vcvt.s32.f32 %v847
      %v1104 = vcvt.s32.f32 %v848
      %v1105 = vcvt.s32.f32 %v849
      %v1106 = vcvt.s32.f32 %v850
      %v1107 = vcvt.s32.f32 %v851
      %v1108 = vcvt.s32.f32 %v852
      %v1109 = vcvt.s32.f32 %v853
      %v1110 = vcvt.s32.f32 %v854
      %v1111 = vcvt.s32.f32 %v855
      %v1112 = vcvt.s32.f32 %v856
      %v1113 = vcvt.s32.f32 %v857
      %v1114 = vcvt.s32.f32 %v858
      %v1115 = vcvt.s32.f32 %v859
      %v1116 = vcvt.s32.f32 %v860
      %v1117 = vcvt.s32.f32 %v861
      %v1118 = vcvt.s32.f32 %v862
      %v1119 = vcvt.s32.f32 %v863
      %v1120 = vcvt.s32.f32 %v864
      %v1121 = vcvt.s32.f32 %v865
      %v1122 = vcvt.s32.f32 %v866
      %v1123 = vcvt.s32.f32 %v867
      %v1124 = vcvt.s32.f32 %v868
      %v1125 = vcvt.s32.f32 %v869
      %v1126 = vcvt.s32.f32 %v870
      %v1127 = vcvt.s32.f32 %v871
      %v1128 = vcvt.s32.f32 %v872
      %v1129 = vcvt.s32.f32 %v873
      %v1130 = vcvt.s32.f32 %v874
      %v1131 = vcvt.s32.f32 %v875
      %v1132 = vcvt.s32.f32 %v876
      %v1133 = vcvt.s32.f32 %v877
      %v1134 = vcvt.s32.f32 %v878
      %v1135 = vcvt.s32.f32 %v879
      %v1136 = vcvt.s32.f32 %v880
      %v1137 = vcvt.s32.f32 %v881
      %v1138 = vcvt.s32.f32 %v882
      %v1139 = vcvt.s32.f32 %v883
      %v1140 = vcvt.s32.f32 %v884
      %v1141 = vcvt.s32.f32 %v885
      %v1142 = vcvt.s32.f32 %v886
      %v1143 = vcvt.s32.f32 %v887
      %v1144 = vcvt.s32.f32 %v888
      %v1145 = vcvt.s32.f32 %v889
      %v1146 = vcvt.s32.f32 %v890
      %v1147 = vcvt.s32.f32 %v891
      %v1148 = vcvt.s32.f32 %v892
      %v1149 = vcvt.s32.f32 %v893
      %v1150 = vcvt.s32.f32 %v894
      %v1151 = vcvt.s32.f32 %v895
      %v1152 = vcvt.s32.f32 %v896
      %v1153 = vcvt.s32.f32 %v897
      %v1154 = vcvt.s32.f32 %v898
      %v1155 = vcvt.s32.f32 %v899
      %v1156 = vcvt.s32.f32 %v900
      %v1157 = vcvt.s32.f32 %v901
      %v1158 = vcvt.s32.f32 %v902
      %v1159 = vcvt.s32.f32 %v903
      %v1160 = vcvt.s32.f32 %v904
      %v1161 = vcvt.s32.f32 %v905
      %v1162 = vcvt.s32.f32 %v906
      %v1163 = vcvt.s32.f32 %v907
      %v1164 = vcvt.s32.f32 %v908
      %v1165 = vcvt.s32.f32 %v909
      %v1166 = vcvt.s32.f32 %v910
      %v1167 = vcvt.s32.f32 %v911
      %v1168 = vcvt.s32.f32 %v912
      %v1169 = vcvt.s32.f32 %v913
      %v1170 = vcvt.s32.f32 %v914
      %v1171 = vcvt.s32.f32 %v915
      %v1172 = vcvt.s32.f32 %v916
      %v1173 = vcvt.s32.f32 %v917
      %v1174 = vcvt.s32.f32 %v918
      %v1175 = vcvt.s32.f32 %v919
      %v1176 = vcvt.s32.f32 %v920
      %v1177 = vcvt.s32.f32 %v921
      %v1178 = vcvt.s32.f32 %v922
      %v1179 = vcvt.s32.f32 %v923
      %v1180 = vcvt.s32.f32 %v924
      %v1181 = vcvt.s32.f32 %v925
      %v1182 = vcvt.s32.f32 %v926
      %v1183 = vcvt.s32.f32 %v927
      %v1184 = vcvt.s32.f32 %v928
      %v1185 = vcvt.s32.f32 %v929
      %v1186 = vcvt.s32.f32 %v930
      %v1187 = vcvt.s32.f32 %v931
      %v1188 = vcvt.s32.f32 %v932
      %v1189 = vcvt.s32.f32 %v933
      %v1190 = vcvt.s32.f32 %v934
      %v1191 = vcvt.s32.f32 %v935
      %v1192 = vcvt.s32.f32 %v936
      %v1193 = vcvt.s32.f32 %v937
      %v1194 = vcvt.s32.f32 %v938
      %v1195 = vcvt.s32.f32 %v939
      %v1196 = vcvt.s32.f32 %v940
      %v1197 = vcvt.s32.f32 %v941
      %v1198 = vcvt.s32.f32 %v942
      %v1199 = vcvt.s32.f32 %v943
      %v1200 = vcvt.s32.f32 %v944
      %v1201 = vcvt.s32.f32 %v945
      %v1202 = vcvt.s32.f32 %v946
      %v1203 = vcvt.s32.f32 %v947
      %v1204 = vcvt.s32.f32 %v948
      %v1205 = vcvt.s32.f32 %v949
      %v1206 = vcvt.s32.f32 %v950
      %v1207 = vcvt.s32.f32 %v951
      %v1208 = vcvt.s32.f32 %v952
      %v1209 = vcvt.s32.f32 %v953
      %v1210 = vcvt.s32.f32 %v954
      %v1211 = vcvt.s32.f32 %v955
      %v1212 = vcvt.s32.f32 %v956
      %v1213 = vcvt.s32.f32 %v957
      %v1214 = vcvt.s32.f32 %v958
      %v1215 = vcvt.s32.f32 %v959
      %v1216 = vcvt.s32.f32 %v960
      %v1217 = vcvt.s32.f32 %v961
      %v1218 = vcvt.s32.f32 %v962
      %v1219 = vcvt.s32.f32 %v963
      %v1220 = vcvt.s32.f32 %v964
      %v1221 = vcvt.s32.f32 %v965
      %v1222 = vcvt.s32.f32 %v966
      %v1223 = vcvt.s32.f32 %v967
      %v1224 = vcvt.s32.f32 %v968
      %v1225 = vcvt.s32.f32 %v969
      %v1226 = vcvt.s32.f32 %v970
      %v1227 = vcvt.s32.f32 %v971
      %v1228 = vcvt.s32.f32 %v972
      %v1229 = vcvt.s32.f32 %v973
      %v1230 = vcvt.s32.f32 %v974
      %v1231 = vcvt.s32.f32 %v975
      %v1232 = vcvt.s32.f32 %v976
      %v1233 = vcvt.s32.f32 %v977
      %v1234 = vcvt.s32.f32 %v978
      %v1235 = vcvt.s32.f32 %v979
      %v1236 = vcvt.s32.f32 %v980
      %v1237 = vcvt.s32.f32 %v981
      %v1238 = vcvt.s32.f32 %v982
      %v1239 = vcvt.s32.f32 %v983
      %v1240 = vcvt.s32.f32 %v984
      %v1241 = vcvt.s32.f32 %v985
      %v1242 = vcvt.s32.f32 %v986
      %v1243 = vcvt.s32.f32 %v987
      %v1244 = vcvt.s32.f32 %v988
      %v1245 = vcvt.s32.f32 %v989
      %v1246 = vcvt.s32.f32 %v990
      %v1247 = vcvt.s32.f32 %v991
      %v1248 = vcvt.s32.f32 %v992
      %v1249 = vcvt.s32.f32 %v993
      %v1250 = vcvt.s32.f32 %v994
      %v1251 = vcvt.s32.f32 %v995
      %v1252 = vcvt.s32.f32 %v996
      %v1253 = vcvt.s32.f32 %v997
      %v1254 = vcvt.s32.f32 %v998
      %v1255 = vcvt.s32.f32 %v999
      %v1256 = vcvt.s32.f32 %v1000
      %v1257 = vcvt.s32.f32 %v1001
      %v1258 = vcvt.s32.f32 %v1002
      %v1259 = vcvt.s32.f32 %v1003
      %v1260 = vcvt.s32.f32 %v1004
      %v1261 = vcvt.s32.f32 %v1005
      %v1262 = vcvt.s32.f32 %v1006
      %v1263 = vcvt.s32.f32 %v1007
      %v1264 = vcvt.s32.f32 %v1008
      %v1265 = vcvt.s32.f32 %v1009
      %v1266 = vcvt.s32.f32 %v1010
      %v1267 = vcvt.s32.f32 %v1011
      %v1268 = vcvt.s32.f32 %v1012
      %v1269 = vcvt.s32.f32 %v1013
      %v1270 = vcvt.s32.f32 %v1014
      %v1271 = vcvt.s32.f32 %v1015
      %v1272 = vcvt.s32.f32 %v1016
      %v1273 = vcvt.s32.f32 %v1017
      %v1274 = vcvt.s32.f32 %v1018
      %v1275 = vcvt.s32.f32 %v1019
      %v1276 = vcvt.s32.f32 %v1020
      %v1277 = vcvt.s32.f32 %v1021
      %v1278 = vcvt.s32.f32 %v1022
      %v1279 = vcvt.s32.f32 %v1023
      %v1280 = vcvt.s32.f32 %v1024
      %v1281 = vcvt.s32.f32 %v1025
      %v1282 = vcvt.s32.f32 %v1026
      %v1283 = vpack.c.bf16 %v1031, %v1027
      %v1284 = vpack.c.bf16 %v1032, %v1028
      %v1285 = vpack.c.bf16 %v1033, %v1029
      %v1286 = vpack.c.bf16 %v1034, %v1030
      %v1287 = vpack.c.bf16 %v1039, %v1035
      %v1288 = vpack.c.bf16 %v1040, %v1036
      %v1289 = vpack.c.bf16 %v1041, %v1037
      %v1290 = vpack.c.bf16 %v1042, %v1038
      %v1291 = vpack.c.bf16 %v1047, %v1043
      %v1292 = vpack.c.bf16 %v1048, %v1044
      %v1293 = vpack.c.bf16 %v1049, %v1045
      %v1294 = vpack.c.bf16 %v1050, %v1046
      %v1295 = vpack.c.bf16 %v1055, %v1051
      %v1296 = vpack.c.bf16 %v1056, %v1052
      %v1297 = vpack.c.bf16 %v1057, %v1053
      %v1298 = vpack.c.bf16 %v1058, %v1054
      %v1299 = vpack.c.bf16 %v1063, %v1059
      %v1300 = vpack.c.bf16 %v1064, %v1060
      %v1301 = vpack.c.bf16 %v1065, %v1061
      %v1302 = vpack.c.bf16 %v1066, %v1062
      %v1303 = vpack.c.bf16 %v1071, %v1067
      %v1304 = vpack.c.bf16 %v1072, %v1068
      %v1305 = vpack.c.bf16 %v1073, %v1069
      %v1306 = vpack.c.bf16 %v1074, %v1070
      %v1307 = vpack.c.bf16 %v1079, %v1075
      %v1308 = vpack.c.bf16 %v1080, %v1076
      %v1309 = vpack.c.bf16 %v1081, %v1077
      %v1310 = vpack.c.bf16 %v1082, %v1078
      %v1311 = vpack.c.bf16 %v1087, %v1083
      %v1312 = vpack.c.bf16 %v1088, %v1084
      %v1313 = vpack.c.bf16 %v1089, %v1085
      %v1314 = vpack.c.bf16 %v1090, %v1086
      %v1315 = vpack.c.bf16 %v1095, %v1091
      %v1316 = vpack.c.bf16 %v1096, %v1092
      %v1317 = vpack.c.bf16 %v1097, %v1093
      %v1318 = vpack.c.bf16 %v1098, %v1094
      %v1319 = vpack.c.bf16 %v1103, %v1099
      %v1320 = vpack.c.bf16 %v1104, %v1100
      %v1321 = vpack.c.bf16 %v1105, %v1101
      %v1322 = vpack.c.bf16 %v1106, %v1102
      %v1323 = vpack.c.bf16 %v1111, %v1107
      %v1324 = vpack.c.bf16 %v1112, %v1108
      %v1325 = vpack.c.bf16 %v1113, %v1109
      %v1326 = vpack.c.bf16 %v1114, %v1110
      %v1327 = vpack.c.bf16 %v1119, %v1115
      %v1328 = vpack.c.bf16 %v1120, %v1116
      %v1329 = vpack.c.bf16 %v1121, %v1117
      %v1330 = vpack.c.bf16 %v1122, %v1118
      %v1331 = vpack.c.bf16 %v1127, %v1123
      %v1332 = vpack.c.bf16 %v1128, %v1124
      %v1333 = vpack.c.bf16 %v1129, %v1125
      %v1334 = vpack.c.bf16 %v1130, %v1126
      %v1335 = vpack.c.bf16 %v1135, %v1131
      %v1336 = vpack.c.bf16 %v1136, %v1132
      %v1337 = vpack.c.bf16 %v1137, %v1133
      %v1338 = vpack.c.bf16 %v1138, %v1134
      %v1339 = vpack.c.bf16 %v1143, %v1139
      %v1340 = vpack.c.bf16 %v1144, %v1140
      %v1341 = vpack.c.bf16 %v1145, %v1141
      %v1342 = vpack.c.bf16 %v1146, %v1142
      %v1343 = vpack.c.bf16 %v1151, %v1147
      %v1344 = vpack.c.bf16 %v1152, %v1148
      %v1345 = vpack.c.bf16 %v1153, %v1149
      %v1346 = vpack.c.bf16 %v1154, %v1150
      %v1347 = vpack.c.bf16 %v1159, %v1155
      %v1348 = vpack.c.bf16 %v1160, %v1156
      %v1349 = vpack.c.bf16 %v1161, %v1157
      %v1350 = vpack.c.bf16 %v1162, %v1158
      %v1351 = vpack.c.bf16 %v1167, %v1163
      %v1352 = vpack.c.bf16 %v1168, %v1164
      %v1353 = vpack.c.bf16 %v1169, %v1165
      %v1354 = vpack.c.bf16 %v1170, %v1166
      %v1355 = vpack.c.bf16 %v1175, %v1171
      %v1356 = vpack.c.bf16 %v1176, %v1172
      %v1357 = vpack.c.bf16 %v1177, %v1173
      %v1358 = vpack.c.bf16 %v1178, %v1174
      %v1359 = vpack.c.bf16 %v1183, %v1179
      %v1360 = vpack.c.bf16 %v1184, %v1180
      %v1361 = vpack.c.bf16 %v1185, %v1181
      %v1362 = vpack.c.bf16 %v1186, %v1182
      %v1363 = vpack.c.bf16 %v1191, %v1187
      %v1364 = vpack.c.bf16 %v1192, %v1188
      %v1365 = vpack.c.bf16 %v1193, %v1189
      %v1366 = vpack.c.bf16 %v1194, %v1190
      %v1367 = vpack.c.bf16 %v1199, %v1195
      %v1368 = vpack.c.bf16 %v1200, %v1196
      %v1369 = vpack.c.bf16 %v1201, %v1197
      %v1370 = vpack.c.bf16 %v1202, %v1198
      %v1371 = vpack.c.bf16 %v1207, %v1203
      %v1372 = vpack.c.bf16 %v1208, %v1204
      %v1373 = vpack.c.bf16 %v1209, %v1205
      %v1374 = vpack.c.bf16 %v1210, %v1206
      %v1375 = vpack.c.bf16 %v1215, %v1211
      %v1376 = vpack.c.bf16 %v1216, %v1212
      %v1377 = vpack.c.bf16 %v1217, %v1213
      %v1378 = vpack.c.bf16 %v1218, %v1214
      %v1379 = vpack.c.bf16 %v1223, %v1219
      %v1380 = vpack.c.bf16 %v1224, %v1220
      %v1381 = vpack.c.bf16 %v1225, %v1221
      %v1382 = vpack.c.bf16 %v1226, %v1222
      %v1383 = vpack.c.bf16 %v1231, %v1227
      %v1384 = vpack.c.bf16 %v1232, %v1228
      %v1385 = vpack.c.bf16 %v1233, %v1229
      %v1386 = vpack.c.bf16 %v1234, %v1230
      %v1387 = vpack.c.bf16 %v1239, %v1235
      %v1388 = vpack.c.bf16 %v1240, %v1236
      %v1389 = vpack.c.bf16 %v1241, %v1237
      %v1390 = vpack.c.bf16 %v1242, %v1238
      %v1391 = vpack.c.bf16 %v1247, %v1243
      %v1392 = vpack.c.bf16 %v1248, %v1244
      %v1393 = vpack.c.bf16 %v1249, %v1245
      %v1394 = vpack.c.bf16 %v1250, %v1246
      %v1395 = vpack.c.bf16 %v1255, %v1251
      %v1396 = vpack.c.bf16 %v1256, %v1252
      %v1397 = vpack.c.bf16 %v1257, %v1253
      %v1398 = vpack.c.bf16 %v1258, %v1254
      %v1399 = vpack.c.bf16 %v1263, %v1259
      %v1400 = vpack.c.bf16 %v1264, %v1260
      %v1401 = vpack.c.bf16 %v1265, %v1261
      %v1402 = vpack.c.bf16 %v1266, %v1262
      %v1403 = vpack.c.bf16 %v1271, %v1267
      %v1404 = vpack.c.bf16 %v1272, %v1268
      %v1405 = vpack.c.bf16 %v1273, %v1269
      %v1406 = vpack.c.bf16 %v1274, %v1270
      %v1407 = vpack.c.bf16 %v1279, %v1275
      %v1408 = vpack.c.bf16 %v1280, %v1276
      %v1409 = vpack.c.bf16 %v1281, %v1277
      %v1410 = vpack.c.bf16 %v1282, %v1278
      %v1411 = vld [vmem:[%s1] sm:$0xff]
      %v1412 = vld [vmem:[%s1 + $0x8] sm:$0xff]
      %v1413 = vld [vmem:[%s1 + $0x10] sm:$0xff]
      %v1414 = vld [vmem:[%s1 + $0x18] sm:$0xff]
      %v1415 = vld [vmem:[%s1 + $0x20] sm:$0xff]
      %v1416 = vld [vmem:[%s1 + $0x28] sm:$0xff]
      %v1417 = vld [vmem:[%s1 + $0x30] sm:$0xff]
      %v1418 = vld [vmem:[%s1 + $0x38] sm:$0xff]
      %v1419 = vld [vmem:[%s1 + $0x40] sm:$0xff]
      %v1420 = vld [vmem:[%s1 + $0x48] sm:$0xff]
      %v1421 = vld [vmem:[%s1 + $0x50] sm:$0xff]
      %v1422 = vld [vmem:[%s1 + $0x58] sm:$0xff]
      %v1423 = vld [vmem:[%s1 + $0x60] sm:$0xff]
      %v1424 = vld [vmem:[%s1 + $0x68] sm:$0xff]
      %v1425 = vld [vmem:[%s1 + $0x70] sm:$0xff]
      %v1426 = vld [vmem:[%s1 + $0x78] sm:$0xff]
      %v1427 = vld [vmem:[%s1 + $0x80] sm:$0xff]
      %v1428 = vld [vmem:[%s1 + $0x88] sm:$0xff]
      %v1429 = vld [vmem:[%s1 + $0x90] sm:$0xff]
      %v1430 = vld [vmem:[%s1 + $0x98] sm:$0xff]
      %v1431 = vld [vmem:[%s1 + $0xa0] sm:$0xff]
      %v1432 = vld [vmem:[%s1 + $0xa8] sm:$0xff]
      %v1433 = vld [vmem:[%s1 + $0xb0] sm:$0xff]
      %v1434 = vld [vmem:[%s1 + $0xb8] sm:$0xff]
      %v1435 = vld [vmem:[%s1 + $0xc0] sm:$0xff]
      %v1436 = vld [vmem:[%s1 + $0xc8] sm:$0xff]
      %v1437 = vld [vmem:[%s1 + $0xd0] sm:$0xff]
      %v1438 = vld [vmem:[%s1 + $0xd8] sm:$0xff]
      %v1439 = vld [vmem:[%s1 + $0xe0] sm:$0xff]
      %v1440 = vld [vmem:[%s1 + $0xe8] sm:$0xff]
      %v1441 = vld [vmem:[%s1 + $0xf0] sm:$0xff]
      %v1442 = vld [vmem:[%s1 + $0xf8] sm:$0xff]
      %v1443 = vld [vmem:[%s1 + $0x100] sm:$0xff]
      %v1444 = vld [vmem:[%s1 + $0x108] sm:$0xff]
      %v1445 = vld [vmem:[%s1 + $0x110] sm:$0xff]
      %v1446 = vld [vmem:[%s1 + $0x118] sm:$0xff]
      %v1447 = vld [vmem:[%s1 + $0x120] sm:$0xff]
      %v1448 = vld [vmem:[%s1 + $0x128] sm:$0xff]
      %v1449 = vld [vmem:[%s1 + $0x130] sm:$0xff]
      %v1450 = vld [vmem:[%s1 + $0x138] sm:$0xff]
      %v1451 = vld [vmem:[%s1 + $0x140] sm:$0xff]
      %v1452 = vld [vmem:[%s1 + $0x148] sm:$0xff]
      %v1453 = vld [vmem:[%s1 + $0x150] sm:$0xff]
      %v1454 = vld [vmem:[%s1 + $0x158] sm:$0xff]
      %v1455 = vld [vmem:[%s1 + $0x160] sm:$0xff]
      %v1456 = vld [vmem:[%s1 + $0x168] sm:$0xff]
      %v1457 = vld [vmem:[%s1 + $0x170] sm:$0xff]
      %v1458 = vld [vmem:[%s1 + $0x178] sm:$0xff]
      %v1459 = vld [vmem:[%s1 + $0x180] sm:$0xff]
      %v1460 = vld [vmem:[%s1 + $0x188] sm:$0xff]
      %v1461 = vld [vmem:[%s1 + $0x190] sm:$0xff]
      %v1462 = vld [vmem:[%s1 + $0x198] sm:$0xff]
      %v1463 = vld [vmem:[%s1 + $0x1a0] sm:$0xff]
      %v1464 = vld [vmem:[%s1 + $0x1a8] sm:$0xff]
      %v1465 = vld [vmem:[%s1 + $0x1b0] sm:$0xff]
      %v1466 = vld [vmem:[%s1 + $0x1b8] sm:$0xff]
      %v1467 = vld [vmem:[%s1 + $0x1c0] sm:$0xff]
      %v1468 = vld [vmem:[%s1 + $0x1c8] sm:$0xff]
      %v1469 = vld [vmem:[%s1 + $0x1d0] sm:$0xff]
      %v1470 = vld [vmem:[%s1 + $0x1d8] sm:$0xff]
      %v1471 = vld [vmem:[%s1 + $0x1e0] sm:$0xff]
      %v1472 = vld [vmem:[%s1 + $0x1e8] sm:$0xff]
      %v1473 = vld [vmem:[%s1 + $0x1f0] sm:$0xff]
      %v1474 = vld [vmem:[%s1 + $0x1f8] sm:$0xff]
      %v1539 = vunpack.c.l.b16 %v1411
      %v1540 = vunpack.c.h.b16 %v1411
      %v1541 = vunpack.c.l.b16 %v1412
      %v1542 = vunpack.c.h.b16 %v1412
      %v1543 = vunpack.c.l.b16 %v1413
      %v1544 = vunpack.c.h.b16 %v1413
      %v1545 = vunpack.c.l.b16 %v1414
      %v1546 = vunpack.c.h.b16 %v1414
      %v1547 = vunpack.c.l.b16 %v1415
      %v1548 = vunpack.c.h.b16 %v1415
      %v1549 = vunpack.c.l.b16 %v1416
      %v1550 = vunpack.c.h.b16 %v1416
      %v1551 = vunpack.c.l.b16 %v1417
      %v1552 = vunpack.c.h.b16 %v1417
      %v1553 = vunpack.c.l.b16 %v1418
      %v1554 = vunpack.c.h.b16 %v1418
      %v1555 = vunpack.c.l.b16 %v1419
      %v1556 = vunpack.c.h.b16 %v1419
      %v1557 = vunpack.c.l.b16 %v1420
      %v1558 = vunpack.c.h.b16 %v1420
      %v1559 = vunpack.c.l.b16 %v1421
      %v1560 = vunpack.c.h.b16 %v1421
      %v1561 = vunpack.c.l.b16 %v1422
      %v1562 = vunpack.c.h.b16 %v1422
      %v1563 = vunpack.c.l.b16 %v1423
      %v1564 = vunpack.c.h.b16 %v1423
      %v1565 = vunpack.c.l.b16 %v1424
      %v1566 = vunpack.c.h.b16 %v1424
      %v1567 = vunpack.c.l.b16 %v1425
      %v1568 = vunpack.c.h.b16 %v1425
      %v1569 = vunpack.c.l.b16 %v1426
      %v1570 = vunpack.c.h.b16 %v1426
      %v1571 = vunpack.c.l.b16 %v1427
      %v1572 = vunpack.c.h.b16 %v1427
      %v1573 = vunpack.c.l.b16 %v1428
      %v1574 = vunpack.c.h.b16 %v1428
      %v1575 = vunpack.c.l.b16 %v1429
      %v1576 = vunpack.c.h.b16 %v1429
      %v1577 = vunpack.c.l.b16 %v1430
      %v1578 = vunpack.c.h.b16 %v1430
      %v1579 = vunpack.c.l.b16 %v1431
      %v1580 = vunpack.c.h.b16 %v1431
      %v1581 = vunpack.c.l.b16 %v1432
      %v1582 = vunpack.c.h.b16 %v1432
      %v1583 = vunpack.c.l.b16 %v1433
      %v1584 = vunpack.c.h.b16 %v1433
      %v1585 = vunpack.c.l.b16 %v1434
      %v1586 = vunpack.c.h.b16 %v1434
      %v1587 = vunpack.c.l.b16 %v1435
      %v1588 = vunpack.c.h.b16 %v1435
      %v1589 = vunpack.c.l.b16 %v1436
      %v1590 = vunpack.c.h.b16 %v1436
      %v1591 = vunpack.c.l.b16 %v1437
      %v1592 = vunpack.c.h.b16 %v1437
      %v1593 = vunpack.c.l.b16 %v1438
      %v1594 = vunpack.c.h.b16 %v1438
      %v1595 = vunpack.c.l.b16 %v1439
      %v1596 = vunpack.c.h.b16 %v1439
      %v1597 = vunpack.c.l.b16 %v1440
      %v1598 = vunpack.c.h.b16 %v1440
      %v1599 = vunpack.c.l.b16 %v1441
      %v1600 = vunpack.c.h.b16 %v1441
      %v1601 = vunpack.c.l.b16 %v1442
      %v1602 = vunpack.c.h.b16 %v1442
      %v1603 = vunpack.c.l.b16 %v1443
      %v1604 = vunpack.c.h.b16 %v1443
      %v1605 = vunpack.c.l.b16 %v1444
      %v1606 = vunpack.c.h.b16 %v1444
      %v1607 = vunpack.c.l.b16 %v1445
      %v1608 = vunpack.c.h.b16 %v1445
      %v1609 = vunpack.c.l.b16 %v1446
      %v1610 = vunpack.c.h.b16 %v1446
      %v1611 = vunpack.c.l.b16 %v1447
      %v1612 = vunpack.c.h.b16 %v1447
      %v1613 = vunpack.c.l.b16 %v1448
      %v1614 = vunpack.c.h.b16 %v1448
      %v1615 = vunpack.c.l.b16 %v1449
      %v1616 = vunpack.c.h.b16 %v1449
      %v1617 = vunpack.c.l.b16 %v1450
      %v1618 = vunpack.c.h.b16 %v1450
      %v1619 = vunpack.c.l.b16 %v1451
      %v1620 = vunpack.c.h.b16 %v1451
      %v1621 = vunpack.c.l.b16 %v1452
      %v1622 = vunpack.c.h.b16 %v1452
      %v1623 = vunpack.c.l.b16 %v1453
      %v1624 = vunpack.c.h.b16 %v1453
      %v1625 = vunpack.c.l.b16 %v1454
      %v1626 = vunpack.c.h.b16 %v1454
      %v1627 = vunpack.c.l.b16 %v1455
      %v1628 = vunpack.c.h.b16 %v1455
      %v1629 = vunpack.c.l.b16 %v1456
      %v1630 = vunpack.c.h.b16 %v1456
      %v1631 = vunpack.c.l.b16 %v1457
      %v1632 = vunpack.c.h.b16 %v1457
      %v1633 = vunpack.c.l.b16 %v1458
      %v1634 = vunpack.c.h.b16 %v1458
      %v1635 = vunpack.c.l.b16 %v1459
      %v1636 = vunpack.c.h.b16 %v1459
      %v1637 = vunpack.c.l.b16 %v1460
      %v1638 = vunpack.c.h.b16 %v1460
      %v1639 = vunpack.c.l.b16 %v1461
      %v1640 = vunpack.c.h.b16 %v1461
      %v1641 = vunpack.c.l.b16 %v1462
      %v1642 = vunpack.c.h.b16 %v1462
      %v1643 = vunpack.c.l.b16 %v1463
      %v1644 = vunpack.c.h.b16 %v1463
      %v1645 = vunpack.c.l.b16 %v1464
      %v1646 = vunpack.c.h.b16 %v1464
      %v1647 = vunpack.c.l.b16 %v1465
      %v1648 = vunpack.c.h.b16 %v1465
      %v1649 = vunpack.c.l.b16 %v1466
      %v1650 = vunpack.c.h.b16 %v1466
      %v1651 = vunpack.c.l.b16 %v1467
      %v1652 = vunpack.c.h.b16 %v1467
      %v1653 = vunpack.c.l.b16 %v1468
      %v1654 = vunpack.c.h.b16 %v1468
      %v1655 = vunpack.c.l.b16 %v1469
      %v1656 = vunpack.c.h.b16 %v1469
      %v1657 = vunpack.c.l.b16 %v1470
      %v1658 = vunpack.c.h.b16 %v1470
      %v1659 = vunpack.c.l.b16 %v1471
      %v1660 = vunpack.c.h.b16 %v1471
      %v1661 = vunpack.c.l.b16 %v1472
      %v1662 = vunpack.c.h.b16 %v1472
      %v1663 = vunpack.c.l.b16 %v1473
      %v1664 = vunpack.c.h.b16 %v1473
      %v1665 = vunpack.c.l.b16 %v1474
      %v1666 = vunpack.c.h.b16 %v1474
      %v1667 = vpack.c.b16 %v1541, %v1539
      %v1668 = vpack.c.b16 %v1542, %v1540
      %v1669 = vpack.c.b16 %v1545, %v1543
      %v1670 = vpack.c.b16 %v1546, %v1544
      %v1671 = vpack.c.b16 %v1549, %v1547
      %v1672 = vpack.c.b16 %v1550, %v1548
      %v1673 = vpack.c.b16 %v1553, %v1551
      %v1674 = vpack.c.b16 %v1554, %v1552
      %v1675 = vpack.c.b16 %v1557, %v1555
      %v1676 = vpack.c.b16 %v1558, %v1556
      %v1677 = vpack.c.b16 %v1561, %v1559
      %v1678 = vpack.c.b16 %v1562, %v1560
      %v1679 = vpack.c.b16 %v1565, %v1563
      %v1680 = vpack.c.b16 %v1566, %v1564
      %v1681 = vpack.c.b16 %v1569, %v1567
      %v1682 = vpack.c.b16 %v1570, %v1568
      %v1683 = vpack.c.b16 %v1573, %v1571
      %v1684 = vpack.c.b16 %v1574, %v1572
      %v1685 = vpack.c.b16 %v1577, %v1575
      %v1686 = vpack.c.b16 %v1578, %v1576
      %v1687 = vpack.c.b16 %v1581, %v1579
      %v1688 = vpack.c.b16 %v1582, %v1580
      %v1689 = vpack.c.b16 %v1585, %v1583
      %v1690 = vpack.c.b16 %v1586, %v1584
      %v1691 = vpack.c.b16 %v1589, %v1587
      %v1692 = vpack.c.b16 %v1590, %v1588
      %v1693 = vpack.c.b16 %v1593, %v1591
      %v1694 = vpack.c.b16 %v1594, %v1592
      %v1695 = vpack.c.b16 %v1597, %v1595
      %v1696 = vpack.c.b16 %v1598, %v1596
      %v1697 = vpack.c.b16 %v1601, %v1599
      %v1698 = vpack.c.b16 %v1602, %v1600
      %v1699 = vpack.c.b16 %v1605, %v1603
      %v1700 = vpack.c.b16 %v1606, %v1604
      %v1701 = vpack.c.b16 %v1609, %v1607
      %v1702 = vpack.c.b16 %v1610, %v1608
      %v1703 = vpack.c.b16 %v1613, %v1611
      %v1704 = vpack.c.b16 %v1614, %v1612
      %v1705 = vpack.c.b16 %v1617, %v1615
      %v1706 = vpack.c.b16 %v1618, %v1616
      %v1707 = vpack.c.b16 %v1621, %v1619
      %v1708 = vpack.c.b16 %v1622, %v1620
      %v1709 = vpack.c.b16 %v1625, %v1623
      %v1710 = vpack.c.b16 %v1626, %v1624
      %v1711 = vpack.c.b16 %v1629, %v1627
      %v1712 = vpack.c.b16 %v1630, %v1628
      %v1713 = vpack.c.b16 %v1633, %v1631
      %v1714 = vpack.c.b16 %v1634, %v1632
      %v1715 = vpack.c.b16 %v1637, %v1635
      %v1716 = vpack.c.b16 %v1638, %v1636
      %v1717 = vpack.c.b16 %v1641, %v1639
      %v1718 = vpack.c.b16 %v1642, %v1640
      %v1719 = vpack.c.b16 %v1645, %v1643
      %v1720 = vpack.c.b16 %v1646, %v1644
      %v1721 = vpack.c.b16 %v1649, %v1647
      %v1722 = vpack.c.b16 %v1650, %v1648
      %v1723 = vpack.c.b16 %v1653, %v1651
      %v1724 = vpack.c.b16 %v1654, %v1652
      %v1725 = vpack.c.b16 %v1657, %v1655
      %v1726 = vpack.c.b16 %v1658, %v1656
      %v1727 = vpack.c.b16 %v1661, %v1659
      %v1728 = vpack.c.b16 %v1662, %v1660
      %v1729 = vpack.c.b16 %v1665, %v1663
      %v1730 = vpack.c.b16 %v1666, %v1664
      %1795 = vmatprep.subr.bf16.mxu0 %v1682
      %1796 = vmatpush1.bf16.msra.mxu0 %v1681
      %1797 = vmatprep.subr.bf16.mxu0 %v1680
      %1798 = vmatpush1.bf16.msra.mxu0 %v1679
      %1799 = vmatprep.subr.bf16.mxu0 %v1678
      %1800 = vmatpush1.bf16.msra.mxu0 %v1677
      %1801 = vmatprep.subr.bf16.mxu0 %v1676
      %1802 = vmatpush1.bf16.msra.mxu0 %v1675
      %1803 = vmatprep.subr.bf16.mxu0 %v1674
      %1804 = vmatpush1.bf16.msra.mxu0 %v1673
      %1805 = vmatprep.subr.bf16.mxu0 %v1672
      %1806 = vmatpush1.bf16.msra.mxu0 %v1671
      %1807 = vmatprep.subr.bf16.mxu0 %v1670
      %1808 = vmatpush1.bf16.msra.mxu0 %v1669
      %1809 = vmatprep.subr.bf16.mxu0 %v1668
      %1810 = vmatpush1.bf16.msra.mxu0 %v1667
      %1811 = vmatprep.subr.bf16.mxu0 %v1698
      %1812 = vmatpush2.bf16.msra.mxu0 %v1697
      %1813 = vmatprep.subr.bf16.mxu0 %v1696
      %1814 = vmatpush2.bf16.msra.mxu0 %v1695
      %1815 = vmatprep.subr.bf16.mxu0 %v1694
      %1816 = vmatpush2.bf16.msra.mxu0 %v1693
      %1817 = vmatprep.subr.bf16.mxu0 %v1692
      %1818 = vmatpush2.bf16.msra.mxu0 %v1691
      %1819 = vmatprep.subr.bf16.mxu0 %v1690
      %1820 = vmatpush2.bf16.msra.mxu0 %v1689
      %1821 = vmatprep.subr.bf16.mxu0 %v1688
      %1822 = vmatpush2.bf16.msra.mxu0 %v1687
      %1823 = vmatprep.subr.bf16.mxu0 %v1686
      %1824 = vmatpush2.bf16.msra.mxu0 %v1685
      %1825 = vmatprep.subr.bf16.mxu0 %v1684
      %1826 = vmatpush2.bf16.msra.mxu0 %v1683
      %1827 = vmatprep.mubr.bf16.mxu0 %v1284
      %1828 = vmatmul.mubr.bf16.gmra.mxu0 %v1283
      %v1829 = vpop.f32.mrf.mxu0
      %v1830 = vadd.f32 0.0, %v1829
      %v1831 = vpop.f32.mrf.mxu0
      %v1832 = vadd.f32 0.0, %v1831
      %v1833 = vpop.f32.mrf.mxu0
      %v1834 = vadd.f32 0.0, %v1833
      %v1835 = vpop.f32.mrf.mxu0
      %v1836 = vadd.f32 0.0, %v1835
      %1837 = vmatprep.mubr.bf16.mxu0 %v1288
      %1838 = vmatmul.mubr.bf16.gmra.mxu0 %v1287
      %v1839 = vpop.f32.mrf.mxu0
      %v1840 = vadd.f32 0.0, %v1839
      %v1841 = vpop.f32.mrf.mxu0
      %v1842 = vadd.f32 0.0, %v1841
      %v1843 = vpop.f32.mrf.mxu0
      %v1844 = vadd.f32 0.0, %v1843
      %v1845 = vpop.f32.mrf.mxu0
      %v1846 = vadd.f32 0.0, %v1845
      %1847 = vmatprep.mubr.bf16.mxu0 %v1292
      %1848 = vmatmul.mubr.bf16.gmra.mxu0 %v1291
      %v1849 = vpop.f32.mrf.mxu0
      %v1850 = vadd.f32 0.0, %v1849
      %v1851 = vpop.f32.mrf.mxu0
      %v1852 = vadd.f32 0.0, %v1851
      %v1853 = vpop.f32.mrf.mxu0
      %v1854 = vadd.f32 0.0, %v1853
      %v1855 = vpop.f32.mrf.mxu0
      %v1856 = vadd.f32 0.0, %v1855
      %1857 = vmatprep.mubr.bf16.mxu0 %v1296
      %1858 = vmatmul.mubr.bf16.gmra.mxu0 %v1295
      %v1859 = vpop.f32.mrf.mxu0
      %v1860 = vadd.f32 0.0, %v1859
      %v1861 = vpop.f32.mrf.mxu0
      %v1862 = vadd.f32 0.0, %v1861
      %v1863 = vpop.f32.mrf.mxu0
      %v1864 = vadd.f32 0.0, %v1863
      %v1865 = vpop.f32.mrf.mxu0
      %v1866 = vadd.f32 0.0, %v1865
      %1867 = vmatprep.mubr.bf16.mxu0 %v1300
      %1868 = vmatmul.mubr.bf16.gmra.mxu0 %v1299
      %v1869 = vpop.f32.mrf.mxu0
      %v1870 = vadd.f32 0.0, %v1869
      %v1871 = vpop.f32.mrf.mxu0
      %v1872 = vadd.f32 0.0, %v1871
      %v1873 = vpop.f32.mrf.mxu0
      %v1874 = vadd.f32 0.0, %v1873
      %v1875 = vpop.f32.mrf.mxu0
      %v1876 = vadd.f32 0.0, %v1875
      %1877 = vmatprep.mubr.bf16.mxu0 %v1304
      %1878 = vmatmul.mubr.bf16.gmra.mxu0 %v1303
      %v1879 = vpop.f32.mrf.mxu0
      %v1880 = vadd.f32 0.0, %v1879
      %v1881 = vpop.f32.mrf.mxu0
      %v1882 = vadd.f32 0.0, %v1881
      %v1883 = vpop.f32.mrf.mxu0
      %v1884 = vadd.f32 0.0, %v1883
      %v1885 = vpop.f32.mrf.mxu0
      %v1886 = vadd.f32 0.0, %v1885
      %1887 = vmatprep.mubr.bf16.mxu0 %v1308
      %1888 = vmatmul.mubr.bf16.gmra.mxu0 %v1307
      %v1889 = vpop.f32.mrf.mxu0
      %v1890 = vadd.f32 0.0, %v1889
      %v1891 = vpop.f32.mrf.mxu0
      %v1892 = vadd.f32 0.0, %v1891
      %v1893 = vpop.f32.mrf.mxu0
      %v1894 = vadd.f32 0.0, %v1893
      %v1895 = vpop.f32.mrf.mxu0
      %v1896 = vadd.f32 0.0, %v1895
      %1897 = vmatprep.mubr.bf16.mxu0 %v1312
      %1898 = vmatmul.mubr.bf16.gmra.mxu0 %v1311
      %v1899 = vpop.f32.mrf.mxu0
      %v1900 = vadd.f32 0.0, %v1899
      %v1901 = vpop.f32.mrf.mxu0
      %v1902 = vadd.f32 0.0, %v1901
      %v1903 = vpop.f32.mrf.mxu0
      %v1904 = vadd.f32 0.0, %v1903
      %v1905 = vpop.f32.mrf.mxu0
      %v1906 = vadd.f32 0.0, %v1905
      %1907 = vmatprep.mubr.bf16.mxu0 %v1316
      %1908 = vmatmul.mubr.bf16.gmra.mxu0 %v1315
      %v1909 = vpop.f32.mrf.mxu0
      %v1910 = vadd.f32 0.0, %v1909
      %v1911 = vpop.f32.mrf.mxu0
      %v1912 = vadd.f32 0.0, %v1911
      %v1913 = vpop.f32.mrf.mxu0
      %v1914 = vadd.f32 0.0, %v1913
      %v1915 = vpop.f32.mrf.mxu0
      %v1916 = vadd.f32 0.0, %v1915
      %1917 = vmatprep.mubr.bf16.mxu0 %v1320
      %1918 = vmatmul.mubr.bf16.gmra.mxu0 %v1319
      %v1919 = vpop.f32.mrf.mxu0
      %v1920 = vadd.f32 0.0, %v1919
      %v1921 = vpop.f32.mrf.mxu0
      %v1922 = vadd.f32 0.0, %v1921
      %v1923 = vpop.f32.mrf.mxu0
      %v1924 = vadd.f32 0.0, %v1923
      %v1925 = vpop.f32.mrf.mxu0
      %v1926 = vadd.f32 0.0, %v1925
      %1927 = vmatprep.mubr.bf16.mxu0 %v1324
      %1928 = vmatmul.mubr.bf16.gmra.mxu0 %v1323
      %v1929 = vpop.f32.mrf.mxu0
      %v1930 = vadd.f32 0.0, %v1929
      %v1931 = vpop.f32.mrf.mxu0
      %v1932 = vadd.f32 0.0, %v1931
      %v1933 = vpop.f32.mrf.mxu0
      %v1934 = vadd.f32 0.0, %v1933
      %v1935 = vpop.f32.mrf.mxu0
      %v1936 = vadd.f32 0.0, %v1935
      %1937 = vmatprep.mubr.bf16.mxu0 %v1328
      %1938 = vmatmul.mubr.bf16.gmra.mxu0 %v1327
      %v1939 = vpop.f32.mrf.mxu0
      %v1940 = vadd.f32 0.0, %v1939
      %v1941 = vpop.f32.mrf.mxu0
      %v1942 = vadd.f32 0.0, %v1941
      %v1943 = vpop.f32.mrf.mxu0
      %v1944 = vadd.f32 0.0, %v1943
      %v1945 = vpop.f32.mrf.mxu0
      %v1946 = vadd.f32 0.0, %v1945
      %1947 = vmatprep.mubr.bf16.mxu0 %v1332
      %1948 = vmatmul.mubr.bf16.gmra.mxu0 %v1331
      %v1949 = vpop.f32.mrf.mxu0
      %v1950 = vadd.f32 0.0, %v1949
      %v1951 = vpop.f32.mrf.mxu0
      %v1952 = vadd.f32 0.0, %v1951
      %v1953 = vpop.f32.mrf.mxu0
      %v1954 = vadd.f32 0.0, %v1953
      %v1955 = vpop.f32.mrf.mxu0
      %v1956 = vadd.f32 0.0, %v1955
      %1957 = vmatprep.mubr.bf16.mxu0 %v1336
      %1958 = vmatmul.mubr.bf16.gmra.mxu0 %v1335
      %v1959 = vpop.f32.mrf.mxu0
      %v1960 = vadd.f32 0.0, %v1959
      %v1961 = vpop.f32.mrf.mxu0
      %v1962 = vadd.f32 0.0, %v1961
      %v1963 = vpop.f32.mrf.mxu0
      %v1964 = vadd.f32 0.0, %v1963
      %v1965 = vpop.f32.mrf.mxu0
      %v1966 = vadd.f32 0.0, %v1965
      %1967 = vmatprep.mubr.bf16.mxu0 %v1340
      %1968 = vmatmul.mubr.bf16.gmra.mxu0 %v1339
      %v1969 = vpop.f32.mrf.mxu0
      %v1970 = vadd.f32 0.0, %v1969
      %v1971 = vpop.f32.mrf.mxu0
      %v1972 = vadd.f32 0.0, %v1971
      %v1973 = vpop.f32.mrf.mxu0
      %v1974 = vadd.f32 0.0, %v1973
      %v1975 = vpop.f32.mrf.mxu0
      %v1976 = vadd.f32 0.0, %v1975
      %1977 = vmatprep.mubr.bf16.mxu0 %v1344
      %1978 = vmatmul.mubr.bf16.gmra.mxu0 %v1343
      %v1979 = vpop.f32.mrf.mxu0
      %v1980 = vadd.f32 0.0, %v1979
      %v1981 = vpop.f32.mrf.mxu0
      %v1982 = vadd.f32 0.0, %v1981
      %v1983 = vpop.f32.mrf.mxu0
      %v1984 = vadd.f32 0.0, %v1983
      %v1985 = vpop.f32.mrf.mxu0
      %v1986 = vadd.f32 0.0, %v1985
      %1987 = vmatprep.mubr.bf16.mxu0 %v1348
      %1988 = vmatmul.mubr.bf16.gmra.mxu0 %v1347
      %v1989 = vpop.f32.mrf.mxu0
      %v1990 = vadd.f32 0.0, %v1989
      %v1991 = vpop.f32.mrf.mxu0
      %v1992 = vadd.f32 0.0, %v1991
      %v1993 = vpop.f32.mrf.mxu0
      %v1994 = vadd.f32 0.0, %v1993
      %v1995 = vpop.f32.mrf.mxu0
      %v1996 = vadd.f32 0.0, %v1995
      %1997 = vmatprep.mubr.bf16.mxu0 %v1352
      %1998 = vmatmul.mubr.bf16.gmra.mxu0 %v1351
      %v1999 = vpop.f32.mrf.mxu0
      %v2000 = vadd.f32 0.0, %v1999
      %v2001 = vpop.f32.mrf.mxu0
      %v2002 = vadd.f32 0.0, %v2001
      %v2003 = vpop.f32.mrf.mxu0
      %v2004 = vadd.f32 0.0, %v2003
      %v2005 = vpop.f32.mrf.mxu0
      %v2006 = vadd.f32 0.0, %v2005
      %2007 = vmatprep.mubr.bf16.mxu0 %v1356
      %2008 = vmatmul.mubr.bf16.gmra.mxu0 %v1355
      %v2009 = vpop.f32.mrf.mxu0
      %v2010 = vadd.f32 0.0, %v2009
      %v2011 = vpop.f32.mrf.mxu0
      %v2012 = vadd.f32 0.0, %v2011
      %v2013 = vpop.f32.mrf.mxu0
      %v2014 = vadd.f32 0.0, %v2013
      %v2015 = vpop.f32.mrf.mxu0
      %v2016 = vadd.f32 0.0, %v2015
      %2017 = vmatprep.mubr.bf16.mxu0 %v1360
      %2018 = vmatmul.mubr.bf16.gmra.mxu0 %v1359
      %v2019 = vpop.f32.mrf.mxu0
      %v2020 = vadd.f32 0.0, %v2019
      %v2021 = vpop.f32.mrf.mxu0
      %v2022 = vadd.f32 0.0, %v2021
      %v2023 = vpop.f32.mrf.mxu0
      %v2024 = vadd.f32 0.0, %v2023
      %v2025 = vpop.f32.mrf.mxu0
      %v2026 = vadd.f32 0.0, %v2025
      %2027 = vmatprep.mubr.bf16.mxu0 %v1364
      %2028 = vmatmul.mubr.bf16.gmra.mxu0 %v1363
      %v2029 = vpop.f32.mrf.mxu0
      %v2030 = vadd.f32 0.0, %v2029
      %v2031 = vpop.f32.mrf.mxu0
      %v2032 = vadd.f32 0.0, %v2031
      %v2033 = vpop.f32.mrf.mxu0
      %v2034 = vadd.f32 0.0, %v2033
      %v2035 = vpop.f32.mrf.mxu0
      %v2036 = vadd.f32 0.0, %v2035
      %2037 = vmatprep.mubr.bf16.mxu0 %v1368
      %2038 = vmatmul.mubr.bf16.gmra.mxu0 %v1367
      %v2039 = vpop.f32.mrf.mxu0
      %v2040 = vadd.f32 0.0, %v2039
      %v2041 = vpop.f32.mrf.mxu0
      %v2042 = vadd.f32 0.0, %v2041
      %v2043 = vpop.f32.mrf.mxu0
      %v2044 = vadd.f32 0.0, %v2043
      %v2045 = vpop.f32.mrf.mxu0
      %v2046 = vadd.f32 0.0, %v2045
      %2047 = vmatprep.mubr.bf16.mxu0 %v1372
      %2048 = vmatmul.mubr.bf16.gmra.mxu0 %v1371
      %v2049 = vpop.f32.mrf.mxu0
      %v2050 = vadd.f32 0.0, %v2049
      %v2051 = vpop.f32.mrf.mxu0
      %v2052 = vadd.f32 0.0, %v2051
      %v2053 = vpop.f32.mrf.mxu0
      %v2054 = vadd.f32 0.0, %v2053
      %v2055 = vpop.f32.mrf.mxu0
      %v2056 = vadd.f32 0.0, %v2055
      %2057 = vmatprep.mubr.bf16.mxu0 %v1376
      %2058 = vmatmul.mubr.bf16.gmra.mxu0 %v1375
      %v2059 = vpop.f32.mrf.mxu0
      %v2060 = vadd.f32 0.0, %v2059
      %v2061 = vpop.f32.mrf.mxu0
      %v2062 = vadd.f32 0.0, %v2061
      %v2063 = vpop.f32.mrf.mxu0
      %v2064 = vadd.f32 0.0, %v2063
      %v2065 = vpop.f32.mrf.mxu0
      %v2066 = vadd.f32 0.0, %v2065
      %2067 = vmatprep.mubr.bf16.mxu0 %v1380
      %2068 = vmatmul.mubr.bf16.gmra.mxu0 %v1379
      %v2069 = vpop.f32.mrf.mxu0
      %v2070 = vadd.f32 0.0, %v2069
      %v2071 = vpop.f32.mrf.mxu0
      %v2072 = vadd.f32 0.0, %v2071
      %v2073 = vpop.f32.mrf.mxu0
      %v2074 = vadd.f32 0.0, %v2073
      %v2075 = vpop.f32.mrf.mxu0
      %v2076 = vadd.f32 0.0, %v2075
      %2077 = vmatprep.mubr.bf16.mxu0 %v1384
      %2078 = vmatmul.mubr.bf16.gmra.mxu0 %v1383
      %v2079 = vpop.f32.mrf.mxu0
      %v2080 = vadd.f32 0.0, %v2079
      %v2081 = vpop.f32.mrf.mxu0
      %v2082 = vadd.f32 0.0, %v2081
      %v2083 = vpop.f32.mrf.mxu0
      %v2084 = vadd.f32 0.0, %v2083
      %v2085 = vpop.f32.mrf.mxu0
      %v2086 = vadd.f32 0.0, %v2085
      %2087 = vmatprep.mubr.bf16.mxu0 %v1388
      %2088 = vmatmul.mubr.bf16.gmra.mxu0 %v1387
      %v2089 = vpop.f32.mrf.mxu0
      %v2090 = vadd.f32 0.0, %v2089
      %v2091 = vpop.f32.mrf.mxu0
      %v2092 = vadd.f32 0.0, %v2091
      %v2093 = vpop.f32.mrf.mxu0
      %v2094 = vadd.f32 0.0, %v2093
      %v2095 = vpop.f32.mrf.mxu0
      %v2096 = vadd.f32 0.0, %v2095
      %2097 = vmatprep.mubr.bf16.mxu0 %v1392
      %2098 = vmatmul.mubr.bf16.gmra.mxu0 %v1391
      %v2099 = vpop.f32.mrf.mxu0
      %v2100 = vadd.f32 0.0, %v2099
      %v2101 = vpop.f32.mrf.mxu0
      %v2102 = vadd.f32 0.0, %v2101
      %v2103 = vpop.f32.mrf.mxu0
      %v2104 = vadd.f32 0.0, %v2103
      %v2105 = vpop.f32.mrf.mxu0
      %v2106 = vadd.f32 0.0, %v2105
      %2107 = vmatprep.mubr.bf16.mxu0 %v1396
      %2108 = vmatmul.mubr.bf16.gmra.mxu0 %v1395
      %v2109 = vpop.f32.mrf.mxu0
      %v2110 = vadd.f32 0.0, %v2109
      %v2111 = vpop.f32.mrf.mxu0
      %v2112 = vadd.f32 0.0, %v2111
      %v2113 = vpop.f32.mrf.mxu0
      %v2114 = vadd.f32 0.0, %v2113
      %v2115 = vpop.f32.mrf.mxu0
      %v2116 = vadd.f32 0.0, %v2115
      %2117 = vmatprep.mubr.bf16.mxu0 %v1400
      %2118 = vmatmul.mubr.bf16.gmra.mxu0 %v1399
      %v2119 = vpop.f32.mrf.mxu0
      %v2120 = vadd.f32 0.0, %v2119
      %v2121 = vpop.f32.mrf.mxu0
      %v2122 = vadd.f32 0.0, %v2121
      %v2123 = vpop.f32.mrf.mxu0
      %v2124 = vadd.f32 0.0, %v2123
      %v2125 = vpop.f32.mrf.mxu0
      %v2126 = vadd.f32 0.0, %v2125
      %2127 = vmatprep.mubr.bf16.mxu0 %v1404
      %2128 = vmatmul.mubr.bf16.gmra.mxu0 %v1403
      %v2129 = vpop.f32.mrf.mxu0
      %v2130 = vadd.f32 0.0, %v2129
      %v2131 = vpop.f32.mrf.mxu0
      %v2132 = vadd.f32 0.0, %v2131
      %v2133 = vpop.f32.mrf.mxu0
      %v2134 = vadd.f32 0.0, %v2133
      %v2135 = vpop.f32.mrf.mxu0
      %v2136 = vadd.f32 0.0, %v2135
      %2137 = vmatprep.mubr.bf16.mxu0 %v1408
      %2138 = vmatmul.mubr.bf16.gmra.mxu0 %v1407
      %v2139 = vpop.f32.mrf.mxu0
      %v2140 = vadd.f32 0.0, %v2139
      %v2141 = vpop.f32.mrf.mxu0
      %v2142 = vadd.f32 0.0, %v2141
      %v2143 = vpop.f32.mrf.mxu0
      %v2144 = vadd.f32 0.0, %v2143
      %v2145 = vpop.f32.mrf.mxu0
      %v2146 = vadd.f32 0.0, %v2145
      %2147 = vdwg.mxu0
      %2148 = vmatprep.subr.bf16.mxu0 %v1714
      %2149 = vmatpush1.bf16.msra.mxu0 %v1713
      %2150 = vmatprep.subr.bf16.mxu0 %v1712
      %2151 = vmatpush1.bf16.msra.mxu0 %v1711
      %2152 = vmatprep.subr.bf16.mxu0 %v1710
      %2153 = vmatpush1.bf16.msra.mxu0 %v1709
      %2154 = vmatprep.subr.bf16.mxu0 %v1708
      %2155 = vmatpush1.bf16.msra.mxu0 %v1707
      %2156 = vmatprep.subr.bf16.mxu0 %v1706
      %2157 = vmatpush1.bf16.msra.mxu0 %v1705
      %2158 = vmatprep.subr.bf16.mxu0 %v1704
      %2159 = vmatpush1.bf16.msra.mxu0 %v1703
      %2160 = vmatprep.subr.bf16.mxu0 %v1702
      %2161 = vmatpush1.bf16.msra.mxu0 %v1701
      %2162 = vmatprep.subr.bf16.mxu0 %v1700
      %2163 = vmatpush1.bf16.msra.mxu0 %v1699
      %2164 = vmatprep.subr.bf16.mxu0 %v1730
      %2165 = vmatpush2.bf16.msra.mxu0 %v1729
      %2166 = vmatprep.subr.bf16.mxu0 %v1728
      %2167 = vmatpush2.bf16.msra.mxu0 %v1727
      %2168 = vmatprep.subr.bf16.mxu0 %v1726
      %2169 = vmatpush2.bf16.msra.mxu0 %v1725
      %2170 = vmatprep.subr.bf16.mxu0 %v1724
      %2171 = vmatpush2.bf16.msra.mxu0 %v1723
      %2172 = vmatprep.subr.bf16.mxu0 %v1722
      %2173 = vmatpush2.bf16.msra.mxu0 %v1721
      %2174 = vmatprep.subr.bf16.mxu0 %v1720
      %2175 = vmatpush2.bf16.msra.mxu0 %v1719
      %2176 = vmatprep.subr.bf16.mxu0 %v1718
      %2177 = vmatpush2.bf16.msra.mxu0 %v1717
      %2178 = vmatprep.subr.bf16.mxu0 %v1716
      %2179 = vmatpush2.bf16.msra.mxu0 %v1715
      %2180 = vmatprep.mubr.bf16.mxu0 %v1286
      %2181 = vmatmul.mubr.bf16.gmra.mxu0 %v1285
      %v2182 = vpop.f32.mrf.mxu0
      %v2183 = vadd.f32 %v1830, %v2182
      %v2184 = vpop.f32.mrf.mxu0
      %v2185 = vadd.f32 %v1832, %v2184
      %v2186 = vpop.f32.mrf.mxu0
      %v2187 = vadd.f32 %v1834, %v2186
      %v2188 = vpop.f32.mrf.mxu0
      %v2189 = vadd.f32 %v1836, %v2188
      %2190 = vmatprep.mubr.bf16.mxu0 %v1290
      %2191 = vmatmul.mubr.bf16.gmra.mxu0 %v1289
      %v2192 = vpop.f32.mrf.mxu0
      %v2193 = vadd.f32 %v1840, %v2192
      %v2194 = vpop.f32.mrf.mxu0
      %v2195 = vadd.f32 %v1842, %v2194
      %v2196 = vpop.f32.mrf.mxu0
      %v2197 = vadd.f32 %v1844, %v2196
      %v2198 = vpop.f32.mrf.mxu0
      %v2199 = vadd.f32 %v1846, %v2198
      %2200 = vmatprep.mubr.bf16.mxu0 %v1294
      %2201 = vmatmul.mubr.bf16.gmra.mxu0 %v1293
      %v2202 = vpop.f32.mrf.mxu0
      %v2203 = vadd.f32 %v1850, %v2202
      %v2204 = vpop.f32.mrf.mxu0
      %v2205 = vadd.f32 %v1852, %v2204
      %v2206 = vpop.f32.mrf.mxu0
      %v2207 = vadd.f32 %v1854, %v2206
      %v2208 = vpop.f32.mrf.mxu0
      %v2209 = vadd.f32 %v1856, %v2208
      %2210 = vmatprep.mubr.bf16.mxu0 %v1298
      %2211 = vmatmul.mubr.bf16.gmra.mxu0 %v1297
      %v2212 = vpop.f32.mrf.mxu0
      %v2213 = vadd.f32 %v1860, %v2212
      %v2214 = vpop.f32.mrf.mxu0
      %v2215 = vadd.f32 %v1862, %v2214
      %v2216 = vpop.f32.mrf.mxu0
      %v2217 = vadd.f32 %v1864, %v2216
      %v2218 = vpop.f32.mrf.mxu0
      %v2219 = vadd.f32 %v1866, %v2218
      %2220 = vmatprep.mubr.bf16.mxu0 %v1302
      %2221 = vmatmul.mubr.bf16.gmra.mxu0 %v1301
      %v2222 = vpop.f32.mrf.mxu0
      %v2223 = vadd.f32 %v1870, %v2222
      %v2224 = vpop.f32.mrf.mxu0
      %v2225 = vadd.f32 %v1872, %v2224
      %v2226 = vpop.f32.mrf.mxu0
      %v2227 = vadd.f32 %v1874, %v2226
      %v2228 = vpop.f32.mrf.mxu0
      %v2229 = vadd.f32 %v1876, %v2228
      %2230 = vmatprep.mubr.bf16.mxu0 %v1306
      %2231 = vmatmul.mubr.bf16.gmra.mxu0 %v1305
      %v2232 = vpop.f32.mrf.mxu0
      %v2233 = vadd.f32 %v1880, %v2232
      %v2234 = vpop.f32.mrf.mxu0
      %v2235 = vadd.f32 %v1882, %v2234
      %v2236 = vpop.f32.mrf.mxu0
      %v2237 = vadd.f32 %v1884, %v2236
      %v2238 = vpop.f32.mrf.mxu0
      %v2239 = vadd.f32 %v1886, %v2238
      %2240 = vmatprep.mubr.bf16.mxu0 %v1310
      %2241 = vmatmul.mubr.bf16.gmra.mxu0 %v1309
      %v2242 = vpop.f32.mrf.mxu0
      %v2243 = vadd.f32 %v1890, %v2242
      %v2244 = vpop.f32.mrf.mxu0
      %v2245 = vadd.f32 %v1892, %v2244
      %v2246 = vpop.f32.mrf.mxu0
      %v2247 = vadd.f32 %v1894, %v2246
      %v2248 = vpop.f32.mrf.mxu0
      %v2249 = vadd.f32 %v1896, %v2248
      %2250 = vmatprep.mubr.bf16.mxu0 %v1314
      %2251 = vmatmul.mubr.bf16.gmra.mxu0 %v1313
      %v2252 = vpop.f32.mrf.mxu0
      %v2253 = vadd.f32 %v1900, %v2252
      %v2254 = vpop.f32.mrf.mxu0
      %v2255 = vadd.f32 %v1902, %v2254
      %v2256 = vpop.f32.mrf.mxu0
      %v2257 = vadd.f32 %v1904, %v2256
      %v2258 = vpop.f32.mrf.mxu0
      %v2259 = vadd.f32 %v1906, %v2258
      %2260 = vmatprep.mubr.bf16.mxu0 %v1318
      %2261 = vmatmul.mubr.bf16.gmra.mxu0 %v1317
      %v2262 = vpop.f32.mrf.mxu0
      %v2263 = vadd.f32 %v1910, %v2262
      %v2264 = vpop.f32.mrf.mxu0
      %v2265 = vadd.f32 %v1912, %v2264
      %v2266 = vpop.f32.mrf.mxu0
      %v2267 = vadd.f32 %v1914, %v2266
      %v2268 = vpop.f32.mrf.mxu0
      %v2269 = vadd.f32 %v1916, %v2268
      %2270 = vmatprep.mubr.bf16.mxu0 %v1322
      %2271 = vmatmul.mubr.bf16.gmra.mxu0 %v1321
      %v2272 = vpop.f32.mrf.mxu0
      %v2273 = vadd.f32 %v1920, %v2272
      %v2274 = vpop.f32.mrf.mxu0
      %v2275 = vadd.f32 %v1922, %v2274
      %v2276 = vpop.f32.mrf.mxu0
      %v2277 = vadd.f32 %v1924, %v2276
      %v2278 = vpop.f32.mrf.mxu0
      %v2279 = vadd.f32 %v1926, %v2278
      %2280 = vmatprep.mubr.bf16.mxu0 %v1326
      %2281 = vmatmul.mubr.bf16.gmra.mxu0 %v1325
      %v2282 = vpop.f32.mrf.mxu0
      %v2283 = vadd.f32 %v1930, %v2282
      %v2284 = vpop.f32.mrf.mxu0
      %v2285 = vadd.f32 %v1932, %v2284
      %v2286 = vpop.f32.mrf.mxu0
      %v2287 = vadd.f32 %v1934, %v2286
      %v2288 = vpop.f32.mrf.mxu0
      %v2289 = vadd.f32 %v1936, %v2288
      %2290 = vmatprep.mubr.bf16.mxu0 %v1330
      %2291 = vmatmul.mubr.bf16.gmra.mxu0 %v1329
      %v2292 = vpop.f32.mrf.mxu0
      %v2293 = vadd.f32 %v1940, %v2292
      %v2294 = vpop.f32.mrf.mxu0
      %v2295 = vadd.f32 %v1942, %v2294
      %v2296 = vpop.f32.mrf.mxu0
      %v2297 = vadd.f32 %v1944, %v2296
      %v2298 = vpop.f32.mrf.mxu0
      %v2299 = vadd.f32 %v1946, %v2298
      %2300 = vmatprep.mubr.bf16.mxu0 %v1334
      %2301 = vmatmul.mubr.bf16.gmra.mxu0 %v1333
      %v2302 = vpop.f32.mrf.mxu0
      %v2303 = vadd.f32 %v1950, %v2302
      %v2304 = vpop.f32.mrf.mxu0
      %v2305 = vadd.f32 %v1952, %v2304
      %v2306 = vpop.f32.mrf.mxu0
      %v2307 = vadd.f32 %v1954, %v2306
      %v2308 = vpop.f32.mrf.mxu0
      %v2309 = vadd.f32 %v1956, %v2308
      %2310 = vmatprep.mubr.bf16.mxu0 %v1338
      %2311 = vmatmul.mubr.bf16.gmra.mxu0 %v1337
      %v2312 = vpop.f32.mrf.mxu0
      %v2313 = vadd.f32 %v1960, %v2312
      %v2314 = vpop.f32.mrf.mxu0
      %v2315 = vadd.f32 %v1962, %v2314
      %v2316 = vpop.f32.mrf.mxu0
      %v2317 = vadd.f32 %v1964, %v2316
      %v2318 = vpop.f32.mrf.mxu0
      %v2319 = vadd.f32 %v1966, %v2318
      %2320 = vmatprep.mubr.bf16.mxu0 %v1342
      %2321 = vmatmul.mubr.bf16.gmra.mxu0 %v1341
      %v2322 = vpop.f32.mrf.mxu0
      %v2323 = vadd.f32 %v1970, %v2322
      %v2324 = vpop.f32.mrf.mxu0
      %v2325 = vadd.f32 %v1972, %v2324
      %v2326 = vpop.f32.mrf.mxu0
      %v2327 = vadd.f32 %v1974, %v2326
      %v2328 = vpop.f32.mrf.mxu0
      %v2329 = vadd.f32 %v1976, %v2328
      %2330 = vmatprep.mubr.bf16.mxu0 %v1346
      %2331 = vmatmul.mubr.bf16.gmra.mxu0 %v1345
      %v2332 = vpop.f32.mrf.mxu0
      %v2333 = vadd.f32 %v1980, %v2332
      %v2334 = vpop.f32.mrf.mxu0
      %v2335 = vadd.f32 %v1982, %v2334
      %v2336 = vpop.f32.mrf.mxu0
      %v2337 = vadd.f32 %v1984, %v2336
      %v2338 = vpop.f32.mrf.mxu0
      %v2339 = vadd.f32 %v1986, %v2338
      %2340 = vmatprep.mubr.bf16.mxu0 %v1350
      %2341 = vmatmul.mubr.bf16.gmra.mxu0 %v1349
      %v2342 = vpop.f32.mrf.mxu0
      %v2343 = vadd.f32 %v1990, %v2342
      %v2344 = vpop.f32.mrf.mxu0
      %v2345 = vadd.f32 %v1992, %v2344
      %v2346 = vpop.f32.mrf.mxu0
      %v2347 = vadd.f32 %v1994, %v2346
      %v2348 = vpop.f32.mrf.mxu0
      %v2349 = vadd.f32 %v1996, %v2348
      %2350 = vmatprep.mubr.bf16.mxu0 %v1354
      %2351 = vmatmul.mubr.bf16.gmra.mxu0 %v1353
      %v2352 = vpop.f32.mrf.mxu0
      %v2353 = vadd.f32 %v2000, %v2352
      %v2354 = vpop.f32.mrf.mxu0
      %v2355 = vadd.f32 %v2002, %v2354
      %v2356 = vpop.f32.mrf.mxu0
      %v2357 = vadd.f32 %v2004, %v2356
      %v2358 = vpop.f32.mrf.mxu0
      %v2359 = vadd.f32 %v2006, %v2358
      %2360 = vmatprep.mubr.bf16.mxu0 %v1358
      %2361 = vmatmul.mubr.bf16.gmra.mxu0 %v1357
      %v2362 = vpop.f32.mrf.mxu0
      %v2363 = vadd.f32 %v2010, %v2362
      %v2364 = vpop.f32.mrf.mxu0
      %v2365 = vadd.f32 %v2012, %v2364
      %v2366 = vpop.f32.mrf.mxu0
      %v2367 = vadd.f32 %v2014, %v2366
      %v2368 = vpop.f32.mrf.mxu0
      %v2369 = vadd.f32 %v2016, %v2368
      %2370 = vmatprep.mubr.bf16.mxu0 %v1362
      %2371 = vmatmul.mubr.bf16.gmra.mxu0 %v1361
      %v2372 = vpop.f32.mrf.mxu0
      %v2373 = vadd.f32 %v2020, %v2372
      %v2374 = vpop.f32.mrf.mxu0
      %v2375 = vadd.f32 %v2022, %v2374
      %v2376 = vpop.f32.mrf.mxu0
      %v2377 = vadd.f32 %v2024, %v2376
      %v2378 = vpop.f32.mrf.mxu0
      %v2379 = vadd.f32 %v2026, %v2378
      %2380 = vmatprep.mubr.bf16.mxu0 %v1366
      %2381 = vmatmul.mubr.bf16.gmra.mxu0 %v1365
      %v2382 = vpop.f32.mrf.mxu0
      %v2383 = vadd.f32 %v2030, %v2382
      %v2384 = vpop.f32.mrf.mxu0
      %v2385 = vadd.f32 %v2032, %v2384
      %v2386 = vpop.f32.mrf.mxu0
      %v2387 = vadd.f32 %v2034, %v2386
      %v2388 = vpop.f32.mrf.mxu0
      %v2389 = vadd.f32 %v2036, %v2388
      %2390 = vmatprep.mubr.bf16.mxu0 %v1370
      %2391 = vmatmul.mubr.bf16.gmra.mxu0 %v1369
      %v2392 = vpop.f32.mrf.mxu0
      %v2393 = vadd.f32 %v2040, %v2392
      %v2394 = vpop.f32.mrf.mxu0
      %v2395 = vadd.f32 %v2042, %v2394
      %v2396 = vpop.f32.mrf.mxu0
      %v2397 = vadd.f32 %v2044, %v2396
      %v2398 = vpop.f32.mrf.mxu0
      %v2399 = vadd.f32 %v2046, %v2398
      %2400 = vmatprep.mubr.bf16.mxu0 %v1374
      %2401 = vmatmul.mubr.bf16.gmra.mxu0 %v1373
      %v2402 = vpop.f32.mrf.mxu0
      %v2403 = vadd.f32 %v2050, %v2402
      %v2404 = vpop.f32.mrf.mxu0
      %v2405 = vadd.f32 %v2052, %v2404
      %v2406 = vpop.f32.mrf.mxu0
      %v2407 = vadd.f32 %v2054, %v2406
      %v2408 = vpop.f32.mrf.mxu0
      %v2409 = vadd.f32 %v2056, %v2408
      %2410 = vmatprep.mubr.bf16.mxu0 %v1378
      %2411 = vmatmul.mubr.bf16.gmra.mxu0 %v1377
      %v2412 = vpop.f32.mrf.mxu0
      %v2413 = vadd.f32 %v2060, %v2412
      %v2414 = vpop.f32.mrf.mxu0
      %v2415 = vadd.f32 %v2062, %v2414
      %v2416 = vpop.f32.mrf.mxu0
      %v2417 = vadd.f32 %v2064, %v2416
      %v2418 = vpop.f32.mrf.mxu0
      %v2419 = vadd.f32 %v2066, %v2418
      %2420 = vmatprep.mubr.bf16.mxu0 %v1382
      %2421 = vmatmul.mubr.bf16.gmra.mxu0 %v1381
      %v2422 = vpop.f32.mrf.mxu0
      %v2423 = vadd.f32 %v2070, %v2422
      %v2424 = vpop.f32.mrf.mxu0
      %v2425 = vadd.f32 %v2072, %v2424
      %v2426 = vpop.f32.mrf.mxu0
      %v2427 = vadd.f32 %v2074, %v2426
      %v2428 = vpop.f32.mrf.mxu0
      %v2429 = vadd.f32 %v2076, %v2428
      %2430 = vmatprep.mubr.bf16.mxu0 %v1386
      %2431 = vmatmul.mubr.bf16.gmra.mxu0 %v1385
      %v2432 = vpop.f32.mrf.mxu0
      %v2433 = vadd.f32 %v2080, %v2432
      %v2434 = vpop.f32.mrf.mxu0
      %v2435 = vadd.f32 %v2082, %v2434
      %v2436 = vpop.f32.mrf.mxu0
      %v2437 = vadd.f32 %v2084, %v2436
      %v2438 = vpop.f32.mrf.mxu0
      %v2439 = vadd.f32 %v2086, %v2438
      %2440 = vmatprep.mubr.bf16.mxu0 %v1390
      %2441 = vmatmul.mubr.bf16.gmra.mxu0 %v1389
      %v2442 = vpop.f32.mrf.mxu0
      %v2443 = vadd.f32 %v2090, %v2442
      %v2444 = vpop.f32.mrf.mxu0
      %v2445 = vadd.f32 %v2092, %v2444
      %v2446 = vpop.f32.mrf.mxu0
      %v2447 = vadd.f32 %v2094, %v2446
      %v2448 = vpop.f32.mrf.mxu0
      %v2449 = vadd.f32 %v2096, %v2448
      %2450 = vmatprep.mubr.bf16.mxu0 %v1394
      %2451 = vmatmul.mubr.bf16.gmra.mxu0 %v1393
      %v2452 = vpop.f32.mrf.mxu0
      %v2453 = vadd.f32 %v2100, %v2452
      %v2454 = vpop.f32.mrf.mxu0
      %v2455 = vadd.f32 %v2102, %v2454
      %v2456 = vpop.f32.mrf.mxu0
      %v2457 = vadd.f32 %v2104, %v2456
      %v2458 = vpop.f32.mrf.mxu0
      %v2459 = vadd.f32 %v2106, %v2458
      %2460 = vmatprep.mubr.bf16.mxu0 %v1398
      %2461 = vmatmul.mubr.bf16.gmra.mxu0 %v1397
      %v2462 = vpop.f32.mrf.mxu0
      %v2463 = vadd.f32 %v2110, %v2462
      %v2464 = vpop.f32.mrf.mxu0
      %v2465 = vadd.f32 %v2112, %v2464
      %v2466 = vpop.f32.mrf.mxu0
      %v2467 = vadd.f32 %v2114, %v2466
      %v2468 = vpop.f32.mrf.mxu0
      %v2469 = vadd.f32 %v2116, %v2468
      %2470 = vmatprep.mubr.bf16.mxu0 %v1402
      %2471 = vmatmul.mubr.bf16.gmra.mxu0 %v1401
      %v2472 = vpop.f32.mrf.mxu0
      %v2473 = vadd.f32 %v2120, %v2472
      %v2474 = vpop.f32.mrf.mxu0
      %v2475 = vadd.f32 %v2122, %v2474
      %v2476 = vpop.f32.mrf.mxu0
      %v2477 = vadd.f32 %v2124, %v2476
      %v2478 = vpop.f32.mrf.mxu0
      %v2479 = vadd.f32 %v2126, %v2478
      %2480 = vmatprep.mubr.bf16.mxu0 %v1406
      %2481 = vmatmul.mubr.bf16.gmra.mxu0 %v1405
      %v2482 = vpop.f32.mrf.mxu0
      %v2483 = vadd.f32 %v2130, %v2482
      %v2484 = vpop.f32.mrf.mxu0
      %v2485 = vadd.f32 %v2132, %v2484
      %v2486 = vpop.f32.mrf.mxu0
      %v2487 = vadd.f32 %v2134, %v2486
      %v2488 = vpop.f32.mrf.mxu0
      %v2489 = vadd.f32 %v2136, %v2488
      %2490 = vmatprep.mubr.bf16.mxu0 %v1410
      %2491 = vmatmul.mubr.bf16.gmra.mxu0 %v1409
      %v2492 = vpop.f32.mrf.mxu0
      %v2493 = vadd.f32 %v2140, %v2492
      %v2494 = vpop.f32.mrf.mxu0
      %v2495 = vadd.f32 %v2142, %v2494
      %v2496 = vpop.f32.mrf.mxu0
      %v2497 = vadd.f32 %v2144, %v2496
      %v2498 = vpop.f32.mrf.mxu0
      %v2499 = vadd.f32 %v2146, %v2498
      %2500 = vdwg.mxu0
      %v2501 = vpack.c.bf16 %v2187, %v2183
      %v2502 = vpack.c.bf16 %v2189, %v2185
      %v2503 = vpack.c.bf16 %v2197, %v2193
      %v2504 = vpack.c.bf16 %v2199, %v2195
      %v2505 = vpack.c.bf16 %v2207, %v2203
      %v2506 = vpack.c.bf16 %v2209, %v2205
      %v2507 = vpack.c.bf16 %v2217, %v2213
      %v2508 = vpack.c.bf16 %v2219, %v2215
      %v2509 = vpack.c.bf16 %v2227, %v2223
      %v2510 = vpack.c.bf16 %v2229, %v2225
      %v2511 = vpack.c.bf16 %v2237, %v2233
      %v2512 = vpack.c.bf16 %v2239, %v2235
      %v2513 = vpack.c.bf16 %v2247, %v2243
      %v2514 = vpack.c.bf16 %v2249, %v2245
      %v2515 = vpack.c.bf16 %v2257, %v2253
      %v2516 = vpack.c.bf16 %v2259, %v2255
      %v2517 = vpack.c.bf16 %v2267, %v2263
      %v2518 = vpack.c.bf16 %v2269, %v2265
      %v2519 = vpack.c.bf16 %v2277, %v2273
      %v2520 = vpack.c.bf16 %v2279, %v2275
      %v2521 = vpack.c.bf16 %v2287, %v2283
      %v2522 = vpack.c.bf16 %v2289, %v2285
      %v2523 = vpack.c.bf16 %v2297, %v2293
      %v2524 = vpack.c.bf16 %v2299, %v2295
      %v2525 = vpack.c.bf16 %v2307, %v2303
      %v2526 = vpack.c.bf16 %v2309, %v2305
      %v2527 = vpack.c.bf16 %v2317, %v2313
      %v2528 = vpack.c.bf16 %v2319, %v2315
      %v2529 = vpack.c.bf16 %v2327, %v2323
      %v2530 = vpack.c.bf16 %v2329, %v2325
      %v2531 = vpack.c.bf16 %v2337, %v2333
      %v2532 = vpack.c.bf16 %v2339, %v2335
      %v2533 = vpack.c.bf16 %v2347, %v2343
      %v2534 = vpack.c.bf16 %v2349, %v2345
      %v2535 = vpack.c.bf16 %v2357, %v2353
      %v2536 = vpack.c.bf16 %v2359, %v2355
      %v2537 = vpack.c.bf16 %v2367, %v2363
      %v2538 = vpack.c.bf16 %v2369, %v2365
      %v2539 = vpack.c.bf16 %v2377, %v2373
      %v2540 = vpack.c.bf16 %v2379, %v2375
      %v2541 = vpack.c.bf16 %v2387, %v2383
      %v2542 = vpack.c.bf16 %v2389, %v2385
      %v2543 = vpack.c.bf16 %v2397, %v2393
      %v2544 = vpack.c.bf16 %v2399, %v2395
      %v2545 = vpack.c.bf16 %v2407, %v2403
      %v2546 = vpack.c.bf16 %v2409, %v2405
      %v2547 = vpack.c.bf16 %v2417, %v2413
      %v2548 = vpack.c.bf16 %v2419, %v2415
      %v2549 = vpack.c.bf16 %v2427, %v2423
      %v2550 = vpack.c.bf16 %v2429, %v2425
      %v2551 = vpack.c.bf16 %v2437, %v2433
      %v2552 = vpack.c.bf16 %v2439, %v2435
      %v2553 = vpack.c.bf16 %v2447, %v2443
      %v2554 = vpack.c.bf16 %v2449, %v2445
      %v2555 = vpack.c.bf16 %v2457, %v2453
      %v2556 = vpack.c.bf16 %v2459, %v2455
      %v2557 = vpack.c.bf16 %v2467, %v2463
      %v2558 = vpack.c.bf16 %v2469, %v2465
      %v2559 = vpack.c.bf16 %v2477, %v2473
      %v2560 = vpack.c.bf16 %v2479, %v2475
      %v2561 = vpack.c.bf16 %v2487, %v2483
      %v2562 = vpack.c.bf16 %v2489, %v2485
      %v2563 = vpack.c.bf16 %v2497, %v2493
      %v2564 = vpack.c.bf16 %v2499, %v2495
      %v2565 = vld [vmem:[%s2] sm:$0xff]
      %v2566 = vld [vmem:[%s2 + $0x8] sm:$0xff]
      %v2567 = vld [vmem:[%s2 + $0x10] sm:$0xff]
      %v2568 = vld [vmem:[%s2 + $0x18] sm:$0xff]
      %v2569 = vld [vmem:[%s2 + $0x20] sm:$0xff]
      %v2570 = vld [vmem:[%s2 + $0x28] sm:$0xff]
      %v2571 = vld [vmem:[%s2 + $0x30] sm:$0xff]
      %v2572 = vld [vmem:[%s2 + $0x38] sm:$0xff]
      %v2573 = vld [vmem:[%s2 + $0x40] sm:$0xff]
      %v2574 = vld [vmem:[%s2 + $0x48] sm:$0xff]
      %v2575 = vld [vmem:[%s2 + $0x50] sm:$0xff]
      %v2576 = vld [vmem:[%s2 + $0x58] sm:$0xff]
      %v2577 = vld [vmem:[%s2 + $0x60] sm:$0xff]
      %v2578 = vld [vmem:[%s2 + $0x68] sm:$0xff]
      %v2579 = vld [vmem:[%s2 + $0x70] sm:$0xff]
      %v2580 = vld [vmem:[%s2 + $0x78] sm:$0xff]
      %v2581 = vld [vmem:[%s2 + $0x80] sm:$0xff]
      %v2582 = vld [vmem:[%s2 + $0x88] sm:$0xff]
      %v2583 = vld [vmem:[%s2 + $0x90] sm:$0xff]
      %v2584 = vld [vmem:[%s2 + $0x98] sm:$0xff]
      %v2585 = vld [vmem:[%s2 + $0xa0] sm:$0xff]
      %v2586 = vld [vmem:[%s2 + $0xa8] sm:$0xff]
      %v2587 = vld [vmem:[%s2 + $0xb0] sm:$0xff]
      %v2588 = vld [vmem:[%s2 + $0xb8] sm:$0xff]
      %v2589 = vld [vmem:[%s2 + $0xc0] sm:$0xff]
      %v2590 = vld [vmem:[%s2 + $0xc8] sm:$0xff]
      %v2591 = vld [vmem:[%s2 + $0xd0] sm:$0xff]
      %v2592 = vld [vmem:[%s2 + $0xd8] sm:$0xff]
      %v2593 = vld [vmem:[%s2 + $0xe0] sm:$0xff]
      %v2594 = vld [vmem:[%s2 + $0xe8] sm:$0xff]
      %v2595 = vld [vmem:[%s2 + $0xf0] sm:$0xff]
      %v2596 = vld [vmem:[%s2 + $0xf8] sm:$0xff]
      %v2597 = vld [vmem:[%s3] sm:$0x3]
      %v2599 = vlaneseq
      %v2600 = vshrl.u32 %v2599, 7
      %v2601 = vsub.s32 0, %v2600
      %v2602 = vrot.slane %v2597, %v2601
      %v2603 = vlaneseq
      %v2604 = vshrl.u32 %v2603, 7
      %v2605 = vsub.s32 1, %v2604
      %v2606 = vrot.slane %v2597, %v2605
      %v2641 = vunpack.c.l.b16 %v2565
      %v2642 = vunpack.c.h.b16 %v2565
      %v2643 = vunpack.c.l.b16 %v2566
      %v2644 = vunpack.c.h.b16 %v2566
      %v2645 = vunpack.c.l.b16 %v2567
      %v2646 = vunpack.c.h.b16 %v2567
      %v2647 = vunpack.c.l.b16 %v2568
      %v2648 = vunpack.c.h.b16 %v2568
      %v2649 = vunpack.c.l.b16 %v2569
      %v2650 = vunpack.c.h.b16 %v2569
      %v2651 = vunpack.c.l.b16 %v2570
      %v2652 = vunpack.c.h.b16 %v2570
      %v2653 = vunpack.c.l.b16 %v2571
      %v2654 = vunpack.c.h.b16 %v2571
      %v2655 = vunpack.c.l.b16 %v2572
      %v2656 = vunpack.c.h.b16 %v2572
      %v2657 = vunpack.c.l.b16 %v2573
      %v2658 = vunpack.c.h.b16 %v2573
      %v2659 = vunpack.c.l.b16 %v2574
      %v2660 = vunpack.c.h.b16 %v2574
      %v2661 = vunpack.c.l.b16 %v2575
      %v2662 = vunpack.c.h.b16 %v2575
      %v2663 = vunpack.c.l.b16 %v2576
      %v2664 = vunpack.c.h.b16 %v2576
      %v2665 = vunpack.c.l.b16 %v2577
      %v2666 = vunpack.c.h.b16 %v2577
      %v2667 = vunpack.c.l.b16 %v2578
      %v2668 = vunpack.c.h.b16 %v2578
      %v2669 = vunpack.c.l.b16 %v2579
      %v2670 = vunpack.c.h.b16 %v2579
      %v2671 = vunpack.c.l.b16 %v2580
      %v2672 = vunpack.c.h.b16 %v2580
      %v2673 = vunpack.c.l.b16 %v2581
      %v2674 = vunpack.c.h.b16 %v2581
      %v2675 = vunpack.c.l.b16 %v2582
      %v2676 = vunpack.c.h.b16 %v2582
      %v2677 = vunpack.c.l.b16 %v2583
      %v2678 = vunpack.c.h.b16 %v2583
      %v2679 = vunpack.c.l.b16 %v2584
      %v2680 = vunpack.c.h.b16 %v2584
      %v2681 = vunpack.c.l.b16 %v2585
      %v2682 = vunpack.c.h.b16 %v2585
      %v2683 = vunpack.c.l.b16 %v2586
      %v2684 = vunpack.c.h.b16 %v2586
      %v2685 = vunpack.c.l.b16 %v2587
      %v2686 = vunpack.c.h.b16 %v2587
      %v2687 = vunpack.c.l.b16 %v2588
      %v2688 = vunpack.c.h.b16 %v2588
      %v2689 = vunpack.c.l.b16 %v2589
      %v2690 = vunpack.c.h.b16 %v2589
      %v2691 = vunpack.c.l.b16 %v2590
      %v2692 = vunpack.c.h.b16 %v2590
      %v2693 = vunpack.c.l.b16 %v2591
      %v2694 = vunpack.c.h.b16 %v2591
      %v2695 = vunpack.c.l.b16 %v2592
      %v2696 = vunpack.c.h.b16 %v2592
      %v2697 = vunpack.c.l.b16 %v2593
      %v2698 = vunpack.c.h.b16 %v2593
      %v2699 = vunpack.c.l.b16 %v2594
      %v2700 = vunpack.c.h.b16 %v2594
      %v2701 = vunpack.c.l.b16 %v2595
      %v2702 = vunpack.c.h.b16 %v2595
      %v2703 = vunpack.c.l.b16 %v2596
      %v2704 = vunpack.c.h.b16 %v2596
      %v2705 = vpack.c.b16 %v2643, %v2641
      %v2706 = vpack.c.b16 %v2644, %v2642
      %v2707 = vpack.c.b16 %v2647, %v2645
      %v2708 = vpack.c.b16 %v2648, %v2646
      %v2709 = vpack.c.b16 %v2651, %v2649
      %v2710 = vpack.c.b16 %v2652, %v2650
      %v2711 = vpack.c.b16 %v2655, %v2653
      %v2712 = vpack.c.b16 %v2656, %v2654
      %v2713 = vpack.c.b16 %v2659, %v2657
      %v2714 = vpack.c.b16 %v2660, %v2658
      %v2715 = vpack.c.b16 %v2663, %v2661
      %v2716 = vpack.c.b16 %v2664, %v2662
      %v2717 = vpack.c.b16 %v2667, %v2665
      %v2718 = vpack.c.b16 %v2668, %v2666
      %v2719 = vpack.c.b16 %v2671, %v2669
      %v2720 = vpack.c.b16 %v2672, %v2670
      %v2721 = vpack.c.b16 %v2675, %v2673
      %v2722 = vpack.c.b16 %v2676, %v2674
      %v2723 = vpack.c.b16 %v2679, %v2677
      %v2724 = vpack.c.b16 %v2680, %v2678
      %v2725 = vpack.c.b16 %v2683, %v2681
      %v2726 = vpack.c.b16 %v2684, %v2682
      %v2727 = vpack.c.b16 %v2687, %v2685
      %v2728 = vpack.c.b16 %v2688, %v2686
      %v2729 = vpack.c.b16 %v2691, %v2689
      %v2730 = vpack.c.b16 %v2692, %v2690
      %v2731 = vpack.c.b16 %v2695, %v2693
      %v2732 = vpack.c.b16 %v2696, %v2694
      %v2733 = vpack.c.b16 %v2699, %v2697
      %v2734 = vpack.c.b16 %v2700, %v2698
      %v2735 = vpack.c.b16 %v2703, %v2701
      %v2736 = vpack.c.b16 %v2704, %v2702
      %2769 = vmatprep.subr.bf16.mxu0 %v2720
      %2770 = vmatpush1.bf16.msra.mxu0 %v2719
      %2771 = vmatprep.subr.bf16.mxu0 %v2718
      %2772 = vmatpush1.bf16.msra.mxu0 %v2717
      %2773 = vmatprep.subr.bf16.mxu0 %v2716
      %2774 = vmatpush1.bf16.msra.mxu0 %v2715
      %2775 = vmatprep.subr.bf16.mxu0 %v2714
      %2776 = vmatpush1.bf16.msra.mxu0 %v2713
      %2777 = vmatprep.subr.bf16.mxu0 %v2712
      %2778 = vmatpush1.bf16.msra.mxu0 %v2711
      %2779 = vmatprep.subr.bf16.mxu0 %v2710
      %2780 = vmatpush1.bf16.msra.mxu0 %v2709
      %2781 = vmatprep.subr.bf16.mxu0 %v2708
      %2782 = vmatpush1.bf16.msra.mxu0 %v2707
      %2783 = vmatprep.subr.bf16.mxu0 %v2706
      %2784 = vmatpush1.bf16.msra.mxu0 %v2705
      %2785 = vmatprep.subr.bf16.mxu0 %v2736
      %2786 = vmatpush2.bf16.msra.mxu0 %v2735
      %2787 = vmatprep.subr.bf16.mxu0 %v2734
      %2788 = vmatpush2.bf16.msra.mxu0 %v2733
      %2789 = vmatprep.subr.bf16.mxu0 %v2732
      %2790 = vmatpush2.bf16.msra.mxu0 %v2731
      %2791 = vmatprep.subr.bf16.mxu0 %v2730
      %2792 = vmatpush2.bf16.msra.mxu0 %v2729
      %2793 = vmatprep.subr.bf16.mxu0 %v2728
      %2794 = vmatpush2.bf16.msra.mxu0 %v2727
      %2795 = vmatprep.subr.bf16.mxu0 %v2726
      %2796 = vmatpush2.bf16.msra.mxu0 %v2725
      %2797 = vmatprep.subr.bf16.mxu0 %v2724
      %2798 = vmatpush2.bf16.msra.mxu0 %v2723
      %2799 = vmatprep.subr.bf16.mxu0 %v2722
      %2800 = vmatpush2.bf16.msra.mxu0 %v2721
      %2801 = vmatprep.mubr.bf16.mxu0 %v2502
      %2802 = vmatmul.mubr.bf16.gmra.mxu0 %v2501
      %v2803 = vpop.f32.mrf.mxu0
      %v2804 = vadd.f32 %v2602, %v2803
      %v2805 = vpop.f32.mrf.mxu0
      %v2806 = vadd.f32 %v2606, %v2805
      %v2807 = vpop.f32.mrf.mxu0
      %v2808 = vadd.f32 %v2602, %v2807
      %v2809 = vpop.f32.mrf.mxu0
      %v2810 = vadd.f32 %v2606, %v2809
      %2811 = vmatprep.mubr.bf16.mxu0 %v2504
      %2812 = vmatmul.mubr.bf16.gmra.mxu0 %v2503
      %v2813 = vpop.f32.mrf.mxu0
      %v2814 = vadd.f32 %v2602, %v2813
      %v2815 = vpop.f32.mrf.mxu0
      %v2816 = vadd.f32 %v2606, %v2815
      %v2817 = vpop.f32.mrf.mxu0
      %v2818 = vadd.f32 %v2602, %v2817
      %v2819 = vpop.f32.mrf.mxu0
      %v2820 = vadd.f32 %v2606, %v2819
      %2821 = vmatprep.mubr.bf16.mxu0 %v2506
      %2822 = vmatmul.mubr.bf16.gmra.mxu0 %v2505
      %v2823 = vpop.f32.mrf.mxu0
      %v2824 = vadd.f32 %v2602, %v2823
      %v2825 = vpop.f32.mrf.mxu0
      %v2826 = vadd.f32 %v2606, %v2825
      %v2827 = vpop.f32.mrf.mxu0
      %v2828 = vadd.f32 %v2602, %v2827
      %v2829 = vpop.f32.mrf.mxu0
      %v2830 = vadd.f32 %v2606, %v2829
      %2831 = vmatprep.mubr.bf16.mxu0 %v2508
      %2832 = vmatmul.mubr.bf16.gmra.mxu0 %v2507
      %v2833 = vpop.f32.mrf.mxu0
      %v2834 = vadd.f32 %v2602, %v2833
      %v2835 = vpop.f32.mrf.mxu0
      %v2836 = vadd.f32 %v2606, %v2835
      %v2837 = vpop.f32.mrf.mxu0
      %v2838 = vadd.f32 %v2602, %v2837
      %v2839 = vpop.f32.mrf.mxu0
      %v2840 = vadd.f32 %v2606, %v2839
      %2841 = vmatprep.mubr.bf16.mxu0 %v2510
      %2842 = vmatmul.mubr.bf16.gmra.mxu0 %v2509
      %v2843 = vpop.f32.mrf.mxu0
      %v2844 = vadd.f32 %v2602, %v2843
      %v2845 = vpop.f32.mrf.mxu0
      %v2846 = vadd.f32 %v2606, %v2845
      %v2847 = vpop.f32.mrf.mxu0
      %v2848 = vadd.f32 %v2602, %v2847
      %v2849 = vpop.f32.mrf.mxu0
      %v2850 = vadd.f32 %v2606, %v2849
      %2851 = vmatprep.mubr.bf16.mxu0 %v2512
      %2852 = vmatmul.mubr.bf16.gmra.mxu0 %v2511
      %v2853 = vpop.f32.mrf.mxu0
      %v2854 = vadd.f32 %v2602, %v2853
      %v2855 = vpop.f32.mrf.mxu0
      %v2856 = vadd.f32 %v2606, %v2855
      %v2857 = vpop.f32.mrf.mxu0
      %v2858 = vadd.f32 %v2602, %v2857
      %v2859 = vpop.f32.mrf.mxu0
      %v2860 = vadd.f32 %v2606, %v2859
      %2861 = vmatprep.mubr.bf16.mxu0 %v2514
      %2862 = vmatmul.mubr.bf16.gmra.mxu0 %v2513
      %v2863 = vpop.f32.mrf.mxu0
      %v2864 = vadd.f32 %v2602, %v2863
      %v2865 = vpop.f32.mrf.mxu0
      %v2866 = vadd.f32 %v2606, %v2865
      %v2867 = vpop.f32.mrf.mxu0
      %v2868 = vadd.f32 %v2602, %v2867
      %v2869 = vpop.f32.mrf.mxu0
      %v2870 = vadd.f32 %v2606, %v2869
      %2871 = vmatprep.mubr.bf16.mxu0 %v2516
      %2872 = vmatmul.mubr.bf16.gmra.mxu0 %v2515
      %v2873 = vpop.f32.mrf.mxu0
      %v2874 = vadd.f32 %v2602, %v2873
      %v2875 = vpop.f32.mrf.mxu0
      %v2876 = vadd.f32 %v2606, %v2875
      %v2877 = vpop.f32.mrf.mxu0
      %v2878 = vadd.f32 %v2602, %v2877
      %v2879 = vpop.f32.mrf.mxu0
      %v2880 = vadd.f32 %v2606, %v2879
      %2881 = vmatprep.mubr.bf16.mxu0 %v2518
      %2882 = vmatmul.mubr.bf16.gmra.mxu0 %v2517
      %v2883 = vpop.f32.mrf.mxu0
      %v2884 = vadd.f32 %v2602, %v2883
      %v2885 = vpop.f32.mrf.mxu0
      %v2886 = vadd.f32 %v2606, %v2885
      %v2887 = vpop.f32.mrf.mxu0
      %v2888 = vadd.f32 %v2602, %v2887
      %v2889 = vpop.f32.mrf.mxu0
      %v2890 = vadd.f32 %v2606, %v2889
      %2891 = vmatprep.mubr.bf16.mxu0 %v2520
      %2892 = vmatmul.mubr.bf16.gmra.mxu0 %v2519
      %v2893 = vpop.f32.mrf.mxu0
      %v2894 = vadd.f32 %v2602, %v2893
      %v2895 = vpop.f32.mrf.mxu0
      %v2896 = vadd.f32 %v2606, %v2895
      %v2897 = vpop.f32.mrf.mxu0
      %v2898 = vadd.f32 %v2602, %v2897
      %v2899 = vpop.f32.mrf.mxu0
      %v2900 = vadd.f32 %v2606, %v2899
      %2901 = vmatprep.mubr.bf16.mxu0 %v2522
      %2902 = vmatmul.mubr.bf16.gmra.mxu0 %v2521
      %v2903 = vpop.f32.mrf.mxu0
      %v2904 = vadd.f32 %v2602, %v2903
      %v2905 = vpop.f32.mrf.mxu0
      %v2906 = vadd.f32 %v2606, %v2905
      %v2907 = vpop.f32.mrf.mxu0
      %v2908 = vadd.f32 %v2602, %v2907
      %v2909 = vpop.f32.mrf.mxu0
      %v2910 = vadd.f32 %v2606, %v2909
      %2911 = vmatprep.mubr.bf16.mxu0 %v2524
      %2912 = vmatmul.mubr.bf16.gmra.mxu0 %v2523
      %v2913 = vpop.f32.mrf.mxu0
      %v2914 = vadd.f32 %v2602, %v2913
      %v2915 = vpop.f32.mrf.mxu0
      %v2916 = vadd.f32 %v2606, %v2915
      %v2917 = vpop.f32.mrf.mxu0
      %v2918 = vadd.f32 %v2602, %v2917
      %v2919 = vpop.f32.mrf.mxu0
      %v2920 = vadd.f32 %v2606, %v2919
      %2921 = vmatprep.mubr.bf16.mxu0 %v2526
      %2922 = vmatmul.mubr.bf16.gmra.mxu0 %v2525
      %v2923 = vpop.f32.mrf.mxu0
      %v2924 = vadd.f32 %v2602, %v2923
      %v2925 = vpop.f32.mrf.mxu0
      %v2926 = vadd.f32 %v2606, %v2925
      %v2927 = vpop.f32.mrf.mxu0
      %v2928 = vadd.f32 %v2602, %v2927
      %v2929 = vpop.f32.mrf.mxu0
      %v2930 = vadd.f32 %v2606, %v2929
      %2931 = vmatprep.mubr.bf16.mxu0 %v2528
      %2932 = vmatmul.mubr.bf16.gmra.mxu0 %v2527
      %v2933 = vpop.f32.mrf.mxu0
      %v2934 = vadd.f32 %v2602, %v2933
      %v2935 = vpop.f32.mrf.mxu0
      %v2936 = vadd.f32 %v2606, %v2935
      %v2937 = vpop.f32.mrf.mxu0
      %v2938 = vadd.f32 %v2602, %v2937
      %v2939 = vpop.f32.mrf.mxu0
      %v2940 = vadd.f32 %v2606, %v2939
      %2941 = vmatprep.mubr.bf16.mxu0 %v2530
      %2942 = vmatmul.mubr.bf16.gmra.mxu0 %v2529
      %v2943 = vpop.f32.mrf.mxu0
      %v2944 = vadd.f32 %v2602, %v2943
      %v2945 = vpop.f32.mrf.mxu0
      %v2946 = vadd.f32 %v2606, %v2945
      %v2947 = vpop.f32.mrf.mxu0
      %v2948 = vadd.f32 %v2602, %v2947
      %v2949 = vpop.f32.mrf.mxu0
      %v2950 = vadd.f32 %v2606, %v2949
      %2951 = vmatprep.mubr.bf16.mxu0 %v2532
      %2952 = vmatmul.mubr.bf16.gmra.mxu0 %v2531
      %v2953 = vpop.f32.mrf.mxu0
      %v2954 = vadd.f32 %v2602, %v2953
      %v2955 = vpop.f32.mrf.mxu0
      %v2956 = vadd.f32 %v2606, %v2955
      %v2957 = vpop.f32.mrf.mxu0
      %v2958 = vadd.f32 %v2602, %v2957
      %v2959 = vpop.f32.mrf.mxu0
      %v2960 = vadd.f32 %v2606, %v2959
      %2961 = vmatprep.mubr.bf16.mxu0 %v2534
      %2962 = vmatmul.mubr.bf16.gmra.mxu0 %v2533
      %v2963 = vpop.f32.mrf.mxu0
      %v2964 = vadd.f32 %v2602, %v2963
      %v2965 = vpop.f32.mrf.mxu0
      %v2966 = vadd.f32 %v2606, %v2965
      %v2967 = vpop.f32.mrf.mxu0
      %v2968 = vadd.f32 %v2602, %v2967
      %v2969 = vpop.f32.mrf.mxu0
      %v2970 = vadd.f32 %v2606, %v2969
      %2971 = vmatprep.mubr.bf16.mxu0 %v2536
      %2972 = vmatmul.mubr.bf16.gmra.mxu0 %v2535
      %v2973 = vpop.f32.mrf.mxu0
      %v2974 = vadd.f32 %v2602, %v2973
      %v2975 = vpop.f32.mrf.mxu0
      %v2976 = vadd.f32 %v2606, %v2975
      %v2977 = vpop.f32.mrf.mxu0
      %v2978 = vadd.f32 %v2602, %v2977
      %v2979 = vpop.f32.mrf.mxu0
      %v2980 = vadd.f32 %v2606, %v2979
      %2981 = vmatprep.mubr.bf16.mxu0 %v2538
      %2982 = vmatmul.mubr.bf16.gmra.mxu0 %v2537
      %v2983 = vpop.f32.mrf.mxu0
      %v2984 = vadd.f32 %v2602, %v2983
      %v2985 = vpop.f32.mrf.mxu0
      %v2986 = vadd.f32 %v2606, %v2985
      %v2987 = vpop.f32.mrf.mxu0
      %v2988 = vadd.f32 %v2602, %v2987
      %v2989 = vpop.f32.mrf.mxu0
      %v2990 = vadd.f32 %v2606, %v2989
      %2991 = vmatprep.mubr.bf16.mxu0 %v2540
      %2992 = vmatmul.mubr.bf16.gmra.mxu0 %v2539
      %v2993 = vpop.f32.mrf.mxu0
      %v2994 = vadd.f32 %v2602, %v2993
      %v2995 = vpop.f32.mrf.mxu0
      %v2996 = vadd.f32 %v2606, %v2995
      %v2997 = vpop.f32.mrf.mxu0
      %v2998 = vadd.f32 %v2602, %v2997
      %v2999 = vpop.f32.mrf.mxu0
      %v3000 = vadd.f32 %v2606, %v2999
      %3001 = vmatprep.mubr.bf16.mxu0 %v2542
      %3002 = vmatmul.mubr.bf16.gmra.mxu0 %v2541
      %v3003 = vpop.f32.mrf.mxu0
      %v3004 = vadd.f32 %v2602, %v3003
      %v3005 = vpop.f32.mrf.mxu0
      %v3006 = vadd.f32 %v2606, %v3005
      %v3007 = vpop.f32.mrf.mxu0
      %v3008 = vadd.f32 %v2602, %v3007
      %v3009 = vpop.f32.mrf.mxu0
      %v3010 = vadd.f32 %v2606, %v3009
      %3011 = vmatprep.mubr.bf16.mxu0 %v2544
      %3012 = vmatmul.mubr.bf16.gmra.mxu0 %v2543
      %v3013 = vpop.f32.mrf.mxu0
      %v3014 = vadd.f32 %v2602, %v3013
      %v3015 = vpop.f32.mrf.mxu0
      %v3016 = vadd.f32 %v2606, %v3015
      %v3017 = vpop.f32.mrf.mxu0
      %v3018 = vadd.f32 %v2602, %v3017
      %v3019 = vpop.f32.mrf.mxu0
      %v3020 = vadd.f32 %v2606, %v3019
      %3021 = vmatprep.mubr.bf16.mxu0 %v2546
      %3022 = vmatmul.mubr.bf16.gmra.mxu0 %v2545
      %v3023 = vpop.f32.mrf.mxu0
      %v3024 = vadd.f32 %v2602, %v3023
      %v3025 = vpop.f32.mrf.mxu0
      %v3026 = vadd.f32 %v2606, %v3025
      %v3027 = vpop.f32.mrf.mxu0
      %v3028 = vadd.f32 %v2602, %v3027
      %v3029 = vpop.f32.mrf.mxu0
      %v3030 = vadd.f32 %v2606, %v3029
      %3031 = vmatprep.mubr.bf16.mxu0 %v2548
      %3032 = vmatmul.mubr.bf16.gmra.mxu0 %v2547
      %v3033 = vpop.f32.mrf.mxu0
      %v3034 = vadd.f32 %v2602, %v3033
      %v3035 = vpop.f32.mrf.mxu0
      %v3036 = vadd.f32 %v2606, %v3035
      %v3037 = vpop.f32.mrf.mxu0
      %v3038 = vadd.f32 %v2602, %v3037
      %v3039 = vpop.f32.mrf.mxu0
      %v3040 = vadd.f32 %v2606, %v3039
      %3041 = vmatprep.mubr.bf16.mxu0 %v2550
      %3042 = vmatmul.mubr.bf16.gmra.mxu0 %v2549
      %v3043 = vpop.f32.mrf.mxu0
      %v3044 = vadd.f32 %v2602, %v3043
      %v3045 = vpop.f32.mrf.mxu0
      %v3046 = vadd.f32 %v2606, %v3045
      %v3047 = vpop.f32.mrf.mxu0
      %v3048 = vadd.f32 %v2602, %v3047
      %v3049 = vpop.f32.mrf.mxu0
      %v3050 = vadd.f32 %v2606, %v3049
      %3051 = vmatprep.mubr.bf16.mxu0 %v2552
      %3052 = vmatmul.mubr.bf16.gmra.mxu0 %v2551
      %v3053 = vpop.f32.mrf.mxu0
      %v3054 = vadd.f32 %v2602, %v3053
      %v3055 = vpop.f32.mrf.mxu0
      %v3056 = vadd.f32 %v2606, %v3055
      %v3057 = vpop.f32.mrf.mxu0
      %v3058 = vadd.f32 %v2602, %v3057
      %v3059 = vpop.f32.mrf.mxu0
      %v3060 = vadd.f32 %v2606, %v3059
      %3061 = vmatprep.mubr.bf16.mxu0 %v2554
      %3062 = vmatmul.mubr.bf16.gmra.mxu0 %v2553
      %v3063 = vpop.f32.mrf.mxu0
      %v3064 = vadd.f32 %v2602, %v3063
      %v3065 = vpop.f32.mrf.mxu0
      %v3066 = vadd.f32 %v2606, %v3065
      %v3067 = vpop.f32.mrf.mxu0
      %v3068 = vadd.f32 %v2602, %v3067
      %v3069 = vpop.f32.mrf.mxu0
      %v3070 = vadd.f32 %v2606, %v3069
      %3071 = vmatprep.mubr.bf16.mxu0 %v2556
      %3072 = vmatmul.mubr.bf16.gmra.mxu0 %v2555
      %v3073 = vpop.f32.mrf.mxu0
      %v3074 = vadd.f32 %v2602, %v3073
      %v3075 = vpop.f32.mrf.mxu0
      %v3076 = vadd.f32 %v2606, %v3075
      %v3077 = vpop.f32.mrf.mxu0
      %v3078 = vadd.f32 %v2602, %v3077
      %v3079 = vpop.f32.mrf.mxu0
      %v3080 = vadd.f32 %v2606, %v3079
      %3081 = vmatprep.mubr.bf16.mxu0 %v2558
      %3082 = vmatmul.mubr.bf16.gmra.mxu0 %v2557
      %v3083 = vpop.f32.mrf.mxu0
      %v3084 = vadd.f32 %v2602, %v3083
      %v3085 = vpop.f32.mrf.mxu0
      %v3086 = vadd.f32 %v2606, %v3085
      %v3087 = vpop.f32.mrf.mxu0
      %v3088 = vadd.f32 %v2602, %v3087
      %v3089 = vpop.f32.mrf.mxu0
      %v3090 = vadd.f32 %v2606, %v3089
      %3091 = vmatprep.mubr.bf16.mxu0 %v2560
      %3092 = vmatmul.mubr.bf16.gmra.mxu0 %v2559
      %v3093 = vpop.f32.mrf.mxu0
      %v3094 = vadd.f32 %v2602, %v3093
      %v3095 = vpop.f32.mrf.mxu0
      %v3096 = vadd.f32 %v2606, %v3095
      %v3097 = vpop.f32.mrf.mxu0
      %v3098 = vadd.f32 %v2602, %v3097
      %v3099 = vpop.f32.mrf.mxu0
      %v3100 = vadd.f32 %v2606, %v3099
      %3101 = vmatprep.mubr.bf16.mxu0 %v2562
      %3102 = vmatmul.mubr.bf16.gmra.mxu0 %v2561
      %v3103 = vpop.f32.mrf.mxu0
      %v3104 = vadd.f32 %v2602, %v3103
      %v3105 = vpop.f32.mrf.mxu0
      %v3106 = vadd.f32 %v2606, %v3105
      %v3107 = vpop.f32.mrf.mxu0
      %v3108 = vadd.f32 %v2602, %v3107
      %v3109 = vpop.f32.mrf.mxu0
      %v3110 = vadd.f32 %v2606, %v3109
      %3111 = vmatprep.mubr.bf16.mxu0 %v2564
      %3112 = vmatmul.mubr.bf16.gmra.mxu0 %v2563
      %v3113 = vpop.f32.mrf.mxu0
      %v3114 = vadd.f32 %v2602, %v3113
      %v3115 = vpop.f32.mrf.mxu0
      %v3116 = vadd.f32 %v2606, %v3115
      %v3117 = vpop.f32.mrf.mxu0
      %v3118 = vadd.f32 %v2602, %v3117
      %v3119 = vpop.f32.mrf.mxu0
      %v3120 = vadd.f32 %v2606, %v3119
      %3121 = vdwg.mxu0
      %v3122 = vmax.f32 %v2804, 0.0
      %v3123 = vmax.f32 %v2806, 0.0
      %v3124 = vmax.f32 %v2808, 0.0
      %v3125 = vmax.f32 %v2810, 0.0
      %v3126 = vmax.f32 %v2814, 0.0
      %v3127 = vmax.f32 %v2816, 0.0
      %v3128 = vmax.f32 %v2818, 0.0
      %v3129 = vmax.f32 %v2820, 0.0
      %v3130 = vmax.f32 %v2824, 0.0
      %v3131 = vmax.f32 %v2826, 0.0
      %v3132 = vmax.f32 %v2828, 0.0
      %v3133 = vmax.f32 %v2830, 0.0
      %v3134 = vmax.f32 %v2834, 0.0
      %v3135 = vmax.f32 %v2836, 0.0
      %v3136 = vmax.f32 %v2838, 0.0
      %v3137 = vmax.f32 %v2840, 0.0
      %v3138 = vmax.f32 %v2844, 0.0
      %v3139 = vmax.f32 %v2846, 0.0
      %v3140 = vmax.f32 %v2848, 0.0
      %v3141 = vmax.f32 %v2850, 0.0
      %v3142 = vmax.f32 %v2854, 0.0
      %v3143 = vmax.f32 %v2856, 0.0
      %v3144 = vmax.f32 %v2858, 0.0
      %v3145 = vmax.f32 %v2860, 0.0
      %v3146 = vmax.f32 %v2864, 0.0
      %v3147 = vmax.f32 %v2866, 0.0
      %v3148 = vmax.f32 %v2868, 0.0
      %v3149 = vmax.f32 %v2870, 0.0
      %v3150 = vmax.f32 %v2874, 0.0
      %v3151 = vmax.f32 %v2876, 0.0
      %v3152 = vmax.f32 %v2878, 0.0
      %v3153 = vmax.f32 %v2880, 0.0
      %v3154 = vmax.f32 %v2884, 0.0
      %v3155 = vmax.f32 %v2886, 0.0
      %v3156 = vmax.f32 %v2888, 0.0
      %v3157 = vmax.f32 %v2890, 0.0
      %v3158 = vmax.f32 %v2894, 0.0
      %v3159 = vmax.f32 %v2896, 0.0
      %v3160 = vmax.f32 %v2898, 0.0
      %v3161 = vmax.f32 %v2900, 0.0
      %v3162 = vmax.f32 %v2904, 0.0
      %v3163 = vmax.f32 %v2906, 0.0
      %v3164 = vmax.f32 %v2908, 0.0
      %v3165 = vmax.f32 %v2910, 0.0
      %v3166 = vmax.f32 %v2914, 0.0
      %v3167 = vmax.f32 %v2916, 0.0
      %v3168 = vmax.f32 %v2918, 0.0
      %v3169 = vmax.f32 %v2920, 0.0
      %v3170 = vmax.f32 %v2924, 0.0
      %v3171 = vmax.f32 %v2926, 0.0
      %v3172 = vmax.f32 %v2928, 0.0
      %v3173 = vmax.f32 %v2930, 0.0
      %v3174 = vmax.f32 %v2934, 0.0
      %v3175 = vmax.f32 %v2936, 0.0
      %v3176 = vmax.f32 %v2938, 0.0
      %v3177 = vmax.f32 %v2940, 0.0
      %v3178 = vmax.f32 %v2944, 0.0
      %v3179 = vmax.f32 %v2946, 0.0
      %v3180 = vmax.f32 %v2948, 0.0
      %v3181 = vmax.f32 %v2950, 0.0
      %v3182 = vmax.f32 %v2954, 0.0
      %v3183 = vmax.f32 %v2956, 0.0
      %v3184 = vmax.f32 %v2958, 0.0
      %v3185 = vmax.f32 %v2960, 0.0
      %v3186 = vmax.f32 %v2964, 0.0
      %v3187 = vmax.f32 %v2966, 0.0
      %v3188 = vmax.f32 %v2968, 0.0
      %v3189 = vmax.f32 %v2970, 0.0
      %v3190 = vmax.f32 %v2974, 0.0
      %v3191 = vmax.f32 %v2976, 0.0
      %v3192 = vmax.f32 %v2978, 0.0
      %v3193 = vmax.f32 %v2980, 0.0
      %v3194 = vmax.f32 %v2984, 0.0
      %v3195 = vmax.f32 %v2986, 0.0
      %v3196 = vmax.f32 %v2988, 0.0
      %v3197 = vmax.f32 %v2990, 0.0
      %v3198 = vmax.f32 %v2994, 0.0
      %v3199 = vmax.f32 %v2996, 0.0
      %v3200 = vmax.f32 %v2998, 0.0
      %v3201 = vmax.f32 %v3000, 0.0
      %v3202 = vmax.f32 %v3004, 0.0
      %v3203 = vmax.f32 %v3006, 0.0
      %v3204 = vmax.f32 %v3008, 0.0
      %v3205 = vmax.f32 %v3010, 0.0
      %v3206 = vmax.f32 %v3014, 0.0
      %v3207 = vmax.f32 %v3016, 0.0
      %v3208 = vmax.f32 %v3018, 0.0
      %v3209 = vmax.f32 %v3020, 0.0
      %v3210 = vmax.f32 %v3024, 0.0
      %v3211 = vmax.f32 %v3026, 0.0
      %v3212 = vmax.f32 %v3028, 0.0
      %v3213 = vmax.f32 %v3030, 0.0
      %v3214 = vmax.f32 %v3034, 0.0
      %v3215 = vmax.f32 %v3036, 0.0
      %v3216 = vmax.f32 %v3038, 0.0
      %v3217 = vmax.f32 %v3040, 0.0
      %v3218 = vmax.f32 %v3044, 0.0
      %v3219 = vmax.f32 %v3046, 0.0
      %v3220 = vmax.f32 %v3048, 0.0
      %v3221 = vmax.f32 %v3050, 0.0
      %v3222 = vmax.f32 %v3054, 0.0
      %v3223 = vmax.f32 %v3056, 0.0
      %v3224 = vmax.f32 %v3058, 0.0
      %v3225 = vmax.f32 %v3060, 0.0
      %v3226 = vmax.f32 %v3064, 0.0
      %v3227 = vmax.f32 %v3066, 0.0
      %v3228 = vmax.f32 %v3068, 0.0
      %v3229 = vmax.f32 %v3070, 0.0
      %v3230 = vmax.f32 %v3074, 0.0
      %v3231 = vmax.f32 %v3076, 0.0
      %v3232 = vmax.f32 %v3078, 0.0
      %v3233 = vmax.f32 %v3080, 0.0
      %v3234 = vmax.f32 %v3084, 0.0
      %v3235 = vmax.f32 %v3086, 0.0
      %v3236 = vmax.f32 %v3088, 0.0
      %v3237 = vmax.f32 %v3090, 0.0
      %v3238 = vmax.f32 %v3094, 0.0
      %v3239 = vmax.f32 %v3096, 0.0
      %v3240 = vmax.f32 %v3098, 0.0
      %v3241 = vmax.f32 %v3100, 0.0
      %v3242 = vmax.f32 %v3104, 0.0
      %v3243 = vmax.f32 %v3106, 0.0
      %v3244 = vmax.f32 %v3108, 0.0
      %v3245 = vmax.f32 %v3110, 0.0
      %v3246 = vmax.f32 %v3114, 0.0
      %v3247 = vmax.f32 %v3116, 0.0
      %v3248 = vmax.f32 %v3118, 0.0
      %v3249 = vmax.f32 %v3120, 0.0
      %v3250 = vmul.f32 %v3122, %v3186
      %v3251 = vmul.f32 %v3123, %v3187
      %v3252 = vmul.f32 %v3124, %v3188
      %v3253 = vmul.f32 %v3125, %v3189
      %v3254 = vmul.f32 %v3126, %v3190
      %v3255 = vmul.f32 %v3127, %v3191
      %v3256 = vmul.f32 %v3128, %v3192
      %v3257 = vmul.f32 %v3129, %v3193
      %v3258 = vmul.f32 %v3130, %v3194
      %v3259 = vmul.f32 %v3131, %v3195
      %v3260 = vmul.f32 %v3132, %v3196
      %v3261 = vmul.f32 %v3133, %v3197
      %v3262 = vmul.f32 %v3134, %v3198
      %v3263 = vmul.f32 %v3135, %v3199
      %v3264 = vmul.f32 %v3136, %v3200
      %v3265 = vmul.f32 %v3137, %v3201
      %v3266 = vmul.f32 %v3138, %v3202
      %v3267 = vmul.f32 %v3139, %v3203
      %v3268 = vmul.f32 %v3140, %v3204
      %v3269 = vmul.f32 %v3141, %v3205
      %v3270 = vmul.f32 %v3142, %v3206
      %v3271 = vmul.f32 %v3143, %v3207
      %v3272 = vmul.f32 %v3144, %v3208
      %v3273 = vmul.f32 %v3145, %v3209
      %v3274 = vmul.f32 %v3146, %v3210
      %v3275 = vmul.f32 %v3147, %v3211
      %v3276 = vmul.f32 %v3148, %v3212
      %v3277 = vmul.f32 %v3149, %v3213
      %v3278 = vmul.f32 %v3150, %v3214
      %v3279 = vmul.f32 %v3151, %v3215
      %v3280 = vmul.f32 %v3152, %v3216
      %v3281 = vmul.f32 %v3153, %v3217
      %v3282 = vmul.f32 %v3154, %v3218
      %v3283 = vmul.f32 %v3155, %v3219
      %v3284 = vmul.f32 %v3156, %v3220
      %v3285 = vmul.f32 %v3157, %v3221
      %v3286 = vmul.f32 %v3158, %v3222
      %v3287 = vmul.f32 %v3159, %v3223
      %v3288 = vmul.f32 %v3160, %v3224
      %v3289 = vmul.f32 %v3161, %v3225
      %v3290 = vmul.f32 %v3162, %v3226
      %v3291 = vmul.f32 %v3163, %v3227
      %v3292 = vmul.f32 %v3164, %v3228
      %v3293 = vmul.f32 %v3165, %v3229
      %v3294 = vmul.f32 %v3166, %v3230
      %v3295 = vmul.f32 %v3167, %v3231
      %v3296 = vmul.f32 %v3168, %v3232
      %v3297 = vmul.f32 %v3169, %v3233
      %v3298 = vmul.f32 %v3170, %v3234
      %v3299 = vmul.f32 %v3171, %v3235
      %v3300 = vmul.f32 %v3172, %v3236
      %v3301 = vmul.f32 %v3173, %v3237
      %v3302 = vmul.f32 %v3174, %v3238
      %v3303 = vmul.f32 %v3175, %v3239
      %v3304 = vmul.f32 %v3176, %v3240
      %v3305 = vmul.f32 %v3177, %v3241
      %v3306 = vmul.f32 %v3178, %v3242
      %v3307 = vmul.f32 %v3179, %v3243
      %v3308 = vmul.f32 %v3180, %v3244
      %v3309 = vmul.f32 %v3181, %v3245
      %v3310 = vmul.f32 %v3182, %v3246
      %v3311 = vmul.f32 %v3183, %v3247
      %v3312 = vmul.f32 %v3184, %v3248
      %v3313 = vmul.f32 %v3185, %v3249
      %v3314 = vld [vmem:[%s4] sm:$0x3]
      %v3316 = vlaneseq
      %v3317 = vshrl.u32 %v3316, 7
      %v3318 = vsub.s32 0, %v3317
      %v3319 = vrot.slane %v3314, %v3318
      %v3320 = vlaneseq
      %v3321 = vshrl.u32 %v3320, 7
      %v3322 = vsub.s32 1, %v3321
      %v3323 = vrot.slane %v3314, %v3322
      %v3326 = vmul.f32 %v3250, %v3319
      %v3327 = vmul.f32 %v3251, %v3323
      %v3328 = vmul.f32 %v3252, %v3319
      %v3329 = vmul.f32 %v3253, %v3323
      %v3330 = vmul.f32 %v3254, %v3319
      %v3331 = vmul.f32 %v3255, %v3323
      %v3332 = vmul.f32 %v3256, %v3319
      %v3333 = vmul.f32 %v3257, %v3323
      %v3334 = vmul.f32 %v3258, %v3319
      %v3335 = vmul.f32 %v3259, %v3323
      %v3336 = vmul.f32 %v3260, %v3319
      %v3337 = vmul.f32 %v3261, %v3323
      %v3338 = vmul.f32 %v3262, %v3319
      %v3339 = vmul.f32 %v3263, %v3323
      %v3340 = vmul.f32 %v3264, %v3319
      %v3341 = vmul.f32 %v3265, %v3323
      %v3342 = vmul.f32 %v3266, %v3319
      %v3343 = vmul.f32 %v3267, %v3323
      %v3344 = vmul.f32 %v3268, %v3319
      %v3345 = vmul.f32 %v3269, %v3323
      %v3346 = vmul.f32 %v3270, %v3319
      %v3347 = vmul.f32 %v3271, %v3323
      %v3348 = vmul.f32 %v3272, %v3319
      %v3349 = vmul.f32 %v3273, %v3323
      %v3350 = vmul.f32 %v3274, %v3319
      %v3351 = vmul.f32 %v3275, %v3323
      %v3352 = vmul.f32 %v3276, %v3319
      %v3353 = vmul.f32 %v3277, %v3323
      %v3354 = vmul.f32 %v3278, %v3319
      %v3355 = vmul.f32 %v3279, %v3323
      %v3356 = vmul.f32 %v3280, %v3319
      %v3357 = vmul.f32 %v3281, %v3323
      %v3358 = vmul.f32 %v3282, %v3319
      %v3359 = vmul.f32 %v3283, %v3323
      %v3360 = vmul.f32 %v3284, %v3319
      %v3361 = vmul.f32 %v3285, %v3323
      %v3362 = vmul.f32 %v3286, %v3319
      %v3363 = vmul.f32 %v3287, %v3323
      %v3364 = vmul.f32 %v3288, %v3319
      %v3365 = vmul.f32 %v3289, %v3323
      %v3366 = vmul.f32 %v3290, %v3319
      %v3367 = vmul.f32 %v3291, %v3323
      %v3368 = vmul.f32 %v3292, %v3319
      %v3369 = vmul.f32 %v3293, %v3323
      %v3370 = vmul.f32 %v3294, %v3319
      %v3371 = vmul.f32 %v3295, %v3323
      %v3372 = vmul.f32 %v3296, %v3319
      %v3373 = vmul.f32 %v3297, %v3323
      %v3374 = vmul.f32 %v3298, %v3319
      %v3375 = vmul.f32 %v3299, %v3323
      %v3376 = vmul.f32 %v3300, %v3319
      %v3377 = vmul.f32 %v3301, %v3323
      %v3378 = vmul.f32 %v3302, %v3319
      %v3379 = vmul.f32 %v3303, %v3323
      %v3380 = vmul.f32 %v3304, %v3319
      %v3381 = vmul.f32 %v3305, %v3323
      %v3382 = vmul.f32 %v3306, %v3319
      %v3383 = vmul.f32 %v3307, %v3323
      %v3384 = vmul.f32 %v3308, %v3319
      %v3385 = vmul.f32 %v3309, %v3323
      %v3386 = vmul.f32 %v3310, %v3319
      %v3387 = vmul.f32 %v3311, %v3323
      %v3388 = vmul.f32 %v3312, %v3319
      %v3389 = vmul.f32 %v3313, %v3323
      %v3390 = vadd.f32 %v3326, %v3327
      %3391 = vadd.xlane.f32.xlu0 %v3390
      %v3392 = vpop.xlane.xlu0 %3391
      %v3393 = vadd.f32 %v3328, %v3329
      %3394 = vadd.xlane.f32.xlu0 %v3393
      %v3395 = vpop.xlane.xlu0 %3394
      %v3396 = vadd.f32 %v3330, %v3331
      %3397 = vadd.xlane.f32.xlu0 %v3396
      %v3398 = vpop.xlane.xlu0 %3397
      %v3399 = vadd.f32 %v3332, %v3333
      %3400 = vadd.xlane.f32.xlu0 %v3399
      %v3401 = vpop.xlane.xlu0 %3400
      %v3402 = vadd.f32 %v3334, %v3335
      %3403 = vadd.xlane.f32.xlu0 %v3402
      %v3404 = vpop.xlane.xlu0 %3403
      %v3405 = vadd.f32 %v3336, %v3337
      %3406 = vadd.xlane.f32.xlu0 %v3405
      %v3407 = vpop.xlane.xlu0 %3406
      %v3408 = vadd.f32 %v3338, %v3339
      %3409 = vadd.xlane.f32.xlu0 %v3408
      %v3410 = vpop.xlane.xlu0 %3409
      %v3411 = vadd.f32 %v3340, %v3341
      %3412 = vadd.xlane.f32.xlu0 %v3411
      %v3413 = vpop.xlane.xlu0 %3412
      %v3414 = vadd.f32 %v3342, %v3343
      %3415 = vadd.xlane.f32.xlu0 %v3414
      %v3416 = vpop.xlane.xlu0 %3415
      %v3417 = vadd.f32 %v3344, %v3345
      %3418 = vadd.xlane.f32.xlu0 %v3417
      %v3419 = vpop.xlane.xlu0 %3418
      %v3420 = vadd.f32 %v3346, %v3347
      %3421 = vadd.xlane.f32.xlu0 %v3420
      %v3422 = vpop.xlane.xlu0 %3421
      %v3423 = vadd.f32 %v3348, %v3349
      %3424 = vadd.xlane.f32.xlu0 %v3423
      %v3425 = vpop.xlane.xlu0 %3424
      %v3426 = vadd.f32 %v3350, %v3351
      %3427 = vadd.xlane.f32.xlu0 %v3426
      %v3428 = vpop.xlane.xlu0 %3427
      %v3429 = vadd.f32 %v3352, %v3353
      %3430 = vadd.xlane.f32.xlu0 %v3429
      %v3431 = vpop.xlane.xlu0 %3430
      %v3432 = vadd.f32 %v3354, %v3355
      %3433 = vadd.xlane.f32.xlu0 %v3432
      %v3434 = vpop.xlane.xlu0 %3433
      %v3435 = vadd.f32 %v3356, %v3357
      %3436 = vadd.xlane.f32.xlu0 %v3435
      %v3437 = vpop.xlane.xlu0 %3436
      %v3438 = vadd.f32 %v3358, %v3359
      %3439 = vadd.xlane.f32.xlu0 %v3438
      %v3440 = vpop.xlane.xlu0 %3439
      %v3441 = vadd.f32 %v3360, %v3361
      %3442 = vadd.xlane.f32.xlu0 %v3441
      %v3443 = vpop.xlane.xlu0 %3442
      %v3444 = vadd.f32 %v3362, %v3363
      %3445 = vadd.xlane.f32.xlu0 %v3444
      %v3446 = vpop.xlane.xlu0 %3445
      %v3447 = vadd.f32 %v3364, %v3365
      %3448 = vadd.xlane.f32.xlu0 %v3447
      %v3449 = vpop.xlane.xlu0 %3448
      %v3450 = vadd.f32 %v3366, %v3367
      %3451 = vadd.xlane.f32.xlu0 %v3450
      %v3452 = vpop.xlane.xlu0 %3451
      %v3453 = vadd.f32 %v3368, %v3369
      %3454 = vadd.xlane.f32.xlu0 %v3453
      %v3455 = vpop.xlane.xlu0 %3454
      %v3456 = vadd.f32 %v3370, %v3371
      %3457 = vadd.xlane.f32.xlu0 %v3456
      %v3458 = vpop.xlane.xlu0 %3457
      %v3459 = vadd.f32 %v3372, %v3373
      %3460 = vadd.xlane.f32.xlu0 %v3459
      %v3461 = vpop.xlane.xlu0 %3460
      %v3462 = vadd.f32 %v3374, %v3375
      %3463 = vadd.xlane.f32.xlu0 %v3462
      %v3464 = vpop.xlane.xlu0 %3463
      %v3465 = vadd.f32 %v3376, %v3377
      %3466 = vadd.xlane.f32.xlu0 %v3465
      %v3467 = vpop.xlane.xlu0 %3466
      %v3468 = vadd.f32 %v3378, %v3379
      %3469 = vadd.xlane.f32.xlu0 %v3468
      %v3470 = vpop.xlane.xlu0 %3469
      %v3471 = vadd.f32 %v3380, %v3381
      %3472 = vadd.xlane.f32.xlu0 %v3471
      %v3473 = vpop.xlane.xlu0 %3472
      %v3474 = vadd.f32 %v3382, %v3383
      %3475 = vadd.xlane.f32.xlu0 %v3474
      %v3476 = vpop.xlane.xlu0 %3475
      %v3477 = vadd.f32 %v3384, %v3385
      %3478 = vadd.xlane.f32.xlu0 %v3477
      %v3479 = vpop.xlane.xlu0 %3478
      %v3480 = vadd.f32 %v3386, %v3387
      %3481 = vadd.xlane.f32.xlu0 %v3480
      %v3482 = vpop.xlane.xlu0 %3481
      %v3483 = vadd.f32 %v3388, %v3389
      %3484 = vadd.xlane.f32.xlu0 %v3483
      %v3485 = vpop.xlane.xlu0 %3484
      %v3486 = vlaneseq
      %v3487 = vshrl.u32 %v3486, 7
      %v3488 = vadd.s32 %v3487, 8
      %v3489 = vadd.s32 %v3487, 16
      %v3490 = vadd.s32 %v3487, 24
      %v3491 = vadd.s32 %v3487, 32
      %v3492 = vadd.s32 %v3487, 40
      %v3493 = vadd.s32 %v3487, 48
      %v3494 = vadd.s32 %v3487, 56
      %v3495 = vadd.s32 %v3487, 64
      %v3496 = vadd.s32 %v3487, 72
      %v3497 = vadd.s32 %v3487, 80
      %v3498 = vadd.s32 %v3487, 88
      %v3499 = vadd.s32 %v3487, 96
      %v3500 = vadd.s32 %v3487, 104
      %v3501 = vadd.s32 %v3487, 112
      %v3502 = vadd.s32 %v3487, 120
      %v3503 = vadd.s32 %v3487, 128
      %v3504 = vadd.s32 %v3487, 136
      %v3505 = vadd.s32 %v3487, 144
      %v3506 = vadd.s32 %v3487, 152
      %v3507 = vadd.s32 %v3487, 160
      %v3508 = vadd.s32 %v3487, 168
      %v3509 = vadd.s32 %v3487, 176
      %v3510 = vadd.s32 %v3487, 184
      %v3511 = vadd.s32 %v3487, 192
      %v3512 = vadd.s32 %v3487, 200
      %v3513 = vadd.s32 %v3487, 208
      %v3514 = vadd.s32 %v3487, 216
      %v3515 = vadd.s32 %v3487, 224
      %v3516 = vadd.s32 %v3487, 232
      %v3517 = vadd.s32 %v3487, 240
      %v3518 = vadd.s32 %v3487, 248
      %vm3519 = vcmp.eq.s32.totalorder %v3487, %v255
      %vm3520 = vcmp.eq.s32.totalorder %v3487, %v256
      %vm3521 = vcmp.eq.s32.totalorder %v3488, %v255
      %vm3522 = vcmp.eq.s32.totalorder %v3488, %v256
      %vm3523 = vcmp.eq.s32.totalorder %v3489, %v255
      %vm3524 = vcmp.eq.s32.totalorder %v3489, %v256
      %vm3525 = vcmp.eq.s32.totalorder %v3490, %v255
      %vm3526 = vcmp.eq.s32.totalorder %v3490, %v256
      %vm3527 = vcmp.eq.s32.totalorder %v3491, %v255
      %vm3528 = vcmp.eq.s32.totalorder %v3491, %v256
      %vm3529 = vcmp.eq.s32.totalorder %v3492, %v255
      %vm3530 = vcmp.eq.s32.totalorder %v3492, %v256
      %vm3531 = vcmp.eq.s32.totalorder %v3493, %v255
      %vm3532 = vcmp.eq.s32.totalorder %v3493, %v256
      %vm3533 = vcmp.eq.s32.totalorder %v3494, %v255
      %vm3534 = vcmp.eq.s32.totalorder %v3494, %v256
      %vm3535 = vcmp.eq.s32.totalorder %v3495, %v255
      %vm3536 = vcmp.eq.s32.totalorder %v3495, %v256
      %vm3537 = vcmp.eq.s32.totalorder %v3496, %v255
      %vm3538 = vcmp.eq.s32.totalorder %v3496, %v256
      %vm3539 = vcmp.eq.s32.totalorder %v3497, %v255
      %vm3540 = vcmp.eq.s32.totalorder %v3497, %v256
      %vm3541 = vcmp.eq.s32.totalorder %v3498, %v255
      %vm3542 = vcmp.eq.s32.totalorder %v3498, %v256
      %vm3543 = vcmp.eq.s32.totalorder %v3499, %v255
      %vm3544 = vcmp.eq.s32.totalorder %v3499, %v256
      %vm3545 = vcmp.eq.s32.totalorder %v3500, %v255
      %vm3546 = vcmp.eq.s32.totalorder %v3500, %v256
      %vm3547 = vcmp.eq.s32.totalorder %v3501, %v255
      %vm3548 = vcmp.eq.s32.totalorder %v3501, %v256
      %vm3549 = vcmp.eq.s32.totalorder %v3502, %v255
      %vm3550 = vcmp.eq.s32.totalorder %v3502, %v256
      %vm3551 = vcmp.eq.s32.totalorder %v3503, %v255
      %vm3552 = vcmp.eq.s32.totalorder %v3503, %v256
      %vm3553 = vcmp.eq.s32.totalorder %v3504, %v255
      %vm3554 = vcmp.eq.s32.totalorder %v3504, %v256
      %vm3555 = vcmp.eq.s32.totalorder %v3505, %v255
      %vm3556 = vcmp.eq.s32.totalorder %v3505, %v256
      %vm3557 = vcmp.eq.s32.totalorder %v3506, %v255
      %vm3558 = vcmp.eq.s32.totalorder %v3506, %v256
      %vm3559 = vcmp.eq.s32.totalorder %v3507, %v255
      %vm3560 = vcmp.eq.s32.totalorder %v3507, %v256
      %vm3561 = vcmp.eq.s32.totalorder %v3508, %v255
      %vm3562 = vcmp.eq.s32.totalorder %v3508, %v256
      %vm3563 = vcmp.eq.s32.totalorder %v3509, %v255
      %vm3564 = vcmp.eq.s32.totalorder %v3509, %v256
      %vm3565 = vcmp.eq.s32.totalorder %v3510, %v255
      %vm3566 = vcmp.eq.s32.totalorder %v3510, %v256
      %vm3567 = vcmp.eq.s32.totalorder %v3511, %v255
      %vm3568 = vcmp.eq.s32.totalorder %v3511, %v256
      %vm3569 = vcmp.eq.s32.totalorder %v3512, %v255
      %vm3570 = vcmp.eq.s32.totalorder %v3512, %v256
      %vm3571 = vcmp.eq.s32.totalorder %v3513, %v255
      %vm3572 = vcmp.eq.s32.totalorder %v3513, %v256
      %vm3573 = vcmp.eq.s32.totalorder %v3514, %v255
      %vm3574 = vcmp.eq.s32.totalorder %v3514, %v256
      %vm3575 = vcmp.eq.s32.totalorder %v3515, %v255
      %vm3576 = vcmp.eq.s32.totalorder %v3515, %v256
      %vm3577 = vcmp.eq.s32.totalorder %v3516, %v255
      %vm3578 = vcmp.eq.s32.totalorder %v3516, %v256
      %vm3579 = vcmp.eq.s32.totalorder %v3517, %v255
      %vm3580 = vcmp.eq.s32.totalorder %v3517, %v256
      %vm3581 = vcmp.eq.s32.totalorder %v3518, %v255
      %vm3582 = vcmp.eq.s32.totalorder %v3518, %v256
      %v3583 = vsel %vm3519, 1, 0
      %v3584 = vsel %vm3520, 1, 0
      %v3585 = vsel %vm3521, 1, 0
      %v3586 = vsel %vm3522, 1, 0
      %v3587 = vsel %vm3523, 1, 0
      %v3588 = vsel %vm3524, 1, 0
      %v3589 = vsel %vm3525, 1, 0
      %v3590 = vsel %vm3526, 1, 0
      %v3591 = vsel %vm3527, 1, 0
      %v3592 = vsel %vm3528, 1, 0
      %v3593 = vsel %vm3529, 1, 0
      %v3594 = vsel %vm3530, 1, 0
      %v3595 = vsel %vm3531, 1, 0
      %v3596 = vsel %vm3532, 1, 0
      %v3597 = vsel %vm3533, 1, 0
      %v3598 = vsel %vm3534, 1, 0
      %v3599 = vsel %vm3535, 1, 0
      %v3600 = vsel %vm3536, 1, 0
      %v3601 = vsel %vm3537, 1, 0
      %v3602 = vsel %vm3538, 1, 0
      %v3603 = vsel %vm3539, 1, 0
      %v3604 = vsel %vm3540, 1, 0
      %v3605 = vsel %vm3541, 1, 0
      %v3606 = vsel %vm3542, 1, 0
      %v3607 = vsel %vm3543, 1, 0
      %v3608 = vsel %vm3544, 1, 0
      %v3609 = vsel %vm3545, 1, 0
      %v3610 = vsel %vm3546, 1, 0
      %v3611 = vsel %vm3547, 1, 0
      %v3612 = vsel %vm3548, 1, 0
      %v3613 = vsel %vm3549, 1, 0
      %v3614 = vsel %vm3550, 1, 0
      %v3615 = vsel %vm3551, 1, 0
      %v3616 = vsel %vm3552, 1, 0
      %v3617 = vsel %vm3553, 1, 0
      %v3618 = vsel %vm3554, 1, 0
      %v3619 = vsel %vm3555, 1, 0
      %v3620 = vsel %vm3556, 1, 0
      %v3621 = vsel %vm3557, 1, 0
      %v3622 = vsel %vm3558, 1, 0
      %v3623 = vsel %vm3559, 1, 0
      %v3624 = vsel %vm3560, 1, 0
      %v3625 = vsel %vm3561, 1, 0
      %v3626 = vsel %vm3562, 1, 0
      %v3627 = vsel %vm3563, 1, 0
      %v3628 = vsel %vm3564, 1, 0
      %v3629 = vsel %vm3565, 1, 0
      %v3630 = vsel %vm3566, 1, 0
      %v3631 = vsel %vm3567, 1, 0
      %v3632 = vsel %vm3568, 1, 0
      %v3633 = vsel %vm3569, 1, 0
      %v3634 = vsel %vm3570, 1, 0
      %v3635 = vsel %vm3571, 1, 0
      %v3636 = vsel %vm3572, 1, 0
      %v3637 = vsel %vm3573, 1, 0
      %v3638 = vsel %vm3574, 1, 0
      %v3639 = vsel %vm3575, 1, 0
      %v3640 = vsel %vm3576, 1, 0
      %v3641 = vsel %vm3577, 1, 0
      %v3642 = vsel %vm3578, 1, 0
      %v3643 = vsel %vm3579, 1, 0
      %v3644 = vsel %vm3580, 1, 0
      %v3645 = vsel %vm3581, 1, 0
      %v3646 = vsel %vm3582, 1, 0
      %v3647 = vcvt.s32.f32 %v3583
      %v3648 = vcvt.s32.f32 %v3584
      %v3649 = vcvt.s32.f32 %v3585
      %v3650 = vcvt.s32.f32 %v3586
      %v3651 = vcvt.s32.f32 %v3587
      %v3652 = vcvt.s32.f32 %v3588
      %v3653 = vcvt.s32.f32 %v3589
      %v3654 = vcvt.s32.f32 %v3590
      %v3655 = vcvt.s32.f32 %v3591
      %v3656 = vcvt.s32.f32 %v3592
      %v3657 = vcvt.s32.f32 %v3593
      %v3658 = vcvt.s32.f32 %v3594
      %v3659 = vcvt.s32.f32 %v3595
      %v3660 = vcvt.s32.f32 %v3596
      %v3661 = vcvt.s32.f32 %v3597
      %v3662 = vcvt.s32.f32 %v3598
      %v3663 = vcvt.s32.f32 %v3599
      %v3664 = vcvt.s32.f32 %v3600
      %v3665 = vcvt.s32.f32 %v3601
      %v3666 = vcvt.s32.f32 %v3602
      %v3667 = vcvt.s32.f32 %v3603
      %v3668 = vcvt.s32.f32 %v3604
      %v3669 = vcvt.s32.f32 %v3605
      %v3670 = vcvt.s32.f32 %v3606
      %v3671 = vcvt.s32.f32 %v3607
      %v3672 = vcvt.s32.f32 %v3608
      %v3673 = vcvt.s32.f32 %v3609
      %v3674 = vcvt.s32.f32 %v3610
      %v3675 = vcvt.s32.f32 %v3611
      %v3676 = vcvt.s32.f32 %v3612
      %v3677 = vcvt.s32.f32 %v3613
      %v3678 = vcvt.s32.f32 %v3614
      %v3679 = vcvt.s32.f32 %v3615
      %v3680 = vcvt.s32.f32 %v3616
      %v3681 = vcvt.s32.f32 %v3617
      %v3682 = vcvt.s32.f32 %v3618
      %v3683 = vcvt.s32.f32 %v3619
      %v3684 = vcvt.s32.f32 %v3620
      %v3685 = vcvt.s32.f32 %v3621
      %v3686 = vcvt.s32.f32 %v3622
      %v3687 = vcvt.s32.f32 %v3623
      %v3688 = vcvt.s32.f32 %v3624
      %v3689 = vcvt.s32.f32 %v3625
      %v3690 = vcvt.s32.f32 %v3626
      %v3691 = vcvt.s32.f32 %v3627
      %v3692 = vcvt.s32.f32 %v3628
      %v3693 = vcvt.s32.f32 %v3629
      %v3694 = vcvt.s32.f32 %v3630
      %v3695 = vcvt.s32.f32 %v3631
      %v3696 = vcvt.s32.f32 %v3632
      %v3697 = vcvt.s32.f32 %v3633
      %v3698 = vcvt.s32.f32 %v3634
      %v3699 = vcvt.s32.f32 %v3635
      %v3700 = vcvt.s32.f32 %v3636
      %v3701 = vcvt.s32.f32 %v3637
      %v3702 = vcvt.s32.f32 %v3638
      %v3703 = vcvt.s32.f32 %v3639
      %v3704 = vcvt.s32.f32 %v3640
      %v3705 = vcvt.s32.f32 %v3641
      %v3706 = vcvt.s32.f32 %v3642
      %v3707 = vcvt.s32.f32 %v3643
      %v3708 = vcvt.s32.f32 %v3644
      %v3709 = vcvt.s32.f32 %v3645
      %v3710 = vcvt.s32.f32 %v3646
      %v3711 = vmul.f32 %v3647, %v3392
      %v3712 = vmul.f32 %v3648, %v3392
      %v3713 = vmul.f32 %v3649, %v3395
      %v3714 = vmul.f32 %v3650, %v3395
      %v3715 = vmul.f32 %v3651, %v3398
      %v3716 = vmul.f32 %v3652, %v3398
      %v3717 = vmul.f32 %v3653, %v3401
      %v3718 = vmul.f32 %v3654, %v3401
      %v3719 = vmul.f32 %v3655, %v3404
      %v3720 = vmul.f32 %v3656, %v3404
      %v3721 = vmul.f32 %v3657, %v3407
      %v3722 = vmul.f32 %v3658, %v3407
      %v3723 = vmul.f32 %v3659, %v3410
      %v3724 = vmul.f32 %v3660, %v3410
      %v3725 = vmul.f32 %v3661, %v3413
      %v3726 = vmul.f32 %v3662, %v3413
      %v3727 = vmul.f32 %v3663, %v3416
      %v3728 = vmul.f32 %v3664, %v3416
      %v3729 = vmul.f32 %v3665, %v3419
      %v3730 = vmul.f32 %v3666, %v3419
      %v3731 = vmul.f32 %v3667, %v3422
      %v3732 = vmul.f32 %v3668, %v3422
      %v3733 = vmul.f32 %v3669, %v3425
      %v3734 = vmul.f32 %v3670, %v3425
      %v3735 = vmul.f32 %v3671, %v3428
      %v3736 = vmul.f32 %v3672, %v3428
      %v3737 = vmul.f32 %v3673, %v3431
      %v3738 = vmul.f32 %v3674, %v3431
      %v3739 = vmul.f32 %v3675, %v3434
      %v3740 = vmul.f32 %v3676, %v3434
      %v3741 = vmul.f32 %v3677, %v3437
      %v3742 = vmul.f32 %v3678, %v3437
      %v3743 = vmul.f32 %v3679, %v3440
      %v3744 = vmul.f32 %v3680, %v3440
      %v3745 = vmul.f32 %v3681, %v3443
      %v3746 = vmul.f32 %v3682, %v3443
      %v3747 = vmul.f32 %v3683, %v3446
      %v3748 = vmul.f32 %v3684, %v3446
      %v3749 = vmul.f32 %v3685, %v3449
      %v3750 = vmul.f32 %v3686, %v3449
      %v3751 = vmul.f32 %v3687, %v3452
      %v3752 = vmul.f32 %v3688, %v3452
      %v3753 = vmul.f32 %v3689, %v3455
      %v3754 = vmul.f32 %v3690, %v3455
      %v3755 = vmul.f32 %v3691, %v3458
      %v3756 = vmul.f32 %v3692, %v3458
      %v3757 = vmul.f32 %v3693, %v3461
      %v3758 = vmul.f32 %v3694, %v3461
      %v3759 = vmul.f32 %v3695, %v3464
      %v3760 = vmul.f32 %v3696, %v3464
      %v3761 = vmul.f32 %v3697, %v3467
      %v3762 = vmul.f32 %v3698, %v3467
      %v3763 = vmul.f32 %v3699, %v3470
      %v3764 = vmul.f32 %v3700, %v3470
      %v3765 = vmul.f32 %v3701, %v3473
      %v3766 = vmul.f32 %v3702, %v3473
      %v3767 = vmul.f32 %v3703, %v3476
      %v3768 = vmul.f32 %v3704, %v3476
      %v3769 = vmul.f32 %v3705, %v3479
      %v3770 = vmul.f32 %v3706, %v3479
      %v3771 = vmul.f32 %v3707, %v3482
      %v3772 = vmul.f32 %v3708, %v3482
      %v3773 = vmul.f32 %v3709, %v3485
      %v3774 = vmul.f32 %v3710, %v3485
      %v3775 = vadd.f32 %v3711, %v3713
      %v3776 = vadd.f32 %v3775, %v3715
      %v3777 = vadd.f32 %v3776, %v3717
      %v3778 = vadd.f32 %v3777, %v3719
      %v3779 = vadd.f32 %v3778, %v3721
      %v3780 = vadd.f32 %v3779, %v3723
      %v3781 = vadd.f32 %v3780, %v3725
      %v3782 = vadd.f32 %v3781, %v3727
      %v3783 = vadd.f32 %v3782, %v3729
      %v3784 = vadd.f32 %v3783, %v3731
      %v3785 = vadd.f32 %v3784, %v3733
      %v3786 = vadd.f32 %v3785, %v3735
      %v3787 = vadd.f32 %v3786, %v3737
      %v3788 = vadd.f32 %v3787, %v3739
      %v3789 = vadd.f32 %v3788, %v3741
      %v3790 = vadd.f32 %v3789, %v3743
      %v3791 = vadd.f32 %v3790, %v3745
      %v3792 = vadd.f32 %v3791, %v3747
      %v3793 = vadd.f32 %v3792, %v3749
      %v3794 = vadd.f32 %v3793, %v3751
      %v3795 = vadd.f32 %v3794, %v3753
      %v3796 = vadd.f32 %v3795, %v3755
      %v3797 = vadd.f32 %v3796, %v3757
      %v3798 = vadd.f32 %v3797, %v3759
      %v3799 = vadd.f32 %v3798, %v3761
      %v3800 = vadd.f32 %v3799, %v3763
      %v3801 = vadd.f32 %v3800, %v3765
      %v3802 = vadd.f32 %v3801, %v3767
      %v3803 = vadd.f32 %v3802, %v3769
      %v3804 = vadd.f32 %v3803, %v3771
      %v3805 = vadd.f32 %v3804, %v3773
      %v3806 = vrot.slane %v3805, 4
      %v3807 = vadd.f32 %v3805, %v3806
      %v3808 = vrot.slane %v3807, 2
      %v3809 = vadd.f32 %v3807, %v3808
      %v3810 = vrot.slane %v3809, 1
      %v3811 = vadd.f32 %v3809, %v3810
      %v3812 = vadd.f32 %v3712, %v3714
      %v3813 = vadd.f32 %v3812, %v3716
      %v3814 = vadd.f32 %v3813, %v3718
      %v3815 = vadd.f32 %v3814, %v3720
      %v3816 = vadd.f32 %v3815, %v3722
      %v3817 = vadd.f32 %v3816, %v3724
      %v3818 = vadd.f32 %v3817, %v3726
      %v3819 = vadd.f32 %v3818, %v3728
      %v3820 = vadd.f32 %v3819, %v3730
      %v3821 = vadd.f32 %v3820, %v3732
      %v3822 = vadd.f32 %v3821, %v3734
      %v3823 = vadd.f32 %v3822, %v3736
      %v3824 = vadd.f32 %v3823, %v3738
      %v3825 = vadd.f32 %v3824, %v3740
      %v3826 = vadd.f32 %v3825, %v3742
      %v3827 = vadd.f32 %v3826, %v3744
      %v3828 = vadd.f32 %v3827, %v3746
      %v3829 = vadd.f32 %v3828, %v3748
      %v3830 = vadd.f32 %v3829, %v3750
      %v3831 = vadd.f32 %v3830, %v3752
      %v3832 = vadd.f32 %v3831, %v3754
      %v3833 = vadd.f32 %v3832, %v3756
      %v3834 = vadd.f32 %v3833, %v3758
      %v3835 = vadd.f32 %v3834, %v3760
      %v3836 = vadd.f32 %v3835, %v3762
      %v3837 = vadd.f32 %v3836, %v3764
      %v3838 = vadd.f32 %v3837, %v3766
      %v3839 = vadd.f32 %v3838, %v3768
      %v3840 = vadd.f32 %v3839, %v3770
      %v3841 = vadd.f32 %v3840, %v3772
      %v3842 = vadd.f32 %v3841, %v3774
      %v3843 = vrot.slane %v3842, 4
      %v3844 = vadd.f32 %v3842, %v3843
      %v3845 = vrot.slane %v3844, 2
      %v3846 = vadd.f32 %v3844, %v3845
      %v3847 = vrot.slane %v3846, 1
      %v3848 = vadd.f32 %v3846, %v3847
      %s3849 = sld [smem:[#allocation2]]
      %v3850 = vstv %s3849
      %v3851 = vadd.f32 %v3811, %v3850
      %v3852 = vadd.f32 %v3848, %v3850
      %v3853 = vxor.u32 %v3851, 2147483648
      %v3854 = vxor.u32 %v3852, 2147483648
      %v3855 = vmul.f32 %v3853, 1.442695
      %v3856 = vpow.pop %v3855
      %v3857 = vmul.f32 %v3854, 1.442695
      %v3858 = vpow.pop %v3857
      %v3859 = vadd.f32 %v3856, 1.0
      %v3860 = vadd.f32 %v3858, 1.0
      %v3861 = vrcp.pop %v3859
      %v3862 = vmul.f32 1.0, %v3861
      %v3863 = vrcp.pop %v3860
      %v3864 = vmul.f32 1.0, %v3863
      %v3867 = vcombine.low %v3862, %v3864
      %v3869 = vunpack.c.l.s4 1966171168
      %v3870 = vunpack.c.0.s8 %v3869
      %v3871 = vlaneseq
      %v3872 = vshrl.u32 %v3871, 7
      %v3873 = vsub.s32 %v3870, %v3872
      %v3874 = vrot.slane %v3867, %v3873
      %v3876 = vunpack.c.l.s4 1966171168
      %v3877 = vunpack.c.0.s8 %v3876
      %v3878 = vlaneseq
      %v3879 = vshrl.u32 %v3878, 7
      %v3880 = vsub.s32 %v3877, %v3879
      %v3881 = vrot.slane %v3874, %v3880
      %v3883 = vlaneseq
      %vm3884 = vcmp.ge.s32.totalorder %v3883, 0
      %vm3885 = vcmp.lt.s32.totalorder %v3883, 256
      %vm3886 = vmand %vm3884, %vm3885
      %3887 = vst.msk [vmem:[%s252] sm:$0x3] %vm3886, %v3881
      %s3888 = smul.u32 2, %s18
      %p3889 = scmp.lt.s32.totalorder %s3888, 3
      %s3890 = scalar_select %p3889, %s3888, 3
      %s3891 = scalar_lea.vmem %s6, %s3890
      // Predicated region
      $region45: #{task2cl_forward.1} parent=43 // pred_check
        %p3892 = pneg %p167
      $region46: #{task2cl_forward.1} parent=43 // pred_check_branch
        %3894 = sbr.rel (%p3892) target = $region48
      $region47: #{task2cl_forward.1} parent=43 // pred_region
        %s3895 = smul.u32 2, %s18
      $region48: #{task2cl_forward.1} parent=43 // pred_fallthru
        _
    $region44: #{task2cl_forward.1} parent=5 // pred_fallthru
      _
    %p3896 = scmp.le.s32.totalorder 2, %s13
    // Predicated region
    $region49: #{task2cl_forward.1} parent=5 // pred_check
      %p3897 = pneg %p3896
    $region50: #{task2cl_forward.1} parent=5 // pred_check_branch
      %3899 = sbr.rel (%p3897) target = $region52
    $region51: #{task2cl_forward.1} parent=5 // pred_region
      %s3900 = ssub.s32 %s13, 2
      // Predicated region
      $region53: #{task2cl_forward.1} parent=51 // pred_check
        %p3901 = pneg %p173
      $region54: #{task2cl_forward.1} parent=51 // pred_check_branch
        %3903 = sbr.rel (%p3901) target = $region56
      $region55: #{task2cl_forward.1} parent=51 // pred_region
        %s3904 = smul.u32 2, %s19
        %p3905 = scmp.lt.s32.totalorder %s3904, 3
        %s3906 = scalar_select %p3905, %s3904, 3
        %s3907 = scalar_lea.vmem %s6, %s3906
      $region56: #{task2cl_forward.1} parent=51 // pred_fallthru
        _
    $region52: #{task2cl_forward.1} parent=5 // pred_fallthru
      _
  $region6: #{task2cl_forward.1} parent=0 // loop_footer
    %s17 = sadd.s32 1, %s13
  $region7: #{task2cl_forward.1} parent=0 // loop_footer_branch
    %12 = sbr.rel target = $region3
  $region8: #{task2cl_forward.1} parent=0 // loop_exit
    _

</llo_original>
